<compile_context>
chip_gen: v6e
topology: v6e:2x2x1
jax: 0.10.0
libtpu: 0.0.40
codegen_flags: <defaults>
</compile_context>

<pallas_src>
import jax
import jax.numpy as jnp
from jax.experimental import pallas as pl
from jax.experimental.pallas import tpu as pltpu

EPS = 1e-5  # PyTorch nn.LayerNorm default eps
VMEM_LIMIT = 32 * 1024 * 1024  # safe scoped-VMEM ceiling on v5e/v6e/v7x


# ----------------------------- in-kernel helpers -----------------------------
def _ln(h, g, b):
    # LayerNorm over last dim, biased variance (PyTorch), one-pass variance,
    # all math in f32.
    mu = jnp.mean(h, axis=-1, keepdims=True)
    m2 = jnp.mean(h * h, axis=-1, keepdims=True)
    var = jnp.maximum(m2 - mu * mu, 0.0)
    return (h - mu) * jax.lax.rsqrt(var + EPS) * g + b


def _lin_bf16(x, w_bf16, b):
    # bf16 operands on the MXU, f32 accumulation; bias in f32.
    return jnp.dot(x.astype(jnp.bfloat16), w_bf16,
                   preferred_element_type=jnp.float32) + b


def _lin_small_k(x, w, b):
    # (M, k) @ (k, C) with tiny static k (k=3) as k broadcast-FMAs on the VPU:
    # a k=3 contraction wastes >95% of an MXU systolic pass and ties up the
    # MXU push/pop slots for trivial math.  All f32.
    acc = b                                           # (1, C)
    for i in range(x.shape[-1]):                      # static unroll, k tiny
        acc = acc + x[:, i:i + 1] * w[i:i + 1, :]
    return acc                                        # (M, C)


def _ref_ln(h, g, b):
    # Two-pass f32 LayerNorm (used by the XLA tail and the reference).
    mu = h.mean(-1, keepdims=True)
    var = ((h - mu) ** 2).mean(-1, keepdims=True)
    return (h - mu) / jnp.sqrt(var + EPS) * g + b


# --------------------------------- kernels -----------------------------------
def stn_pool_kernel(x_ref,
                    w1, b1, g1, be1,
                    w2, b2, g2, be2,
                    w3, b3, g3, be3,
                    out_ref):
    """Per (batch, split, point-tile): 3->64->128->1024 MLP, running max."""
    n = pl.program_id(2)
    x = x_ref[0]                                                        # (TN, k)
    h = jax.nn.relu(_ln(_lin_small_k(x, w1[...], b1[...]),
                        g1[...], be1[...]))                             # (TN, 64)
    h = jax.nn.relu(_ln(_lin_bf16(h, w2[...], b2[...]),
                        g2[...], be2[...]))                             # (TN, 128)
    # No ReLU here: relu(max(h)) == max(relu(h)); ReLU is applied to the
    # pooled (B, 1024) vector outside the kernel (saves a TNx1024 VPU pass).
    h = _ln(_lin_bf16(h, w3[...], b3[...]), g3[...], be3[...])          # (TN, 1024)
    tile_max = jnp.max(h, axis=0, keepdims=True)                        # (1, 1024)

    @pl.when(n == 0)
    def _():
        out_ref[0, 0] = tile_max

    @pl.when(n > 0)
    def _():
        out_ref[0, 0] = jnp.maximum(out_ref[0, 0], tile_max)


def feat_kernel(x_ref, w1e_ref,
                b1, g1, be1,
                w2, b2, g2, be2,
                w3, b3, g3, be3,
                out_ref):
    """Per (batch, point-tile): x @ (T@W1) -> LN/ReLU -> 128 -> LN/ReLU -> out."""
    x = x_ref[0]                                                        # (TN, k)
    w1e = w1e_ref[0]                                                    # (k, 64), T@W1 folded
    h = jax.nn.relu(_ln(_lin_small_k(x, w1e, b1[...]),
                        g1[...], be1[...]))                             # (TN, 64)
    h = jax.nn.relu(_ln(_lin_bf16(h, w2[...], b2[...]),
                        g2[...], be2[...]))                             # (TN, 128)
    out_ref[0] = _ln(_lin_bf16(h, w3[...], b3[...]),
                     g3[...], be3[...]).astype(out_ref.dtype)           # (TN, out)


# --------------------------------- wrappers -----------------------------------
def _const_spec(a):
    # Whole array as a single block, same block for every grid step.
    nd = a.ndim
    return pl.BlockSpec(a.shape, lambda *_: (0,) * nd)


def _choose_tile(n, max_tile=512):
    """Point tile: multiple of 8, capped at max_tile; host pads N up to it."""
    max_tile = max(8, (max_tile // 8) * 8)
    if n >= max_tile:
        return max_tile
    return ((n + 7) // 8) * 8


def _pad_points(x, n_pad):
    # Edge-replicate pad along the point axis: duplicated points leave the
    # max-pool bit-exact and their feat rows are sliced off afterwards, so no
    # in-kernel -inf masking is needed.
    _, N, _ = x.shape
    if n_pad == N:
        return x
    return jnp.pad(x, ((0, 0), (0, n_pad - N), (0, 0)), mode='edge')


def run_stn_pool(x_pad, sp, tn):
    B, n_pad, k = x_pad.shape
    hid = sp['w3'].shape[1]                       # 1024
    num_tiles = n_pad // tn
    # Split the point range into two "parallel" halves when possible so both
    # v7x TensorCores stay busy even at small B; partial maxes are combined
    # below in XLA.  Harmless on single-TC v5e/v6e.
    n_split = 2 if (num_tiles % 2 == 0 and num_tiles >= 2) else 1
    tps = num_tiles // n_split

    weights = (sp['w1'], sp['b1'], sp['g1'], sp['be1'],
               sp['w2'].astype(jnp.bfloat16), sp['b2'], sp['g2'], sp['be2'],
               sp['w3'].astype(jnp.bfloat16), sp['b3'], sp['g3'], sp['be3'])
    in_specs = ([pl.BlockSpec((1, tn, k), lambda b, s, n: (b, s * tps + n, 0))]
                + [_const_spec(w) for w in weights])
    out = pl.pallas_call(
        stn_pool_kernel,
        out_shape=jax.ShapeDtypeStruct((B, n_split, 1, hid), jnp.float32),
        grid=(B, n_split, tps),
        in_specs=in_specs,
        out_specs=pl.BlockSpec((1, 1, 1, hid), lambda b, s, n: (b, s, 0, 0)),
        compiler_params=pltpu.CompilerParams(
            dimension_semantics=("parallel", "parallel", "arbitrary"),
            vmem_limit_bytes=VMEM_LIMIT),
    )(x_pad, *weights)
    return jnp.max(out, axis=(1, 2))              # (B, hid) -- pre-ReLU


def stn_tail(pooled_raw, sp, k):
    """STN FC tail 1024->512->256->k*k (+I) on the pooled vector, plain XLA.

    The chain is ~B x 1 MFLOP against ~1.3 MB of weight reads; a grid=(1,)
    Pallas call was exposed weight-DMA latency on the critical path, so the
    tiny tail is left to XLA (per perf review)."""
    def lin(h, w, b):
        return jnp.dot(h.astype(jnp.bfloat16), w.astype(jnp.bfloat16),
                       preferred_element_type=jnp.float32) + b
    h = jnp.maximum(pooled_raw, 0.0)              # ReLU moved out of the kernel
    h = jax.nn.relu(_ref_ln(lin(h, sp['wf1'], sp['bf1']), sp['g4'], sp['be4']))
    h = jax.nn.relu(_ref_ln(lin(h, sp['wf2'], sp['bf2']), sp['g5'], sp['be5']))
    h = lin(h, sp['wf3'], sp['bf3'])                          # (B, k*k)
    return h.reshape(-1, k, k) + jnp.eye(k, dtype=h.dtype)    # + I


def run_feat(x_pad, w1_eff, fp, tn, out_dtype=jnp.float32):
    B, n_pad, k = x_pad.shape
    out_dim = fp['w3'].shape[1]
    weights = (fp['b1'], fp['g1'], fp['be1'],
               fp['w2'].astype(jnp.bfloat16), fp['b2'], fp['g2'], fp['be2'],
               fp['w3'].astype(jnp.bfloat16), fp['b3'], fp['g3'], fp['be3'])
    in_specs = ([pl.BlockSpec((1, tn, k), lambda b, n: (b, n, 0)),
                 pl.BlockSpec((1, k, 64), lambda b, n: (b, 0, 0))]
                + [_const_spec(w) for w in weights])
    # TODO(synk): feat is HBM-writeback bound; pass out_dtype=jnp.bfloat16 to
    #             halve the (B, N, out_dim) write stream if downstream allows.
    return pl.pallas_call(
        feat_kernel,
        out_shape=jax.ShapeDtypeStruct((B, n_pad, out_dim), out_dtype),
        grid=(B, n_pad // tn),
        in_specs=in_specs,
        out_specs=pl.BlockSpec((1, tn, out_dim), lambda b, n: (b, n, 0)),
        compiler_params=pltpu.CompilerParams(
            dimension_semantics=("parallel", "parallel"),
            vmem_limit_bytes=VMEM_LIMIT),
    )(x_pad, w1_eff, *weights)


def pointnet_feat(x, sp, fp, k, max_tile=512, out_dtype=jnp.float32):
    B, N, _ = x.shape
    tn = _choose_tile(N, max_tile)
    n_pad = ((N + tn - 1) // tn) * tn
    x_pad = _pad_points(x, n_pad)
    pooled = run_stn_pool(x_pad, sp, tn)             # (B, 1024), pre-ReLU
    trans = stn_tail(pooled, sp, k)                  # (B, k, k), includes +I
    # Fold the transform into the first feat linear: (x@T)@W1 == x@(T@W1).
    w1_eff = jnp.einsum('bij,jk->bik', trans, fp['w1'],
                        precision=jax.lax.Precision.HIGHEST)   # (B, k, 64)
    out = run_feat(x_pad, w1_eff, fp, tn, out_dtype)           # (B, n_pad, out)
    return out[:, :N, :]


# ------------------------------ parameter init --------------------------------
def init_linear(key, fan_in, fan_out):
    kw, kb = jax.random.split(key)
    bound = 1.0 / (fan_in ** 0.5)
    w = jax.random.uniform(kw, (fan_in, fan_out), jnp.float32, -bound, bound)
    b = jax.random.uniform(kb, (1, fan_out), jnp.float32, -bound, bound)
    return w, b


def init_ln(c):
    return jnp.ones((1, c), jnp.float32), jnp.zeros((1, c), jnp.float32)


def init_params(key, in_dim, out_dim):
    ks = jax.random.split(key, 16)
    sp = {}
    sp['w1'], sp['b1'] = init_linear(ks[0], in_dim, 64)
    sp['g1'], sp['be1'] = init_ln(64)
    sp['w2'], sp['b2'] = init_linear(ks[1], 64, 128)
    sp['g2'], sp['be2'] = init_ln(128)
    sp['w3'], sp['b3'] = init_linear(ks[2], 128, 1024)
    sp['g3'], sp['be3'] = init_ln(1024)
    sp['wf1'], sp['bf1'] = init_linear(ks[3], 1024, 512)
    sp['g4'], sp['be4'] = init_ln(512)
    sp['wf2'], sp['bf2'] = init_linear(ks[4], 512, 256)
    sp['g5'], sp['be5'] = init_ln(256)
    sp['wf3'], sp['bf3'] = init_linear(ks[5], 256, in_dim * in_dim)

    fp = {}
    fp['w1'], fp['b1'] = init_linear(ks[6], in_dim, 64)
    fp['g1'], fp['be1'] = init_ln(64)
    fp['w2'], fp['b2'] = init_linear(ks[7], 64, 128)
    fp['g2'], fp['be2'] = init_ln(128)
    fp['w3'], fp['b3'] = init_linear(ks[8], 128, out_dim)
    fp['g3'], fp['be3'] = init_ln(out_dim)
    return sp, fp


# ------------------------------ pure-JAX reference -----------------------------
def reference_forward(x, sp, fp, k):
    # Full-f32, highest-precision reference of the original module semantics.
    hp = jax.lax.Precision.HIGHEST
    dot = lambda a, w: jnp.matmul(a, w, precision=hp)
    h = jax.nn.relu(_ref_ln(dot(x, sp['w1']) + sp['b1'], sp['g1'], sp['be1']))
    h = jax.nn.relu(_ref_ln(dot(h, sp['w2']) + sp['b2'], sp['g2'], sp['be2']))
    h = jax.nn.relu(_ref_ln(dot(h, sp['w3']) + sp['b3'], sp['g3'], sp['be3']))
    h = jnp.max(h, axis=-2, keepdims=True)
    h = jax.nn.relu(_ref_ln(dot(h, sp['wf1']) + sp['bf1'], sp['g4'], sp['be4']))
    h = jax.nn.relu(_ref_ln(dot(h, sp['wf2']) + sp['bf2'], sp['g5'], sp['be5']))
    h = dot(h, sp['wf3']) + sp['bf3']                       # (B, 1, k*k)
    trans = h.reshape(x.shape[0], k, k) + jnp.eye(k, dtype=x.dtype)
    y = jnp.matmul(x, trans, precision=hp)
    y = jax.nn.relu(_ref_ln(dot(y, fp['w1']) + fp['b1'], fp['g1'], fp['be1']))
    y = jax.nn.relu(_ref_ln(dot(y, fp['w2']) + fp['b2'], fp['g2'], fp['be2']))
    y = _ref_ln(dot(y, fp['w3']) + fp['b3'], fp['g3'], fp['be3'])
    return y


# ----------------------------------- main --------------------------------------
if __name__ == "__main__":
    # Small shapes, but chosen so the test exercises the multi-tile running-max
    # accumulator, the 2-way point split and the edge-padding path:
    #   N=60, max_tile=16 -> tn=16, N_pad=64, 4 tiles = 2 splits x 2 tiles.
    B, N, in_dim, out_dim = 2, 60, 3, 1024
    key = jax.random.PRNGKey(0)
    kx, kp = jax.random.split(key)
    x = jax.random.normal(kx, (B, N, in_dim), jnp.float32)
    sp, fp = init_params(kp, in_dim, out_dim)

    fwd = jax.jit(pointnet_feat, static_argnames=("k", "max_tile"))
    out = fwd(x, sp, fp, k=in_dim, max_tile=16)
    out = jax.block_until_ready(out)

    ref = reference_forward(x, sp, fp, in_dim)
    assert out.shape == (B, N, out_dim), out.shape
    # Tolerance budget for bf16 operands (f32 accumulation) on the matmuls vs.
    # the full-f32 HIGHEST-precision reference; outputs are LayerNorm-scaled
    # so ~5e-2 covers the mixed-precision drift.
    assert jnp.allclose(out, ref, atol=5e-2, rtol=5e-2), (
        float(jnp.max(jnp.abs(out - ref))))

    print("KERNEL_OK")
</pallas_src>

<mosaic_0001>
module attributes {stable_mosaic.version = 11 : i64} {
  func.func @stn_pool_kernel(%arg0: i32, %arg1: i32, %arg2: i32, %arg3: memref<1x16x3xf32, #tpu.memory_space<vmem>>, %arg4: memref<3x64xf32, #tpu.memory_space<vmem>>, %arg5: memref<1x64xf32, #tpu.memory_space<vmem>>, %arg6: memref<1x64xf32, #tpu.memory_space<vmem>>, %arg7: memref<1x64xf32, #tpu.memory_space<vmem>>, %arg8: memref<64x128xbf16, #tpu.memory_space<vmem>>, %arg9: memref<1x128xf32, #tpu.memory_space<vmem>>, %arg10: memref<1x128xf32, #tpu.memory_space<vmem>>, %arg11: memref<1x128xf32, #tpu.memory_space<vmem>>, %arg12: memref<128x1024xbf16, #tpu.memory_space<vmem>>, %arg13: memref<1x1024xf32, #tpu.memory_space<vmem>>, %arg14: memref<1x1024xf32, #tpu.memory_space<vmem>>, %arg15: memref<1x1024xf32, #tpu.memory_space<vmem>>, %arg16: memref<1x1x1x1024xf32, #tpu.memory_space<vmem>>) attributes {dimension_semantics = [#tpu.dimension_semantics<parallel>, #tpu.dimension_semantics<parallel>, #tpu.dimension_semantics<arbitrary>], iteration_bounds = array<i64: 2, 2, 2>, scalar_prefetch = 0 : i64, scratch_operands = 0 : i64, tpu.core_type = #tpu.core_type<tc>, window_params = [{transform_indices = @transform_0, window_bounds = array<i64: 1, 16, 3>}, {pipeline_mode = #tpu.pipeline_mode<synchronous>, transform_indices = @transform_1, window_bounds = array<i64: 3, 64>}, {pipeline_mode = #tpu.pipeline_mode<synchronous>, transform_indices = @transform_2, window_bounds = array<i64: 1, 64>}, {pipeline_mode = #tpu.pipeline_mode<synchronous>, transform_indices = @transform_3, window_bounds = array<i64: 1, 64>}, {pipeline_mode = #tpu.pipeline_mode<synchronous>, transform_indices = @transform_4, window_bounds = array<i64: 1, 64>}, {pipeline_mode = #tpu.pipeline_mode<synchronous>, transform_indices = @transform_5, window_bounds = array<i64: 64, 128>}, {pipeline_mode = #tpu.pipeline_mode<synchronous>, transform_indices = @transform_6, window_bounds = array<i64: 1, 128>}, {pipeline_mode = #tpu.pipeline_mode<synchronous>, transform_indices = @transform_7, window_bounds = array<i64: 1, 128>}, {pipeline_mode = #tpu.pipeline_mode<synchronous>, transform_indices = @transform_8, window_bounds = array<i64: 1, 128>}, {pipeline_mode = #tpu.pipeline_mode<synchronous>, transform_indices = @transform_9, window_bounds = array<i64: 128, 1024>}, {pipeline_mode = #tpu.pipeline_mode<synchronous>, transform_indices = @transform_10, window_bounds = array<i64: 1, 1024>}, {pipeline_mode = #tpu.pipeline_mode<synchronous>, transform_indices = @transform_11, window_bounds = array<i64: 1, 1024>}, {pipeline_mode = #tpu.pipeline_mode<synchronous>, transform_indices = @transform_12, window_bounds = array<i64: 1, 1024>}, {transform_indices = @transform_13, window_bounds = array<i64: 1, 1, 1, 1024>}]} {
    %c0 = arith.constant 0 : index
    %c0_0 = arith.constant 0 : index
    %c0_1 = arith.constant 0 : index
    %0 = vector.load %arg3[%c0, %c0_0, %c0_1] : memref<1x16x3xf32, #tpu.memory_space<vmem>>, vector<1x16x3xf32>
    %1 = vector.shape_cast %0 : vector<1x16x3xf32> to vector<16x3xf32>
    %c0_2 = arith.constant 0 : index
    %c0_3 = arith.constant 0 : index
    %2 = vector.load %arg4[%c0_2, %c0_3] : memref<3x64xf32, #tpu.memory_space<vmem>>, vector<3x64xf32>
    %c0_4 = arith.constant 0 : index
    %c0_5 = arith.constant 0 : index
    %3 = vector.load %arg5[%c0_4, %c0_5] : memref<1x64xf32, #tpu.memory_space<vmem>>, vector<1x64xf32>
    %4 = vector.extract_strided_slice %1 {offsets = [0, 0], sizes = [16, 1], strides = [1, 1]} : vector<16x3xf32> to vector<16x1xf32>
    %5 = vector.extract_strided_slice %2 {offsets = [0, 0], sizes = [1, 64], strides = [1, 1]} : vector<3x64xf32> to vector<1x64xf32>
    %6 = vector.broadcast %4 : vector<16x1xf32> to vector<16x64xf32>
    %7 = vector.broadcast %5 : vector<1x64xf32> to vector<16x64xf32>
    %8 = arith.mulf %6, %7 : vector<16x64xf32>
    %9 = vector.broadcast %3 : vector<1x64xf32> to vector<16x64xf32>
    %10 = arith.addf %9, %8 : vector<16x64xf32>
    %11 = vector.extract_strided_slice %1 {offsets = [0, 1], sizes = [16, 1], strides = [1, 1]} : vector<16x3xf32> to vector<16x1xf32>
    %12 = vector.extract_strided_slice %2 {offsets = [1, 0], sizes = [1, 64], strides = [1, 1]} : vector<3x64xf32> to vector<1x64xf32>
    %13 = vector.broadcast %11 : vector<16x1xf32> to vector<16x64xf32>
    %14 = vector.broadcast %12 : vector<1x64xf32> to vector<16x64xf32>
    %15 = arith.mulf %13, %14 : vector<16x64xf32>
    %16 = arith.addf %10, %15 : vector<16x64xf32>
    %17 = vector.extract_strided_slice %1 {offsets = [0, 2], sizes = [16, 1], strides = [1, 1]} : vector<16x3xf32> to vector<16x1xf32>
    %18 = vector.extract_strided_slice %2 {offsets = [2, 0], sizes = [1, 64], strides = [1, 1]} : vector<3x64xf32> to vector<1x64xf32>
    %19 = vector.broadcast %17 : vector<16x1xf32> to vector<16x64xf32>
    %20 = vector.broadcast %18 : vector<1x64xf32> to vector<16x64xf32>
    %21 = arith.mulf %19, %20 : vector<16x64xf32>
    %22 = arith.addf %16, %21 : vector<16x64xf32>
    %c0_6 = arith.constant 0 : index
    %c0_7 = arith.constant 0 : index
    %23 = vector.load %arg6[%c0_6, %c0_7] : memref<1x64xf32, #tpu.memory_space<vmem>>, vector<1x64xf32>
    %c0_8 = arith.constant 0 : index
    %c0_9 = arith.constant 0 : index
    %24 = vector.load %arg7[%c0_8, %c0_9] : memref<1x64xf32, #tpu.memory_space<vmem>>, vector<1x64xf32>
    %cst = arith.constant dense<0.000000e+00> : vector<16xf32>
    %25 = vector.multi_reduction <add>, %22, %cst [1] : vector<16x64xf32> to vector<16xf32>
    %26 = vector.shape_cast %25 : vector<16xf32> to vector<16x1xf32>
    %cst_10 = arith.constant 6.400000e+01 : f32
    %27 = vector.broadcast %cst_10 : f32 to vector<16x1xf32>
    %28 = arith.divf %26, %27 : vector<16x1xf32>
    %29 = arith.mulf %22, %22 : vector<16x64xf32>
    %cst_11 = arith.constant dense<0.000000e+00> : vector<16xf32>
    %30 = vector.multi_reduction <add>, %29, %cst_11 [1] : vector<16x64xf32> to vector<16xf32>
    %31 = vector.shape_cast %30 : vector<16xf32> to vector<16x1xf32>
    %cst_12 = arith.constant 6.400000e+01 : f32
    %32 = vector.broadcast %cst_12 : f32 to vector<16x1xf32>
    %33 = arith.divf %31, %32 : vector<16x1xf32>
    %34 = arith.mulf %28, %28 : vector<16x1xf32>
    %35 = arith.subf %33, %34 : vector<16x1xf32>
    %cst_13 = arith.constant 0.000000e+00 : f32
    %36 = vector.broadcast %cst_13 : f32 to vector<16x1xf32>
    %37 = arith.maximumf %35, %36 : vector<16x1xf32>
    %38 = vector.broadcast %28 : vector<16x1xf32> to vector<16x64xf32>
    %39 = arith.subf %22, %38 : vector<16x64xf32>
    %cst_14 = arith.constant 9.99999974E-6 : f32
    %40 = vector.broadcast %cst_14 : f32 to vector<16x1xf32>
    %41 = arith.addf %37, %40 : vector<16x1xf32>
    %42 = math.rsqrt %41 : vector<16x1xf32>
    %43 = vector.broadcast %42 : vector<16x1xf32> to vector<16x64xf32>
    %44 = arith.mulf %39, %43 : vector<16x64xf32>
    %45 = vector.broadcast %23 : vector<1x64xf32> to vector<16x64xf32>
    %46 = arith.mulf %44, %45 : vector<16x64xf32>
    %47 = vector.broadcast %24 : vector<1x64xf32> to vector<16x64xf32>
    %48 = arith.addf %46, %47 : vector<16x64xf32>
    %cst_15 = arith.constant 0.000000e+00 : f32
    %49 = vector.broadcast %cst_15 : f32 to vector<16x64xf32>
    %50 = arith.maximumf %48, %49 : vector<16x64xf32>
    %c0_16 = arith.constant 0 : index
    %c0_17 = arith.constant 0 : index
    %51 = vector.load %arg8[%c0_16, %c0_17] : memref<64x128xbf16, #tpu.memory_space<vmem>>, vector<64x128xbf16>
    %c0_18 = arith.constant 0 : index
    %c0_19 = arith.constant 0 : index
    %52 = vector.load %arg9[%c0_18, %c0_19] : memref<1x128xf32, #tpu.memory_space<vmem>>, vector<1x128xf32>
    %53 = arith.truncf %50 : vector<16x64xf32> to vector<16x64xbf16>
    %cst_20 = arith.constant dense<0.000000e+00> : vector<16x128xf32>
    %54 = tpu.matmul %53, %51, %cst_20 {dimension_numbers = #tpu.dot_dimension_numbers<[1], [0], [0], [1], [0, 0, 1, 1], [], []>} : vector<16x64xbf16>, vector<64x128xbf16>, vector<16x128xf32> -> vector<16x128xf32>
    %55 = vector.broadcast %52 : vector<1x128xf32> to vector<16x128xf32>
    %56 = arith.addf %54, %55 : vector<16x128xf32>
    %c0_21 = arith.constant 0 : index
    %c0_22 = arith.constant 0 : index
    %57 = vector.load %arg10[%c0_21, %c0_22] : memref<1x128xf32, #tpu.memory_space<vmem>>, vector<1x128xf32>
    %c0_23 = arith.constant 0 : index
    %c0_24 = arith.constant 0 : index
    %58 = vector.load %arg11[%c0_23, %c0_24] : memref<1x128xf32, #tpu.memory_space<vmem>>, vector<1x128xf32>
    %cst_25 = arith.constant dense<0.000000e+00> : vector<16xf32>
    %59 = vector.multi_reduction <add>, %56, %cst_25 [1] : vector<16x128xf32> to vector<16xf32>
    %60 = vector.shape_cast %59 : vector<16xf32> to vector<16x1xf32>
    %cst_26 = arith.constant 1.280000e+02 : f32
    %61 = vector.broadcast %cst_26 : f32 to vector<16x1xf32>
    %62 = arith.divf %60, %61 : vector<16x1xf32>
    %63 = arith.mulf %56, %56 : vector<16x128xf32>
    %cst_27 = arith.constant dense<0.000000e+00> : vector<16xf32>
    %64 = vector.multi_reduction <add>, %63, %cst_27 [1] : vector<16x128xf32> to vector<16xf32>
    %65 = vector.shape_cast %64 : vector<16xf32> to vector<16x1xf32>
    %cst_28 = arith.constant 1.280000e+02 : f32
    %66 = vector.broadcast %cst_28 : f32 to vector<16x1xf32>
    %67 = arith.divf %65, %66 : vector<16x1xf32>
    %68 = arith.mulf %62, %62 : vector<16x1xf32>
    %69 = arith.subf %67, %68 : vector<16x1xf32>
    %cst_29 = arith.constant 0.000000e+00 : f32
    %70 = vector.broadcast %cst_29 : f32 to vector<16x1xf32>
    %71 = arith.maximumf %69, %70 : vector<16x1xf32>
    %72 = vector.broadcast %62 : vector<16x1xf32> to vector<16x128xf32>
    %73 = arith.subf %56, %72 : vector<16x128xf32>
    %cst_30 = arith.constant 9.99999974E-6 : f32
    %74 = vector.broadcast %cst_30 : f32 to vector<16x1xf32>
    %75 = arith.addf %71, %74 : vector<16x1xf32>
    %76 = math.rsqrt %75 : vector<16x1xf32>
    %77 = vector.broadcast %76 : vector<16x1xf32> to vector<16x128xf32>
    %78 = arith.mulf %73, %77 : vector<16x128xf32>
    %79 = vector.broadcast %57 : vector<1x128xf32> to vector<16x128xf32>
    %80 = arith.mulf %78, %79 : vector<16x128xf32>
    %81 = vector.broadcast %58 : vector<1x128xf32> to vector<16x128xf32>
    %82 = arith.addf %80, %81 : vector<16x128xf32>
    %cst_31 = arith.constant 0.000000e+00 : f32
    %83 = vector.broadcast %cst_31 : f32 to vector<16x128xf32>
    %84 = arith.maximumf %82, %83 : vector<16x128xf32>
    %c0_32 = arith.constant 0 : index
    %c0_33 = arith.constant 0 : index
    %85 = vector.load %arg12[%c0_32, %c0_33] : memref<128x1024xbf16, #tpu.memory_space<vmem>>, vector<128x1024xbf16>
    %c0_34 = arith.constant 0 : index
    %c0_35 = arith.constant 0 : index
    %86 = vector.load %arg13[%c0_34, %c0_35] : memref<1x1024xf32, #tpu.memory_space<vmem>>, vector<1x1024xf32>
    %87 = arith.truncf %84 : vector<16x128xf32> to vector<16x128xbf16>
    %cst_36 = arith.constant dense<0.000000e+00> : vector<16x1024xf32>
    %88 = tpu.matmul %87, %85, %cst_36 {dimension_numbers = #tpu.dot_dimension_numbers<[1], [0], [0], [1], [0, 0, 1, 1], [], []>} : vector<16x128xbf16>, vector<128x1024xbf16>, vector<16x1024xf32> -> vector<16x1024xf32>
    %89 = vector.broadcast %86 : vector<1x1024xf32> to vector<16x1024xf32>
    %90 = arith.addf %88, %89 : vector<16x1024xf32>
    %c0_37 = arith.constant 0 : index
    %c0_38 = arith.constant 0 : index
    %91 = vector.load %arg14[%c0_37, %c0_38] : memref<1x1024xf32, #tpu.memory_space<vmem>>, vector<1x1024xf32>
    %c0_39 = arith.constant 0 : index
    %c0_40 = arith.constant 0 : index
    %92 = vector.load %arg15[%c0_39, %c0_40] : memref<1x1024xf32, #tpu.memory_space<vmem>>, vector<1x1024xf32>
    %cst_41 = arith.constant dense<0.000000e+00> : vector<16xf32>
    %93 = vector.multi_reduction <add>, %90, %cst_41 [1] : vector<16x1024xf32> to vector<16xf32>
    %94 = vector.shape_cast %93 : vector<16xf32> to vector<16x1xf32>
    %cst_42 = arith.constant 1.024000e+03 : f32
    %95 = vector.broadcast %cst_42 : f32 to vector<16x1xf32>
    %96 = arith.divf %94, %95 : vector<16x1xf32>
    %97 = arith.mulf %90, %90 : vector<16x1024xf32>
    %cst_43 = arith.constant dense<0.000000e+00> : vector<16xf32>
    %98 = vector.multi_reduction <add>, %97, %cst_43 [1] : vector<16x1024xf32> to vector<16xf32>
    %99 = vector.shape_cast %98 : vector<16xf32> to vector<16x1xf32>
    %cst_44 = arith.constant 1.024000e+03 : f32
    %100 = vector.broadcast %cst_44 : f32 to vector<16x1xf32>
    %101 = arith.divf %99, %100 : vector<16x1xf32>
    %102 = arith.mulf %96, %96 : vector<16x1xf32>
    %103 = arith.subf %101, %102 : vector<16x1xf32>
    %cst_45 = arith.constant 0.000000e+00 : f32
    %104 = vector.broadcast %cst_45 : f32 to vector<16x1xf32>
    %105 = arith.maximumf %103, %104 : vector<16x1xf32>
    %106 = vector.broadcast %96 : vector<16x1xf32> to vector<16x1024xf32>
    %107 = arith.subf %90, %106 : vector<16x1024xf32>
    %cst_46 = arith.constant 9.99999974E-6 : f32
    %108 = vector.broadcast %cst_46 : f32 to vector<16x1xf32>
    %109 = arith.addf %105, %108 : vector<16x1xf32>
    %110 = math.rsqrt %109 : vector<16x1xf32>
    %111 = vector.broadcast %110 : vector<16x1xf32> to vector<16x1024xf32>
    %112 = arith.mulf %107, %111 : vector<16x1024xf32>
    %113 = vector.broadcast %91 : vector<1x1024xf32> to vector<16x1024xf32>
    %114 = arith.mulf %112, %113 : vector<16x1024xf32>
    %115 = vector.broadcast %92 : vector<1x1024xf32> to vector<16x1024xf32>
    %116 = arith.addf %114, %115 : vector<16x1024xf32>
    %cst_47 = arith.constant dense<0xFF800000> : vector<1024xf32>
    %117 = vector.multi_reduction <maximumf>, %116, %cst_47 [0] : vector<16x1024xf32> to vector<1024xf32>
    %118 = vector.shape_cast %117 : vector<1024xf32> to vector<1x1024xf32>
    %c0_i32 = arith.constant 0 : i32
    %119 = arith.cmpi eq, %arg2, %c0_i32 : i32
    %120 = arith.extui %119 : i1 to i32
    %c0_i32_48 = arith.constant 0 : i32
    %121 = arith.cmpi ne, %120, %c0_i32_48 : i32
    scf.if %121 {
      %c0_51 = arith.constant 0 : index
      %c0_52 = arith.constant 0 : index
      %c0_53 = arith.constant 0 : index
      %c0_54 = arith.constant 0 : index
      %125 = vector.load %arg16[%c0_51, %c0_52, %c0_53, %c0_54] : memref<1x1x1x1024xf32, #tpu.memory_space<vmem>>, vector<1x1x1x1024xf32>
      %126 = vector.shape_cast %125 : vector<1x1x1x1024xf32> to vector<1x1024xf32>
      %127 = vector.shape_cast %118 : vector<1x1024xf32> to vector<1x1x1x1024xf32>
      tpu.vector_store %arg16[%c0_51, %c0_52, %c0_53, %c0_54], %127 {strides = array<i32>} : memref<1x1x1x1024xf32, #tpu.memory_space<vmem>>, vector<1x1x1x1024xf32>,
    } else {
    }
    %c0_i32_49 = arith.constant 0 : i32
    %122 = arith.cmpi sgt, %arg2, %c0_i32_49 : i32
    %123 = arith.extui %122 : i1 to i32
    %c0_i32_50 = arith.constant 0 : i32
    %124 = arith.cmpi ne, %123, %c0_i32_50 : i32
    scf.if %124 {
      %c0_51 = arith.constant 0 : index
      %c0_52 = arith.constant 0 : index
      %c0_53 = arith.constant 0 : index
      %c0_54 = arith.constant 0 : index
      %125 = vector.load %arg16[%c0_51, %c0_52, %c0_53, %c0_54] : memref<1x1x1x1024xf32, #tpu.memory_space<vmem>>, vector<1x1x1x1024xf32>
      %126 = vector.shape_cast %125 : vector<1x1x1x1024xf32> to vector<1x1024xf32>
      %127 = arith.maximumf %126, %118 : vector<1x1024xf32>
      %c0_55 = arith.constant 0 : index
      %c0_56 = arith.constant 0 : index
      %c0_57 = arith.constant 0 : index
      %c0_58 = arith.constant 0 : index
      %128 = vector.load %arg16[%c0_55, %c0_56, %c0_57, %c0_58] : memref<1x1x1x1024xf32, #tpu.memory_space<vmem>>, vector<1x1x1x1024xf32>
      %129 = vector.shape_cast %128 : vector<1x1x1x1024xf32> to vector<1x1024xf32>
      %130 = vector.shape_cast %127 : vector<1x1024xf32> to vector<1x1x1x1024xf32>
      tpu.vector_store %arg16[%c0_55, %c0_56, %c0_57, %c0_58], %130 {strides = array<i32>} : memref<1x1x1x1024xf32, #tpu.memory_space<vmem>>, vector<1x1x1x1024xf32>,
    } else {
    }
    return
  }
  func.func @transform_0(%arg0: i32, %arg1: i32, %arg2: i32) -> (i32, i32, i32) {
    %c2_i32 = arith.constant 2 : i32
    %0 = arith.muli %arg1, %c2_i32 : i32
    %1 = arith.addi %0, %arg2 : i32
    %c0_i32 = arith.constant 0 : i32
    %c0_i32_0 = arith.constant 0 : i32
    return %arg0, %1, %c0_i32 : i32, i32, i32
  }
  func.func @transform_1(%arg0: i32, %arg1: i32, %arg2: i32) -> (i32, i32) {
    %c0_i32 = arith.constant 0 : i32
    %c0_i32_0 = arith.constant 0 : i32
    %c0_i32_1 = arith.constant 0 : i32
    return %c0_i32, %c0_i32_0 : i32, i32
  }
  func.func @transform_2(%arg0: i32, %arg1: i32, %arg2: i32) -> (i32, i32) {
    %c0_i32 = arith.constant 0 : i32
    %c0_i32_0 = arith.constant 0 : i32
    %c0_i32_1 = arith.constant 0 : i32
    return %c0_i32, %c0_i32_0 : i32, i32
  }
  func.func @transform_3(%arg0: i32, %arg1: i32, %arg2: i32) -> (i32, i32) {
    %c0_i32 = arith.constant 0 : i32
    %c0_i32_0 = arith.constant 0 : i32
    %c0_i32_1 = arith.constant 0 : i32
    return %c0_i32, %c0_i32_0 : i32, i32
  }
  func.func @transform_4(%arg0: i32, %arg1: i32, %arg2: i32) -> (i32, i32) {
    %c0_i32 = arith.constant 0 : i32
    %c0_i32_0 = arith.constant 0 : i32
    %c0_i32_1 = arith.constant 0 : i32
    return %c0_i32, %c0_i32_0 : i32, i32
  }
  func.func @transform_5(%arg0: i32, %arg1: i32, %arg2: i32) -> (i32, i32) {
    %c0_i32 = arith.constant 0 : i32
    %c0_i32_0 = arith.constant 0 : i32
    %c0_i32_1 = arith.constant 0 : i32
    return %c0_i32, %c0_i32_0 : i32, i32
  }
  func.func @transform_6(%arg0: i32, %arg1: i32, %arg2: i32) -> (i32, i32) {
    %c0_i32 = arith.constant 0 : i32
    %c0_i32_0 = arith.constant 0 : i32
    %c0_i32_1 = arith.constant 0 : i32
    return %c0_i32, %c0_i32_0 : i32, i32
  }
  func.func @transform_7(%arg0: i32, %arg1: i32, %arg2: i32) -> (i32, i32) {
    %c0_i32 = arith.constant 0 : i32
    %c0_i32_0 = arith.constant 0 : i32
    %c0_i32_1 = arith.constant 0 : i32
    return %c0_i32, %c0_i32_0 : i32, i32
  }
  func.func @transform_8(%arg0: i32, %arg1: i32, %arg2: i32) -> (i32, i32) {
    %c0_i32 = arith.constant 0 : i32
    %c0_i32_0 = arith.constant 0 : i32
    %c0_i32_1 = arith.constant 0 : i32
    return %c0_i32, %c0_i32_0 : i32, i32
  }
  func.func @transform_9(%arg0: i32, %arg1: i32, %arg2: i32) -> (i32, i32) {
    %c0_i32 = arith.constant 0 : i32
    %c0_i32_0 = arith.constant 0 : i32
    %c0_i32_1 = arith.constant 0 : i32
    return %c0_i32, %c0_i32_0 : i32, i32
  }
  func.func @transform_10(%arg0: i32, %arg1: i32, %arg2: i32) -> (i32, i32) {
    %c0_i32 = arith.constant 0 : i32
    %c0_i32_0 = arith.constant 0 : i32
    %c0_i32_1 = arith.constant 0 : i32
    return %c0_i32, %c0_i32_0 : i32, i32
  }
  func.func @transform_11(%arg0: i32, %arg1: i32, %arg2: i32) -> (i32, i32) {
    %c0_i32 = arith.constant 0 : i32
    %c0_i32_0 = arith.constant 0 : i32
    %c0_i32_1 = arith.constant 0 : i32
    return %c0_i32, %c0_i32_0 : i32, i32
  }
  func.func @transform_12(%arg0: i32, %arg1: i32, %arg2: i32) -> (i32, i32) {
    %c0_i32 = arith.constant 0 : i32
    %c0_i32_0 = arith.constant 0 : i32
    %c0_i32_1 = arith.constant 0 : i32
    return %c0_i32, %c0_i32_0 : i32, i32
  }
  func.func @transform_13(%arg0: i32, %arg1: i32, %arg2: i32) -> (i32, i32, i32, i32) {
    %c0_i32 = arith.constant 0 : i32
    %c0_i32_0 = arith.constant 0 : i32
    %c0_i32_1 = arith.constant 0 : i32
    return %arg0, %arg1, %c0_i32, %c0_i32_0 : i32, i32, i32, i32
  }
}

module attributes {stable_mosaic.version = 11 : i64} {
  func.func @feat_kernel(%arg0: i32, %arg1: i32, %arg2: memref<1x16x3xf32, #tpu.memory_space<vmem>>, %arg3: memref<1x3x64xf32, #tpu.memory_space<vmem>>, %arg4: memref<1x64xf32, #tpu.memory_space<vmem>>, %arg5: memref<1x64xf32, #tpu.memory_space<vmem>>, %arg6: memref<1x64xf32, #tpu.memory_space<vmem>>, %arg7: memref<64x128xbf16, #tpu.memory_space<vmem>>, %arg8: memref<1x128xf32, #tpu.memory_space<vmem>>, %arg9: memref<1x128xf32, #tpu.memory_space<vmem>>, %arg10: memref<1x128xf32, #tpu.memory_space<vmem>>, %arg11: memref<128x1024xbf16, #tpu.memory_space<vmem>>, %arg12: memref<1x1024xf32, #tpu.memory_space<vmem>>, %arg13: memref<1x1024xf32, #tpu.memory_space<vmem>>, %arg14: memref<1x1024xf32, #tpu.memory_space<vmem>>, %arg15: memref<1x16x1024xf32, #tpu.memory_space<vmem>>) attributes {dimension_semantics = [#tpu.dimension_semantics<parallel>, #tpu.dimension_semantics<parallel>], iteration_bounds = array<i64: 2, 4>, scalar_prefetch = 0 : i64, scratch_operands = 0 : i64, tpu.core_type = #tpu.core_type<tc>, window_params = [{transform_indices = @transform_0, window_bounds = array<i64: 1, 16, 3>}, {transform_indices = @transform_1, window_bounds = array<i64: 1, 3, 64>}, {pipeline_mode = #tpu.pipeline_mode<synchronous>, transform_indices = @transform_2, window_bounds = array<i64: 1, 64>}, {pipeline_mode = #tpu.pipeline_mode<synchronous>, transform_indices = @transform_3, window_bounds = array<i64: 1, 64>}, {pipeline_mode = #tpu.pipeline_mode<synchronous>, transform_indices = @transform_4, window_bounds = array<i64: 1, 64>}, {pipeline_mode = #tpu.pipeline_mode<synchronous>, transform_indices = @transform_5, window_bounds = array<i64: 64, 128>}, {pipeline_mode = #tpu.pipeline_mode<synchronous>, transform_indices = @transform_6, window_bounds = array<i64: 1, 128>}, {pipeline_mode = #tpu.pipeline_mode<synchronous>, transform_indices = @transform_7, window_bounds = array<i64: 1, 128>}, {pipeline_mode = #tpu.pipeline_mode<synchronous>, transform_indices = @transform_8, window_bounds = array<i64: 1, 128>}, {pipeline_mode = #tpu.pipeline_mode<synchronous>, transform_indices = @transform_9, window_bounds = array<i64: 128, 1024>}, {pipeline_mode = #tpu.pipeline_mode<synchronous>, transform_indices = @transform_10, window_bounds = array<i64: 1, 1024>}, {pipeline_mode = #tpu.pipeline_mode<synchronous>, transform_indices = @transform_11, window_bounds = array<i64: 1, 1024>}, {pipeline_mode = #tpu.pipeline_mode<synchronous>, transform_indices = @transform_12, window_bounds = array<i64: 1, 1024>}, {transform_indices = @transform_13, window_bounds = array<i64: 1, 16, 1024>}]} {
    %c0 = arith.constant 0 : index
    %c0_0 = arith.constant 0 : index
    %c0_1 = arith.constant 0 : index
    %0 = vector.load %arg2[%c0, %c0_0, %c0_1] : memref<1x16x3xf32, #tpu.memory_space<vmem>>, vector<1x16x3xf32>
    %1 = vector.shape_cast %0 : vector<1x16x3xf32> to vector<16x3xf32>
    %c0_2 = arith.constant 0 : index
    %c0_3 = arith.constant 0 : index
    %c0_4 = arith.constant 0 : index
    %2 = vector.load %arg3[%c0_2, %c0_3, %c0_4] : memref<1x3x64xf32, #tpu.memory_space<vmem>>, vector<1x3x64xf32>
    %3 = vector.shape_cast %2 : vector<1x3x64xf32> to vector<3x64xf32>
    %c0_5 = arith.constant 0 : index
    %c0_6 = arith.constant 0 : index
    %4 = vector.load %arg4[%c0_5, %c0_6] : memref<1x64xf32, #tpu.memory_space<vmem>>, vector<1x64xf32>
    %5 = vector.extract_strided_slice %1 {offsets = [0, 0], sizes = [16, 1], strides = [1, 1]} : vector<16x3xf32> to vector<16x1xf32>
    %6 = vector.extract_strided_slice %3 {offsets = [0, 0], sizes = [1, 64], strides = [1, 1]} : vector<3x64xf32> to vector<1x64xf32>
    %7 = vector.broadcast %5 : vector<16x1xf32> to vector<16x64xf32>
    %8 = vector.broadcast %6 : vector<1x64xf32> to vector<16x64xf32>
    %9 = arith.mulf %7, %8 : vector<16x64xf32>
    %10 = vector.broadcast %4 : vector<1x64xf32> to vector<16x64xf32>
    %11 = arith.addf %10, %9 : vector<16x64xf32>
    %12 = vector.extract_strided_slice %1 {offsets = [0, 1], sizes = [16, 1], strides = [1, 1]} : vector<16x3xf32> to vector<16x1xf32>
    %13 = vector.extract_strided_slice %3 {offsets = [1, 0], sizes = [1, 64], strides = [1, 1]} : vector<3x64xf32> to vector<1x64xf32>
    %14 = vector.broadcast %12 : vector<16x1xf32> to vector<16x64xf32>
    %15 = vector.broadcast %13 : vector<1x64xf32> to vector<16x64xf32>
    %16 = arith.mulf %14, %15 : vector<16x64xf32>
    %17 = arith.addf %11, %16 : vector<16x64xf32>
    %18 = vector.extract_strided_slice %1 {offsets = [0, 2], sizes = [16, 1], strides = [1, 1]} : vector<16x3xf32> to vector<16x1xf32>
    %19 = vector.extract_strided_slice %3 {offsets = [2, 0], sizes = [1, 64], strides = [1, 1]} : vector<3x64xf32> to vector<1x64xf32>
    %20 = vector.broadcast %18 : vector<16x1xf32> to vector<16x64xf32>
    %21 = vector.broadcast %19 : vector<1x64xf32> to vector<16x64xf32>
    %22 = arith.mulf %20, %21 : vector<16x64xf32>
    %23 = arith.addf %17, %22 : vector<16x64xf32>
    %c0_7 = arith.constant 0 : index
    %c0_8 = arith.constant 0 : index
    %24 = vector.load %arg5[%c0_7, %c0_8] : memref<1x64xf32, #tpu.memory_space<vmem>>, vector<1x64xf32>
    %c0_9 = arith.constant 0 : index
    %c0_10 = arith.constant 0 : index
    %25 = vector.load %arg6[%c0_9, %c0_10] : memref<1x64xf32, #tpu.memory_space<vmem>>, vector<1x64xf32>
    %cst = arith.constant dense<0.000000e+00> : vector<16xf32>
    %26 = vector.multi_reduction <add>, %23, %cst [1] : vector<16x64xf32> to vector<16xf32>
    %27 = vector.shape_cast %26 : vector<16xf32> to vector<16x1xf32>
    %cst_11 = arith.constant 6.400000e+01 : f32
    %28 = vector.broadcast %cst_11 : f32 to vector<16x1xf32>
    %29 = arith.divf %27, %28 : vector<16x1xf32>
    %30 = arith.mulf %23, %23 : vector<16x64xf32>
    %cst_12 = arith.constant dense<0.000000e+00> : vector<16xf32>
    %31 = vector.multi_reduction <add>, %30, %cst_12 [1] : vector<16x64xf32> to vector<16xf32>
    %32 = vector.shape_cast %31 : vector<16xf32> to vector<16x1xf32>
    %cst_13 = arith.constant 6.400000e+01 : f32
    %33 = vector.broadcast %cst_13 : f32 to vector<16x1xf32>
    %34 = arith.divf %32, %33 : vector<16x1xf32>
    %35 = arith.mulf %29, %29 : vector<16x1xf32>
    %36 = arith.subf %34, %35 : vector<16x1xf32>
    %cst_14 = arith.constant 0.000000e+00 : f32
    %37 = vector.broadcast %cst_14 : f32 to vector<16x1xf32>
    %38 = arith.maximumf %36, %37 : vector<16x1xf32>
    %39 = vector.broadcast %29 : vector<16x1xf32> to vector<16x64xf32>
    %40 = arith.subf %23, %39 : vector<16x64xf32>
    %cst_15 = arith.constant 9.99999974E-6 : f32
    %41 = vector.broadcast %cst_15 : f32 to vector<16x1xf32>
    %42 = arith.addf %38, %41 : vector<16x1xf32>
    %43 = math.rsqrt %42 : vector<16x1xf32>
    %44 = vector.broadcast %43 : vector<16x1xf32> to vector<16x64xf32>
    %45 = arith.mulf %40, %44 : vector<16x64xf32>
    %46 = vector.broadcast %24 : vector<1x64xf32> to vector<16x64xf32>
    %47 = arith.mulf %45, %46 : vector<16x64xf32>
    %48 = vector.broadcast %25 : vector<1x64xf32> to vector<16x64xf32>
    %49 = arith.addf %47, %48 : vector<16x64xf32>
    %cst_16 = arith.constant 0.000000e+00 : f32
    %50 = vector.broadcast %cst_16 : f32 to vector<16x64xf32>
    %51 = arith.maximumf %49, %50 : vector<16x64xf32>
    %c0_17 = arith.constant 0 : index
    %c0_18 = arith.constant 0 : index
    %52 = vector.load %arg7[%c0_17, %c0_18] : memref<64x128xbf16, #tpu.memory_space<vmem>>, vector<64x128xbf16>
    %c0_19 = arith.constant 0 : index
    %c0_20 = arith.constant 0 : index
    %53 = vector.load %arg8[%c0_19, %c0_20] : memref<1x128xf32, #tpu.memory_space<vmem>>, vector<1x128xf32>
    %54 = arith.truncf %51 : vector<16x64xf32> to vector<16x64xbf16>
    %cst_21 = arith.constant dense<0.000000e+00> : vector<16x128xf32>
    %55 = tpu.matmul %54, %52, %cst_21 {dimension_numbers = #tpu.dot_dimension_numbers<[1], [0], [0], [1], [0, 0, 1, 1], [], []>} : vector<16x64xbf16>, vector<64x128xbf16>, vector<16x128xf32> -> vector<16x128xf32>
    %56 = vector.broadcast %53 : vector<1x128xf32> to vector<16x128xf32>
    %57 = arith.addf %55, %56 : vector<16x128xf32>
    %c0_22 = arith.constant 0 : index
    %c0_23 = arith.constant 0 : index
    %58 = vector.load %arg9[%c0_22, %c0_23] : memref<1x128xf32, #tpu.memory_space<vmem>>, vector<1x128xf32>
    %c0_24 = arith.constant 0 : index
    %c0_25 = arith.constant 0 : index
    %59 = vector.load %arg10[%c0_24, %c0_25] : memref<1x128xf32, #tpu.memory_space<vmem>>, vector<1x128xf32>
    %cst_26 = arith.constant dense<0.000000e+00> : vector<16xf32>
    %60 = vector.multi_reduction <add>, %57, %cst_26 [1] : vector<16x128xf32> to vector<16xf32>
    %61 = vector.shape_cast %60 : vector<16xf32> to vector<16x1xf32>
    %cst_27 = arith.constant 1.280000e+02 : f32
    %62 = vector.broadcast %cst_27 : f32 to vector<16x1xf32>
    %63 = arith.divf %61, %62 : vector<16x1xf32>
    %64 = arith.mulf %57, %57 : vector<16x128xf32>
    %cst_28 = arith.constant dense<0.000000e+00> : vector<16xf32>
    %65 = vector.multi_reduction <add>, %64, %cst_28 [1] : vector<16x128xf32> to vector<16xf32>
    %66 = vector.shape_cast %65 : vector<16xf32> to vector<16x1xf32>
    %cst_29 = arith.constant 1.280000e+02 : f32
    %67 = vector.broadcast %cst_29 : f32 to vector<16x1xf32>
    %68 = arith.divf %66, %67 : vector<16x1xf32>
    %69 = arith.mulf %63, %63 : vector<16x1xf32>
    %70 = arith.subf %68, %69 : vector<16x1xf32>
    %cst_30 = arith.constant 0.000000e+00 : f32
    %71 = vector.broadcast %cst_30 : f32 to vector<16x1xf32>
    %72 = arith.maximumf %70, %71 : vector<16x1xf32>
    %73 = vector.broadcast %63 : vector<16x1xf32> to vector<16x128xf32>
    %74 = arith.subf %57, %73 : vector<16x128xf32>
    %cst_31 = arith.constant 9.99999974E-6 : f32
    %75 = vector.broadcast %cst_31 : f32 to vector<16x1xf32>
    %76 = arith.addf %72, %75 : vector<16x1xf32>
    %77 = math.rsqrt %76 : vector<16x1xf32>
    %78 = vector.broadcast %77 : vector<16x1xf32> to vector<16x128xf32>
    %79 = arith.mulf %74, %78 : vector<16x128xf32>
    %80 = vector.broadcast %58 : vector<1x128xf32> to vector<16x128xf32>
    %81 = arith.mulf %79, %80 : vector<16x128xf32>
    %82 = vector.broadcast %59 : vector<1x128xf32> to vector<16x128xf32>
    %83 = arith.addf %81, %82 : vector<16x128xf32>
    %cst_32 = arith.constant 0.000000e+00 : f32
    %84 = vector.broadcast %cst_32 : f32 to vector<16x128xf32>
    %85 = arith.maximumf %83, %84 : vector<16x128xf32>
    %c0_33 = arith.constant 0 : index
    %c0_34 = arith.constant 0 : index
    %86 = vector.load %arg11[%c0_33, %c0_34] : memref<128x1024xbf16, #tpu.memory_space<vmem>>, vector<128x1024xbf16>
    %c0_35 = arith.constant 0 : index
    %c0_36 = arith.constant 0 : index
    %87 = vector.load %arg12[%c0_35, %c0_36] : memref<1x1024xf32, #tpu.memory_space<vmem>>, vector<1x1024xf32>
    %88 = arith.truncf %85 : vector<16x128xf32> to vector<16x128xbf16>
    %cst_37 = arith.constant dense<0.000000e+00> : vector<16x1024xf32>
    %89 = tpu.matmul %88, %86, %cst_37 {dimension_numbers = #tpu.dot_dimension_numbers<[1], [0], [0], [1], [0, 0, 1, 1], [], []>} : vector<16x128xbf16>, vector<128x1024xbf16>, vector<16x1024xf32> -> vector<16x1024xf32>
    %90 = vector.broadcast %87 : vector<1x1024xf32> to vector<16x1024xf32>
    %91 = arith.addf %89, %90 : vector<16x1024xf32>
    %c0_38 = arith.constant 0 : index
    %c0_39 = arith.constant 0 : index
    %92 = vector.load %arg13[%c0_38, %c0_39] : memref<1x1024xf32, #tpu.memory_space<vmem>>, vector<1x1024xf32>
    %c0_40 = arith.constant 0 : index
    %c0_41 = arith.constant 0 : index
    %93 = vector.load %arg14[%c0_40, %c0_41] : memref<1x1024xf32, #tpu.memory_space<vmem>>, vector<1x1024xf32>
    %cst_42 = arith.constant dense<0.000000e+00> : vector<16xf32>
    %94 = vector.multi_reduction <add>, %91, %cst_42 [1] : vector<16x1024xf32> to vector<16xf32>
    %95 = vector.shape_cast %94 : vector<16xf32> to vector<16x1xf32>
    %cst_43 = arith.constant 1.024000e+03 : f32
    %96 = vector.broadcast %cst_43 : f32 to vector<16x1xf32>
    %97 = arith.divf %95, %96 : vector<16x1xf32>
    %98 = arith.mulf %91, %91 : vector<16x1024xf32>
    %cst_44 = arith.constant dense<0.000000e+00> : vector<16xf32>
    %99 = vector.multi_reduction <add>, %98, %cst_44 [1] : vector<16x1024xf32> to vector<16xf32>
    %100 = vector.shape_cast %99 : vector<16xf32> to vector<16x1xf32>
    %cst_45 = arith.constant 1.024000e+03 : f32
    %101 = vector.broadcast %cst_45 : f32 to vector<16x1xf32>
    %102 = arith.divf %100, %101 : vector<16x1xf32>
    %103 = arith.mulf %97, %97 : vector<16x1xf32>
    %104 = arith.subf %102, %103 : vector<16x1xf32>
    %cst_46 = arith.constant 0.000000e+00 : f32
    %105 = vector.broadcast %cst_46 : f32 to vector<16x1xf32>
    %106 = arith.maximumf %104, %105 : vector<16x1xf32>
    %107 = vector.broadcast %97 : vector<16x1xf32> to vector<16x1024xf32>
    %108 = arith.subf %91, %107 : vector<16x1024xf32>
    %cst_47 = arith.constant 9.99999974E-6 : f32
    %109 = vector.broadcast %cst_47 : f32 to vector<16x1xf32>
    %110 = arith.addf %106, %109 : vector<16x1xf32>
    %111 = math.rsqrt %110 : vector<16x1xf32>
    %112 = vector.broadcast %111 : vector<16x1xf32> to vector<16x1024xf32>
    %113 = arith.mulf %108, %112 : vector<16x1024xf32>
    %114 = vector.broadcast %92 : vector<1x1024xf32> to vector<16x1024xf32>
    %115 = arith.mulf %113, %114 : vector<16x1024xf32>
    %116 = vector.broadcast %93 : vector<1x1024xf32> to vector<16x1024xf32>
    %117 = arith.addf %115, %116 : vector<16x1024xf32>
    %c0_48 = arith.constant 0 : index
    %c0_49 = arith.constant 0 : index
    %c0_50 = arith.constant 0 : index
    %118 = vector.load %arg15[%c0_48, %c0_49, %c0_50] : memref<1x16x1024xf32, #tpu.memory_space<vmem>>, vector<1x16x1024xf32>
    %119 = vector.shape_cast %118 : vector<1x16x1024xf32> to vector<16x1024xf32>
    %120 = vector.shape_cast %117 : vector<16x1024xf32> to vector<1x16x1024xf32>
    tpu.vector_store %arg15[%c0_48, %c0_49, %c0_50], %120 {strides = array<i32>} : memref<1x16x1024xf32, #tpu.memory_space<vmem>>, vector<1x16x1024xf32>,
    return
  }
  func.func @transform_0(%arg0: i32, %arg1: i32) -> (i32, i32, i32) {
    %c0_i32 = arith.constant 0 : i32
    %c0_i32_0 = arith.constant 0 : i32
    return %arg0, %arg1, %c0_i32 : i32, i32, i32
  }
  func.func @transform_1(%arg0: i32, %arg1: i32) -> (i32, i32, i32) {
    %c0_i32 = arith.constant 0 : i32
    %c0_i32_0 = arith.constant 0 : i32
    %c0_i32_1 = arith.constant 0 : i32
    return %arg0, %c0_i32, %c0_i32_0 : i32, i32, i32
  }
  func.func @transform_2(%arg0: i32, %arg1: i32) -> (i32, i32) {
    %c0_i32 = arith.constant 0 : i32
    %c0_i32_0 = arith.constant 0 : i32
    %c0_i32_1 = arith.constant 0 : i32
    return %c0_i32, %c0_i32_0 : i32, i32
  }
  func.func @transform_3(%arg0: i32, %arg1: i32) -> (i32, i32) {
    %c0_i32 = arith.constant 0 : i32
    %c0_i32_0 = arith.constant 0 : i32
    %c0_i32_1 = arith.constant 0 : i32
    return %c0_i32, %c0_i32_0 : i32, i32
  }
  func.func @transform_4(%arg0: i32, %arg1: i32) -> (i32, i32) {
    %c0_i32 = arith.constant 0 : i32
    %c0_i32_0 = arith.constant 0 : i32
    %c0_i32_1 = arith.constant 0 : i32
    return %c0_i32, %c0_i32_0 : i32, i32
  }
  func.func @transform_5(%arg0: i32, %arg1: i32) -> (i32, i32) {
    %c0_i32 = arith.constant 0 : i32
    %c0_i32_0 = arith.constant 0 : i32
    %c0_i32_1 = arith.constant 0 : i32
    return %c0_i32, %c0_i32_0 : i32, i32
  }
  func.func @transform_6(%arg0: i32, %arg1: i32) -> (i32, i32) {
    %c0_i32 = arith.constant 0 : i32
    %c0_i32_0 = arith.constant 0 : i32
    %c0_i32_1 = arith.constant 0 : i32
    return %c0_i32, %c0_i32_0 : i32, i32
  }
  func.func @transform_7(%arg0: i32, %arg1: i32) -> (i32, i32) {
    %c0_i32 = arith.constant 0 : i32
    %c0_i32_0 = arith.constant 0 : i32
    %c0_i32_1 = arith.constant 0 : i32
    return %c0_i32, %c0_i32_0 : i32, i32
  }
  func.func @transform_8(%arg0: i32, %arg1: i32) -> (i32, i32) {
    %c0_i32 = arith.constant 0 : i32
    %c0_i32_0 = arith.constant 0 : i32
    %c0_i32_1 = arith.constant 0 : i32
    return %c0_i32, %c0_i32_0 : i32, i32
  }
  func.func @transform_9(%arg0: i32, %arg1: i32) -> (i32, i32) {
    %c0_i32 = arith.constant 0 : i32
    %c0_i32_0 = arith.constant 0 : i32
    %c0_i32_1 = arith.constant 0 : i32
    return %c0_i32, %c0_i32_0 : i32, i32
  }
  func.func @transform_10(%arg0: i32, %arg1: i32) -> (i32, i32) {
    %c0_i32 = arith.constant 0 : i32
    %c0_i32_0 = arith.constant 0 : i32
    %c0_i32_1 = arith.constant 0 : i32
    return %c0_i32, %c0_i32_0 : i32, i32
  }
  func.func @transform_11(%arg0: i32, %arg1: i32) -> (i32, i32) {
    %c0_i32 = arith.constant 0 : i32
    %c0_i32_0 = arith.constant 0 : i32
    %c0_i32_1 = arith.constant 0 : i32
    return %c0_i32, %c0_i32_0 : i32, i32
  }
  func.func @transform_12(%arg0: i32, %arg1: i32) -> (i32, i32) {
    %c0_i32 = arith.constant 0 : i32
    %c0_i32_0 = arith.constant 0 : i32
    %c0_i32_1 = arith.constant 0 : i32
    return %c0_i32, %c0_i32_0 : i32, i32
  }
  func.func @transform_13(%arg0: i32, %arg1: i32) -> (i32, i32, i32) {
    %c0_i32 = arith.constant 0 : i32
    %c0_i32_0 = arith.constant 0 : i32
    return %arg0, %arg1, %c0_i32 : i32, i32, i32
  }
}

</mosaic_0001>

<llo_original>
// kernel: pointnet_feat.2
$region0: #{pointnet_feat.2}
  #allocation0 [shape = 'u32[]', space=smem, size = 0x4, offset = 0x4, fixed_abs, tag = 'smem constant byte address 0x4 - core index']
  #allocation1 [shape = 'u32[144,128]{1,0:T(1,128)}', space=vmem, size = 0x12000, scoped, tag = 'internal scratch']
  %s0 = inlined_call_operand.vmem [shape: f32[2,64,3], index: 0, kind: input, shape index: {}]
  %s1 = inlined_call_operand.hbm [shape: f32[3,64], index: 1, kind: input, shape index: {}]
  %s2 = inlined_call_operand.hbm [shape: f32[1,64], index: 2, kind: input, shape index: {}]
  %s3 = inlined_call_operand.hbm [shape: f32[1,64], index: 3, kind: input, shape index: {}]
  %s4 = inlined_call_operand.hbm [shape: f32[1,64], index: 4, kind: input, shape index: {}]
  %s5 = inlined_call_operand.vmem [shape: bf16[64,128], index: 5, kind: input, shape index: {}]
  %s6 = inlined_call_operand.hbm [shape: f32[1,128], index: 6, kind: input, shape index: {}]
  %s7 = inlined_call_operand.hbm [shape: f32[1,128], index: 7, kind: input, shape index: {}]
  %s8 = inlined_call_operand.hbm [shape: f32[1,128], index: 8, kind: input, shape index: {}]
  %s9 = inlined_call_operand.vmem [shape: bf16[128,1024], index: 9, kind: input, shape index: {}]
  %s10 = inlined_call_operand.hbm [shape: f32[1,1024], index: 10, kind: input, shape index: {}]
  %s11 = inlined_call_operand.hbm [shape: f32[1,1024], index: 11, kind: input, shape index: {}]
  %s12 = inlined_call_operand.hbm [shape: f32[1,1024], index: 12, kind: input, shape index: {}]
  %s13 = inlined_call_operand.vmem [shape: f32[2,2,1,1024], index: 13, kind: output, shape index: {}]
  %s14 = sld [smem:[#allocation0]]
  $region133: #{pointnet_feat.2} parent=0
    _
  %s16 = ssub.s32 1, %s14
  %s17 = scalar_select 0, %s16, %s14
  $region1: #{pointnet_feat.2} parent=0
    #allocation2 [shape = 'u8[2048]{0}', space=vmem, size = 0x800, scoped, tag = 'input window, operand 1, single buffered']
    #allocation3 [shape = 's32[2]{0}', space=sflag, size = 0x8, scoped, tag = 'scoped memory for pointnet_feat.2']
    #allocation4 [shape = 'u8[512]{0}', space=vmem, size = 0x400, scoped, tag = 'input window, operand 2, single buffered']
    #allocation5 [shape = 's32[1]{0}', space=sflag, size = 0x4, scoped, tag = 'scoped memory for pointnet_feat.2']
    #allocation6 [shape = 'u8[512]{0}', space=vmem, size = 0x400, scoped, tag = 'input window, operand 3, single buffered']
    #allocation7 [shape = 'u8[512]{0}', space=vmem, size = 0x400, scoped, tag = 'input window, operand 4, single buffered']
    #allocation8 [shape = 's32[1]{0}', space=sflag, size = 0x4, scoped, tag = 'scoped memory for pointnet_feat.2']
    #allocation9 [shape = 'u8[512]{0}', space=vmem, size = 0x400, scoped, tag = 'input window, operand 6, single buffered']
    #allocation10 [shape = 'u8[512]{0}', space=vmem, size = 0x400, scoped, tag = 'input window, operand 7, single buffered']
    #allocation11 [shape = 's32[1]{0}', space=sflag, size = 0x4, scoped, tag = 'scoped memory for pointnet_feat.2']
    #allocation12 [shape = 'u8[512]{0}', space=vmem, size = 0x400, scoped, tag = 'input window, operand 8, single buffered']
    #allocation13 [shape = 'u8[4096]{0}', space=vmem, size = 0x1000, scoped, tag = 'input window, operand 10, single buffered']
    #allocation14 [shape = 's32[1]{0}', space=sflag, size = 0x4, scoped, tag = 'scoped memory for pointnet_feat.2']
    #allocation15 [shape = 'u8[4096]{0}', space=vmem, size = 0x1000, scoped, tag = 'input window, operand 11, single buffered']
    #allocation16 [shape = 'u8[4096]{0}', space=vmem, size = 0x1000, scoped, tag = 'input window, operand 12, single buffered']
    #allocation17 [shape = 's32[1]{0}', space=sflag, size = 0x4, scoped, tag = 'scoped memory for pointnet_feat.2']
    %18 = vsyncpa [#allocation3], 0
    %19 = vsyncpa [#allocation5], 0
    %20 = vsyncpa [#allocation8], 0
    %21 = vsyncpa [#allocation11], 0
    %22 = vsyncpa [#allocation14], 0
    %23 = vsyncpa [#allocation17], 0
    loop: start=0, step=1, limit=10
    $region2: #{pointnet_feat.2} parent=1 // loop_pre_header
      _
    $region3: #{pointnet_feat.2} parent=1 // loop_header
      %s25 = sphi 0, %s29
      %p26 = scmp.ge.s32.totalorder %s25, 10
      %s32 = sphi 0, %s51
      %s33 = sphi 0, %s47
      %s34 = sphi 0, %s43
      %s35 = sphi 0, %s32
      %s36 = sphi 0, %s33
      %s37 = sphi 0, %s34
      %s38 = sphi 0, %s35
      %s39 = sphi 0, %s36
      %s40 = sphi 0, %s37
      %s60 = sphi 0, %s62
      %s63 = sphi 0, %s60
      %s64 = sphi 0, %s63
      %s80 = sphi 0, %s64
      %s84 = sphi 0, %s84
      %s86 = sphi 0, %s84
      %s87 = sphi 0, %s86
      %s101 = sphi 0, %s87
      %s105 = sphi 0, %s105
      %s107 = sphi 0, %s105
      %s108 = sphi 0, %s107
      %s122 = sphi 0, %s108
      %s126 = sphi 0, %s126
      %s128 = sphi 0, %s126
      %s129 = sphi 0, %s128
      %s143 = sphi 0, %s129
      %s147 = sphi 0, %s147
      %s149 = sphi 0, %s147
      %s150 = sphi 0, %s149
      %s164 = sphi 0, %s150
      %s168 = sphi 0, %s168
      %s170 = sphi 0, %s168
      %s171 = sphi 0, %s170
      %s185 = sphi 0, %s171
      %s189 = sphi 0, %s189
      %s191 = sphi 0, %s189
      %s192 = sphi 0, %s191
      %s206 = sphi 0, %s192
      %s210 = sphi 0, %s210
      %s212 = sphi 0, %s210
      %s213 = sphi 0, %s212
      %s227 = sphi 0, %s213
      %s231 = sphi 0, %s231
      %s233 = sphi 0, %s231
      %s234 = sphi 0, %s233
      %s248 = sphi 0, %s234
      %s252 = sphi 0, %s252
      %s254 = sphi 0, %s252
      %s255 = sphi 0, %s254
      %s269 = sphi 0, %s255
      %s273 = sphi 0, %s273
      %s275 = sphi 0, %s273
      %s276 = sphi 0, %s275
      %s290 = sphi 0, %s276
      %s294 = sphi 0, %s294
      %s296 = sphi 0, %s294
      %s297 = sphi 0, %s296
      %s311 = sphi 0, %s297
      %s315 = sphi 0, %s315
      %s317 = sphi 0, %s315
      %s318 = sphi 0, %s317
      %s332 = sphi 0, %s318
      %s340 = sphi 0, %s342
      %s343 = sphi 0, %s340
      %s344 = sphi 0, %s343
      %s360 = sphi 0, %s344
    $region4: #{pointnet_feat.2} parent=1 // loop_header_branch
      %28 = sbr.rel (%p26) target = $region8
    $region5: #{pointnet_feat.2} parent=1 // loop_body
      %s30 = ssub.s32 %s25, 1
      %s31 = ssub.s32 %s25, 2
      %s41 = sadd.s32 1, %s34
      %p42 = scmp.ge.s32.totalorder %s41, 2
      %s43 = scalar_select %p42, 0, %s41
      %s44 = sadd.s32 1, %s33
      %s45 = scalar_select %p42, %s44, %s33
      %p46 = scmp.ge.s32.totalorder %s45, 2
      %s47 = scalar_select %p46, 0, %s45
      %s48 = sadd.s32 1, %s32
      %s49 = scalar_select %p46, %s48, %s32
      %p50 = scmp.ge.s32.totalorder %s49, 2
      %s51 = scalar_select %p50, 0, %s49
      %s52 = smul.u32 %s33, 2
      %s53 = sadd.s32 %s52, %s34
      %s54 = smul.u32 %s47, 2
      %s55 = sadd.s32 %s54, %s43
      %s56 = ssub.s32 %s32, %s51
      %s57 = ssub.s32 %s53, %s55
      %s58 = sor.u32 %s56, %s57
      %p59 = scmp.eq.s32.totalorder %s58, 0
      %s61 = sadd.s32 %s60, 1
      %s62 = scalar_select %p59, %s60, %s61
      %p65 = pneg %p59
      %p66 = scmp.eq.s32.totalorder %s25, 7
      %p67 = por %p65, %p66
      %p68 = scmp.ne.s32.totalorder %s60, %s63
      %p69 = scmp.eq.s32.totalorder %s25, 0
      %p70 = por %p68, %p69
      %p71 = scmp.ne.s32.totalorder %s60, %s63
      %p72 = scmp.eq.s32.totalorder %s30, 7
      %p73 = por %p71, %p72
      %p74 = scmp.ne.s32.totalorder %s63, %s64
      %p75 = scmp.eq.s32.totalorder %s30, 0
      %p76 = por %p74, %p75
      %p77 = scmp.ne.s32.totalorder %s63, %s64
      %p78 = scmp.eq.s32.totalorder %s31, 7
      %p79 = por %p77, %p78
      %p81 = scmp.ne.s32.totalorder %s64, %s80
      %p82 = scmp.eq.s32.totalorder %s31, 0
      %p83 = por %p81, %p82
      %s85 = sadd.s32 %s84, 1
      %p88 = scmp.eq.s32.totalorder %s25, 7
      %p89 = scmp.ne.s32.totalorder %s84, %s86
      %p90 = scmp.eq.s32.totalorder %s25, 0
      %p91 = por %p89, %p90
      %p92 = scmp.ne.s32.totalorder %s84, %s86
      %p93 = scmp.eq.s32.totalorder %s30, 7
      %p94 = por %p92, %p93
      %p95 = scmp.ne.s32.totalorder %s86, %s87
      %p96 = scmp.eq.s32.totalorder %s30, 0
      %p97 = por %p95, %p96
      %p98 = scmp.ne.s32.totalorder %s86, %s87
      %p99 = scmp.eq.s32.totalorder %s31, 7
      %p100 = por %p98, %p99
      %p102 = scmp.ne.s32.totalorder %s87, %s101
      %p103 = scmp.eq.s32.totalorder %s31, 0
      %p104 = por %p102, %p103
      %s106 = sadd.s32 %s105, 1
      %p109 = scmp.eq.s32.totalorder %s25, 7
      %p110 = scmp.ne.s32.totalorder %s105, %s107
      %p111 = scmp.eq.s32.totalorder %s25, 0
      %p112 = por %p110, %p111
      %p113 = scmp.ne.s32.totalorder %s105, %s107
      %p114 = scmp.eq.s32.totalorder %s30, 7
      %p115 = por %p113, %p114
      %p116 = scmp.ne.s32.totalorder %s107, %s108
      %p117 = scmp.eq.s32.totalorder %s30, 0
      %p118 = por %p116, %p117
      %p119 = scmp.ne.s32.totalorder %s107, %s108
      %p120 = scmp.eq.s32.totalorder %s31, 7
      %p121 = por %p119, %p120
      %p123 = scmp.ne.s32.totalorder %s108, %s122
      %p124 = scmp.eq.s32.totalorder %s31, 0
      %p125 = por %p123, %p124
      %s127 = sadd.s32 %s126, 1
      %p130 = scmp.eq.s32.totalorder %s25, 7
      %p131 = scmp.ne.s32.totalorder %s126, %s128
      %p132 = scmp.eq.s32.totalorder %s25, 0
      %p133 = por %p131, %p132
      %p134 = scmp.ne.s32.totalorder %s126, %s128
      %p135 = scmp.eq.s32.totalorder %s30, 7
      %p136 = por %p134, %p135
      %p137 = scmp.ne.s32.totalorder %s128, %s129
      %p138 = scmp.eq.s32.totalorder %s30, 0
      %p139 = por %p137, %p138
      %p140 = scmp.ne.s32.totalorder %s128, %s129
      %p141 = scmp.eq.s32.totalorder %s31, 7
      %p142 = por %p140, %p141
      %p144 = scmp.ne.s32.totalorder %s129, %s143
      %p145 = scmp.eq.s32.totalorder %s31, 0
      %p146 = por %p144, %p145
      %s148 = sadd.s32 %s147, 1
      %p151 = scmp.eq.s32.totalorder %s25, 7
      %p152 = scmp.ne.s32.totalorder %s147, %s149
      %p153 = scmp.eq.s32.totalorder %s25, 0
      %p154 = por %p152, %p153
      %p155 = scmp.ne.s32.totalorder %s147, %s149
      %p156 = scmp.eq.s32.totalorder %s30, 7
      %p157 = por %p155, %p156
      %p158 = scmp.ne.s32.totalorder %s149, %s150
      %p159 = scmp.eq.s32.totalorder %s30, 0
      %p160 = por %p158, %p159
      %p161 = scmp.ne.s32.totalorder %s149, %s150
      %p162 = scmp.eq.s32.totalorder %s31, 7
      %p163 = por %p161, %p162
      %p165 = scmp.ne.s32.totalorder %s150, %s164
      %p166 = scmp.eq.s32.totalorder %s31, 0
      %p167 = por %p165, %p166
      %s169 = sadd.s32 %s168, 1
      %p172 = scmp.eq.s32.totalorder %s25, 7
      %p173 = scmp.ne.s32.totalorder %s168, %s170
      %p174 = scmp.eq.s32.totalorder %s25, 0
      %p175 = por %p173, %p174
      %p176 = scmp.ne.s32.totalorder %s168, %s170
      %p177 = scmp.eq.s32.totalorder %s30, 7
      %p178 = por %p176, %p177
      %p179 = scmp.ne.s32.totalorder %s170, %s171
      %p180 = scmp.eq.s32.totalorder %s30, 0
      %p181 = por %p179, %p180
      %p182 = scmp.ne.s32.totalorder %s170, %s171
      %p183 = scmp.eq.s32.totalorder %s31, 7
      %p184 = por %p182, %p183
      %p186 = scmp.ne.s32.totalorder %s171, %s185
      %p187 = scmp.eq.s32.totalorder %s31, 0
      %p188 = por %p186, %p187
      %s190 = sadd.s32 %s189, 1
      %p193 = scmp.eq.s32.totalorder %s25, 7
      %p194 = scmp.ne.s32.totalorder %s189, %s191
      %p195 = scmp.eq.s32.totalorder %s25, 0
      %p196 = por %p194, %p195
      %p197 = scmp.ne.s32.totalorder %s189, %s191
      %p198 = scmp.eq.s32.totalorder %s30, 7
      %p199 = por %p197, %p198
      %p200 = scmp.ne.s32.totalorder %s191, %s192
      %p201 = scmp.eq.s32.totalorder %s30, 0
      %p202 = por %p200, %p201
      %p203 = scmp.ne.s32.totalorder %s191, %s192
      %p204 = scmp.eq.s32.totalorder %s31, 7
      %p205 = por %p203, %p204
      %p207 = scmp.ne.s32.totalorder %s192, %s206
      %p208 = scmp.eq.s32.totalorder %s31, 0
      %p209 = por %p207, %p208
      %s211 = sadd.s32 %s210, 1
      %p214 = scmp.eq.s32.totalorder %s25, 7
      %p215 = scmp.ne.s32.totalorder %s210, %s212
      %p216 = scmp.eq.s32.totalorder %s25, 0
      %p217 = por %p215, %p216
      %p218 = scmp.ne.s32.totalorder %s210, %s212
      %p219 = scmp.eq.s32.totalorder %s30, 7
      %p220 = por %p218, %p219
      %p221 = scmp.ne.s32.totalorder %s212, %s213
      %p222 = scmp.eq.s32.totalorder %s30, 0
      %p223 = por %p221, %p222
      %p224 = scmp.ne.s32.totalorder %s212, %s213
      %p225 = scmp.eq.s32.totalorder %s31, 7
      %p226 = por %p224, %p225
      %p228 = scmp.ne.s32.totalorder %s213, %s227
      %p229 = scmp.eq.s32.totalorder %s31, 0
      %p230 = por %p228, %p229
      %s232 = sadd.s32 %s231, 1
      %p235 = scmp.eq.s32.totalorder %s25, 7
      %p236 = scmp.ne.s32.totalorder %s231, %s233
      %p237 = scmp.eq.s32.totalorder %s25, 0
      %p238 = por %p236, %p237
      %p239 = scmp.ne.s32.totalorder %s231, %s233
      %p240 = scmp.eq.s32.totalorder %s30, 7
      %p241 = por %p239, %p240
      %p242 = scmp.ne.s32.totalorder %s233, %s234
      %p243 = scmp.eq.s32.totalorder %s30, 0
      %p244 = por %p242, %p243
      %p245 = scmp.ne.s32.totalorder %s233, %s234
      %p246 = scmp.eq.s32.totalorder %s31, 7
      %p247 = por %p245, %p246
      %p249 = scmp.ne.s32.totalorder %s234, %s248
      %p250 = scmp.eq.s32.totalorder %s31, 0
      %p251 = por %p249, %p250
      %s253 = sadd.s32 %s252, 1
      %p256 = scmp.eq.s32.totalorder %s25, 7
      %p257 = scmp.ne.s32.totalorder %s252, %s254
      %p258 = scmp.eq.s32.totalorder %s25, 0
      %p259 = por %p257, %p258
      %p260 = scmp.ne.s32.totalorder %s252, %s254
      %p261 = scmp.eq.s32.totalorder %s30, 7
      %p262 = por %p260, %p261
      %p263 = scmp.ne.s32.totalorder %s254, %s255
      %p264 = scmp.eq.s32.totalorder %s30, 0
      %p265 = por %p263, %p264
      %p266 = scmp.ne.s32.totalorder %s254, %s255
      %p267 = scmp.eq.s32.totalorder %s31, 7
      %p268 = por %p266, %p267
      %p270 = scmp.ne.s32.totalorder %s255, %s269
      %p271 = scmp.eq.s32.totalorder %s31, 0
      %p272 = por %p270, %p271
      %s274 = sadd.s32 %s273, 1
      %p277 = scmp.eq.s32.totalorder %s25, 7
      %p278 = scmp.ne.s32.totalorder %s273, %s275
      %p279 = scmp.eq.s32.totalorder %s25, 0
      %p280 = por %p278, %p279
      %p281 = scmp.ne.s32.totalorder %s273, %s275
      %p282 = scmp.eq.s32.totalorder %s30, 7
      %p283 = por %p281, %p282
      %p284 = scmp.ne.s32.totalorder %s275, %s276
      %p285 = scmp.eq.s32.totalorder %s30, 0
      %p286 = por %p284, %p285
      %p287 = scmp.ne.s32.totalorder %s275, %s276
      %p288 = scmp.eq.s32.totalorder %s31, 7
      %p289 = por %p287, %p288
      %p291 = scmp.ne.s32.totalorder %s276, %s290
      %p292 = scmp.eq.s32.totalorder %s31, 0
      %p293 = por %p291, %p292
      %s295 = sadd.s32 %s294, 1
      %p298 = scmp.eq.s32.totalorder %s25, 7
      %p299 = scmp.ne.s32.totalorder %s294, %s296
      %p300 = scmp.eq.s32.totalorder %s25, 0
      %p301 = por %p299, %p300
      %p302 = scmp.ne.s32.totalorder %s294, %s296
      %p303 = scmp.eq.s32.totalorder %s30, 7
      %p304 = por %p302, %p303
      %p305 = scmp.ne.s32.totalorder %s296, %s297
      %p306 = scmp.eq.s32.totalorder %s30, 0
      %p307 = por %p305, %p306
      %p308 = scmp.ne.s32.totalorder %s296, %s297
      %p309 = scmp.eq.s32.totalorder %s31, 7
      %p310 = por %p308, %p309
      %p312 = scmp.ne.s32.totalorder %s297, %s311
      %p313 = scmp.eq.s32.totalorder %s31, 0
      %p314 = por %p312, %p313
      %s316 = sadd.s32 %s315, 1
      %p319 = scmp.eq.s32.totalorder %s25, 7
      %p320 = scmp.ne.s32.totalorder %s315, %s317
      %p321 = scmp.eq.s32.totalorder %s25, 0
      %p322 = por %p320, %p321
      %p323 = scmp.ne.s32.totalorder %s315, %s317
      %p324 = scmp.eq.s32.totalorder %s30, 7
      %p325 = por %p323, %p324
      %p326 = scmp.ne.s32.totalorder %s317, %s318
      %p327 = scmp.eq.s32.totalorder %s30, 0
      %p328 = por %p326, %p327
      %p329 = scmp.ne.s32.totalorder %s317, %s318
      %p330 = scmp.eq.s32.totalorder %s31, 7
      %p331 = por %p329, %p330
      %p333 = scmp.ne.s32.totalorder %s318, %s332
      %p334 = scmp.eq.s32.totalorder %s31, 0
      %p335 = por %p333, %p334
      %s336 = ssub.s32 %s32, %s51
      %s337 = ssub.s32 %s33, %s47
      %s338 = sor.u32 %s336, %s337
      %p339 = scmp.eq.s32.totalorder %s338, 0
      %s341 = sadd.s32 %s340, 1
      %s342 = scalar_select %p339, %s340, %s341
      %p345 = pneg %p339
      %p346 = scmp.eq.s32.totalorder %s25, 7
      %p347 = por %p345, %p346
      %p348 = scmp.ne.s32.totalorder %s340, %s343
      %p349 = scmp.eq.s32.totalorder %s25, 0
      %p350 = por %p348, %p349
      %p351 = scmp.ne.s32.totalorder %s340, %s343
      %p352 = scmp.eq.s32.totalorder %s30, 7
      %p353 = por %p351, %p352
      %p354 = scmp.ne.s32.totalorder %s343, %s344
      %p355 = scmp.eq.s32.totalorder %s30, 0
      %p356 = por %p354, %p355
      %p357 = scmp.ne.s32.totalorder %s343, %s344
      %p358 = scmp.eq.s32.totalorder %s31, 7
      %p359 = por %p357, %p358
      %p361 = scmp.ne.s32.totalorder %s344, %s360
      %p362 = scmp.eq.s32.totalorder %s31, 0
      %p363 = por %p361, %p362
      %p364 = scmp.le.s32.totalorder 1, %s25
      %p365 = scmp.lt.s32.totalorder %s25, 9
      %p366 = pnand %p364, %p365
      %p367 = pneg %p366
      // Predicated region
      $region9: #{pointnet_feat.2} parent=5 // pred_check
        _
      $region10: #{pointnet_feat.2} parent=5 // pred_check_branch
        %369 = sbr.rel (%p366) target = $region12
      $region11: #{pointnet_feat.2} parent=5 // pred_region
        %s370 = ssub.s32 %s25, 1
        // Predicated region
        $region13: #{pointnet_feat.2} parent=11 // pred_check
          %p371 = pneg %p97
        $region14: #{pointnet_feat.2} parent=11 // pred_check_branch
          %373 = sbr.rel (%p371) target = $region16
        $region15: #{pointnet_feat.2} parent=11 // pred_region
          %s375 = ssub.s32 64, 64
          %376 = vsyncadd [#allocation3], %s375
          %s378 = sshll.u32 [#allocation2], 4
          %s379 = int_to_ptr.vmem [resolvable:$true] %s378
          %381 = dma.hbm_to_vmem [thread:$0]  %s1, 64, %s379, [#allocation3]
        $region16: #{pointnet_feat.2} parent=11 // pred_fallthru
          _
        // Predicated region
        $region17: #{pointnet_feat.2} parent=11 // pred_check
          %p382 = pneg %p118
        $region18: #{pointnet_feat.2} parent=11 // pred_check_branch
          %384 = sbr.rel (%p382) target = $region20
        $region19: #{pointnet_feat.2} parent=11 // pred_region
          %s386 = ssub.s32 16, 16
          %387 = vsyncadd [#allocation5], %s386
          %s389 = sshll.u32 [#allocation4], 4
          %s390 = int_to_ptr.vmem [resolvable:$true] %s389
          %392 = dma.hbm_to_vmem [thread:$0]  %s2, 16, %s390, [#allocation5]
        $region20: #{pointnet_feat.2} parent=11 // pred_fallthru
          _
        // Predicated region
        $region21: #{pointnet_feat.2} parent=11 // pred_check
          %p393 = pneg %p139
        $region22: #{pointnet_feat.2} parent=11 // pred_check_branch
          %395 = sbr.rel (%p393) target = $region24
        $region23: #{pointnet_feat.2} parent=11 // pred_region
          %s397 = ssub.s32 16, 16
          %398 = vsyncadd [#allocation5], %s397
          %s400 = sshll.u32 [#allocation6], 4
          %s401 = int_to_ptr.vmem [resolvable:$true] %s400
          %403 = dma.hbm_to_vmem [thread:$0]  %s3, 16, %s401, [#allocation5]
        $region24: #{pointnet_feat.2} parent=11 // pred_fallthru
          _
        // Predicated region
        $region25: #{pointnet_feat.2} parent=11 // pred_check
          %p404 = pneg %p160
        $region26: #{pointnet_feat.2} parent=11 // pred_check_branch
          %406 = sbr.rel (%p404) target = $region28
        $region27: #{pointnet_feat.2} parent=11 // pred_region
          %s408 = ssub.s32 16, 16
          %409 = vsyncadd [#allocation8], %s408
          %s411 = sshll.u32 [#allocation7], 4
          %s412 = int_to_ptr.vmem [resolvable:$true] %s411
          %414 = dma.hbm_to_vmem [thread:$0]  %s4, 16, %s412, [#allocation8]
        $region28: #{pointnet_feat.2} parent=11 // pred_fallthru
          _
        // Predicated region
        $region29: #{pointnet_feat.2} parent=11 // pred_check
          %p415 = pneg %p181
        $region30: #{pointnet_feat.2} parent=11 // pred_check_branch
          %417 = sbr.rel (%p415) target = $region32
        $region31: #{pointnet_feat.2} parent=11 // pred_region
          _
        $region32: #{pointnet_feat.2} parent=11 // pred_fallthru
          _
        // Predicated region
        $region33: #{pointnet_feat.2} parent=11 // pred_check
          %p418 = pneg %p202
        $region34: #{pointnet_feat.2} parent=11 // pred_check_branch
          %420 = sbr.rel (%p418) target = $region36
        $region35: #{pointnet_feat.2} parent=11 // pred_region
          %s422 = ssub.s32 16, 16
          %423 = vsyncadd [#allocation8], %s422
          %s425 = sshll.u32 [#allocation9], 4
          %s426 = int_to_ptr.vmem [resolvable:$true] %s425
          %428 = dma.hbm_to_vmem [thread:$0]  %s6, 16, %s426, [#allocation8]
        $region36: #{pointnet_feat.2} parent=11 // pred_fallthru
          _
        // Predicated region
        $region37: #{pointnet_feat.2} parent=11 // pred_check
          %p429 = pneg %p223
        $region38: #{pointnet_feat.2} parent=11 // pred_check_branch
          %431 = sbr.rel (%p429) target = $region40
        $region39: #{pointnet_feat.2} parent=11 // pred_region
          %s433 = ssub.s32 16, 16
          %434 = vsyncadd [#allocation11], %s433
          %s436 = sshll.u32 [#allocation10], 4
          %s437 = int_to_ptr.vmem [resolvable:$true] %s436
          %439 = dma.hbm_to_vmem [thread:$0]  %s7, 16, %s437, [#allocation11]
        $region40: #{pointnet_feat.2} parent=11 // pred_fallthru
          _
        // Predicated region
        $region41: #{pointnet_feat.2} parent=11 // pred_check
          %p440 = pneg %p244
        $region42: #{pointnet_feat.2} parent=11 // pred_check_branch
          %442 = sbr.rel (%p440) target = $region44
        $region43: #{pointnet_feat.2} parent=11 // pred_region
          %s444 = ssub.s32 16, 16
          %445 = vsyncadd [#allocation11], %s444
          %s447 = sshll.u32 [#allocation12], 4
          %s448 = int_to_ptr.vmem [resolvable:$true] %s447
          %450 = dma.hbm_to_vmem [thread:$0]  %s8, 16, %s448, [#allocation11]
        $region44: #{pointnet_feat.2} parent=11 // pred_fallthru
          _
        // Predicated region
        $region45: #{pointnet_feat.2} parent=11 // pred_check
          %p451 = pneg %p265
        $region46: #{pointnet_feat.2} parent=11 // pred_check_branch
          %453 = sbr.rel (%p451) target = $region48
        $region47: #{pointnet_feat.2} parent=11 // pred_region
          _
        $region48: #{pointnet_feat.2} parent=11 // pred_fallthru
          _
        // Predicated region
        $region49: #{pointnet_feat.2} parent=11 // pred_check
          %p454 = pneg %p286
        $region50: #{pointnet_feat.2} parent=11 // pred_check_branch
          %456 = sbr.rel (%p454) target = $region52
        $region51: #{pointnet_feat.2} parent=11 // pred_region
          %s458 = ssub.s32 128, 128
          %459 = vsyncadd [#allocation14], %s458
          %s461 = sshll.u32 [#allocation13], 4
          %s462 = int_to_ptr.vmem [resolvable:$true] %s461
          %464 = dma.hbm_to_vmem [thread:$0]  %s10, 128, %s462, [#allocation14]
        $region52: #{pointnet_feat.2} parent=11 // pred_fallthru
          _
        // Predicated region
        $region53: #{pointnet_feat.2} parent=11 // pred_check
          %p465 = pneg %p307
        $region54: #{pointnet_feat.2} parent=11 // pred_check_branch
          %467 = sbr.rel (%p465) target = $region56
        $region55: #{pointnet_feat.2} parent=11 // pred_region
          %s469 = ssub.s32 128, 128
          %470 = vsyncadd [#allocation14], %s469
          %s472 = sshll.u32 [#allocation15], 4
          %s473 = int_to_ptr.vmem [resolvable:$true] %s472
          %475 = dma.hbm_to_vmem [thread:$0]  %s11, 128, %s473, [#allocation14]
        $region56: #{pointnet_feat.2} parent=11 // pred_fallthru
          _
        // Predicated region
        $region57: #{pointnet_feat.2} parent=11 // pred_check
          %p476 = pneg %p328
        $region58: #{pointnet_feat.2} parent=11 // pred_check_branch
          %478 = sbr.rel (%p476) target = $region60
        $region59: #{pointnet_feat.2} parent=11 // pred_region
          %s480 = ssub.s32 128, 128
          %481 = vsyncadd [#allocation17], %s480
          %s483 = sshll.u32 [#allocation16], 4
          %s484 = int_to_ptr.vmem [resolvable:$true] %s483
          %486 = dma.hbm_to_vmem [thread:$0]  %s12, 128, %s484, [#allocation17]
        $region60: #{pointnet_feat.2} parent=11 // pred_fallthru
          _
      $region12: #{pointnet_feat.2} parent=5 // pred_fallthru
        _
      %p487 = scmp.lt.s32.totalorder %s25, 8
      // Predicated region
      $region61: #{pointnet_feat.2} parent=5 // pred_check
        %p488 = pneg %p487
      $region62: #{pointnet_feat.2} parent=5 // pred_check_branch
        %490 = sbr.rel (%p488) target = $region64
      $region63: #{pointnet_feat.2} parent=5 // pred_region
        // Predicated region
        $region65: #{pointnet_feat.2} parent=63 // pred_check
          %p491 = pneg %p70
        $region66: #{pointnet_feat.2} parent=63 // pred_check_branch
          %493 = sbr.rel (%p491) target = $region68
        $region67: #{pointnet_feat.2} parent=63 // pred_region
          %s494 = smul.u32 %s33, 2
          %s495 = sadd.s32 %s494, %s34
          %s496 = smul.u32 2, %s495
          %p497 = scmp.lt.s32.totalorder %s32, 1
          %s498 = scalar_select %p497, %s32, 1
          %p499 = scmp.lt.s32.totalorder %s496, 7
          %s500 = scalar_select %p499, %s496, 7
          %s501 = smul.addr %s498, 8
          %s502 = sadd.s32 %s500, %s501
          %s503 = smul.addr %s502, 8
          %s504 = scalar_lea.vmem %s0, %s503
          %s505 = smul.u32 %s33, 2
          %s506 = sadd.s32 %s505, %s34
          %s507 = smul.u32 2, %s506
        $region68: #{pointnet_feat.2} parent=63 // pred_fallthru
          _
      $region64: #{pointnet_feat.2} parent=5 // pred_fallthru
        _
      %p508 = scmp.le.s32.totalorder 1, %s25
      %p509 = scmp.lt.s32.totalorder %s25, 9
      %p510 = pnand %p508, %p509
      %p511 = pneg %p510
      // Predicated region
      $region69: #{pointnet_feat.2} parent=5 // pred_check
        _
      $region70: #{pointnet_feat.2} parent=5 // pred_check_branch
        %513 = sbr.rel (%p510) target = $region72
      $region71: #{pointnet_feat.2} parent=5 // pred_region
        %s514 = ssub.s32 %s25, 1
        // Predicated region
        $region73: #{pointnet_feat.2} parent=71 // pred_check
          %p515 = pneg %p97
        $region74: #{pointnet_feat.2} parent=71 // pred_check_branch
          %517 = sbr.rel (%p515) target = $region76
        $region75: #{pointnet_feat.2} parent=71 // pred_region
          %518 = dma.done [#allocation3], 64
        $region76: #{pointnet_feat.2} parent=71 // pred_fallthru
          _
        // Predicated region
        $region77: #{pointnet_feat.2} parent=71 // pred_check
          %p519 = pneg %p118
        $region78: #{pointnet_feat.2} parent=71 // pred_check_branch
          %521 = sbr.rel (%p519) target = $region80
        $region79: #{pointnet_feat.2} parent=71 // pred_region
          %522 = dma.done [#allocation5], 16
        $region80: #{pointnet_feat.2} parent=71 // pred_fallthru
          _
        // Predicated region
        $region81: #{pointnet_feat.2} parent=71 // pred_check
          %p523 = pneg %p139
        $region82: #{pointnet_feat.2} parent=71 // pred_check_branch
          %525 = sbr.rel (%p523) target = $region84
        $region83: #{pointnet_feat.2} parent=71 // pred_region
          %526 = dma.done [#allocation5], 16
        $region84: #{pointnet_feat.2} parent=71 // pred_fallthru
          _
        // Predicated region
        $region85: #{pointnet_feat.2} parent=71 // pred_check
          %p527 = pneg %p160
        $region86: #{pointnet_feat.2} parent=71 // pred_check_branch
          %529 = sbr.rel (%p527) target = $region88
        $region87: #{pointnet_feat.2} parent=71 // pred_region
          %530 = dma.done [#allocation8], 16
        $region88: #{pointnet_feat.2} parent=71 // pred_fallthru
          _
        // Predicated region
        $region89: #{pointnet_feat.2} parent=71 // pred_check
          %p531 = pneg %p202
        $region90: #{pointnet_feat.2} parent=71 // pred_check_branch
          %533 = sbr.rel (%p531) target = $region92
        $region91: #{pointnet_feat.2} parent=71 // pred_region
          %534 = dma.done [#allocation8], 16
        $region92: #{pointnet_feat.2} parent=71 // pred_fallthru
          _
        // Predicated region
        $region93: #{pointnet_feat.2} parent=71 // pred_check
          %p535 = pneg %p223
        $region94: #{pointnet_feat.2} parent=71 // pred_check_branch
          %537 = sbr.rel (%p535) target = $region96
        $region95: #{pointnet_feat.2} parent=71 // pred_region
          %538 = dma.done [#allocation11], 16
        $region96: #{pointnet_feat.2} parent=71 // pred_fallthru
          _
        // Predicated region
        $region97: #{pointnet_feat.2} parent=71 // pred_check
          %p539 = pneg %p244
        $region98: #{pointnet_feat.2} parent=71 // pred_check_branch
          %541 = sbr.rel (%p539) target = $region100
        $region99: #{pointnet_feat.2} parent=71 // pred_region
          %542 = dma.done [#allocation11], 16
        $region100: #{pointnet_feat.2} parent=71 // pred_fallthru
          _
        // Predicated region
        $region101: #{pointnet_feat.2} parent=71 // pred_check
          %p543 = pneg %p286
        $region102: #{pointnet_feat.2} parent=71 // pred_check_branch
          %545 = sbr.rel (%p543) target = $region104
        $region103: #{pointnet_feat.2} parent=71 // pred_region
          %546 = dma.done [#allocation14], 128
        $region104: #{pointnet_feat.2} parent=71 // pred_fallthru
          _
        // Predicated region
        $region105: #{pointnet_feat.2} parent=71 // pred_check
          %p547 = pneg %p307
        $region106: #{pointnet_feat.2} parent=71 // pred_check_branch
          %549 = sbr.rel (%p547) target = $region108
        $region107: #{pointnet_feat.2} parent=71 // pred_region
          %550 = dma.done [#allocation14], 128
        $region108: #{pointnet_feat.2} parent=71 // pred_fallthru
          _
        // Predicated region
        $region109: #{pointnet_feat.2} parent=71 // pred_check
          %p551 = pneg %p328
        $region110: #{pointnet_feat.2} parent=71 // pred_check_branch
          %553 = sbr.rel (%p551) target = $region112
        $region111: #{pointnet_feat.2} parent=71 // pred_region
          %554 = dma.done [#allocation17], 128
        $region112: #{pointnet_feat.2} parent=71 // pred_fallthru
          _
        %s555 = smul.u32 %s36, 2
        %s556 = sadd.s32 %s555, %s37
        %s557 = smul.u32 2, %s556
        %p558 = scmp.lt.s32.totalorder %s35, 1
        %s559 = scalar_select %p558, %s35, 1
        %p560 = scmp.lt.s32.totalorder %s557, 7
        %s561 = scalar_select %p560, %s557, 7
        %s562 = smul.addr %s559, 8
        %s563 = sadd.s32 %s561, %s562
        %s564 = smul.addr %s563, 8
        %s565 = scalar_lea.vmem %s0, %s564
        %p566 = pneg %p76
        %p567 = pneg %p73
        %p568 = pneg %p97
        %p569 = pneg %p94
        %p570 = pneg %p118
        %p571 = pneg %p115
        %p572 = pneg %p139
        %p573 = pneg %p136
        %p574 = pneg %p160
        %p575 = pneg %p157
        %p576 = pneg %p181
        %p577 = pneg %p178
        %p578 = pneg %p202
        %p579 = pneg %p199
        %p580 = pneg %p223
        %p581 = pneg %p220
        %p582 = pneg %p244
        %p583 = pneg %p241
        %p584 = pneg %p265
        %p585 = pneg %p262
        %p586 = pneg %p286
        %p587 = pneg %p283
        %p588 = pneg %p307
        %p589 = pneg %p304
        %p590 = pneg %p328
        %p591 = pneg %p325
        %p592 = pneg %p356
        %p593 = pneg %p353
        %p594 = scmp.lt.s32.totalorder %s35, 1
        %s595 = scalar_select %p594, %s35, 1
        %p596 = scmp.lt.s32.totalorder %s36, 1
        %s597 = scalar_select %p596, %s36, 1
        %s598 = smul.addr %s597, 8
        %s599 = smul.addr %s595, 16
        %s600 = sadd.s32 %s598, %s599
        %s601 = scalar_lea.vmem %s13, %s600
        %s602 = smul.u32 %s36, 2
        %s603 = sadd.s32 %s602, %s37
        %s604 = smul.u32 2, %s603
        %p605 = scmp.lt.s32.totalorder %s35, 1
        %s606 = scalar_select %p605, %s35, 1
        %p607 = scmp.lt.s32.totalorder %s604, 7
        %s608 = scalar_select %p607, %s604, 7
        %s609 = smul.addr %s606, 8
        %s610 = sadd.s32 %s608, %s609
        %s611 = smul.addr %s610, 8
        %s612 = scalar_lea.vmem %s0, %s611
        %s613 = smul.u32 %s36, 2
        %s614 = sadd.s32 %s613, %s37
        %s615 = smul.u32 2, %s614
        %p616 = scmp.lt.s32.totalorder %s35, 1
        %s617 = scalar_select %p616, %s35, 1
        %p618 = scmp.lt.s32.totalorder %s36, 1
        %s619 = scalar_select %p618, %s36, 1
        %s620 = smul.addr %s619, 8
        %s621 = smul.addr %s617, 16
        %s622 = sadd.s32 %s620, %s621
        %s623 = scalar_lea.vmem %s13, %s622
        %v625 = vld [vmem:[%s612] sm:$0xff]
        %v626 = vld [vmem:[%s612 + $0x8] sm:$0xff]
        %v627 = vld [vmem:[#allocation2] sm:$0x7]
        %v628 = vld [vmem:[#allocation4] sm:$0x1]
        %630 = vset.pattern.permute.xlu0 0
        %631 = vperm.xlu0 %630, %v625
        %v632 = vpop.permute.xlu0 %631
        %635 = vset.pattern.permute.xlu0 0
        %636 = vperm.xlu0 %635, %v626
        %v637 = vpop.permute.xlu0 %636
        %v639 = vlaneseq
        %v640 = vshrl.u32 %v639, 7
        %v641 = vsub.s32 0, %v640
        %v642 = vrot.slane %v627, %v641
        %v643 = vmul.f32 %v632, %v642
        %v644 = vmul.f32 %v637, %v642
        %v646 = vlaneseq
        %v647 = vshrl.u32 %v646, 7
        %v648 = vsub.s32 0, %v647
        %v649 = vrot.slane %v628, %v648
        %v651 = vadd.f32 %v649, %v643
        %v652 = vadd.f32 %v649, %v644
        %653 = vset.pattern.permute.xlu0 1
        %654 = vperm.xlu0 %653, %v625
        %v655 = vpop.permute.xlu0 %654
        %657 = vset.pattern.permute.xlu0 1
        %658 = vperm.xlu0 %657, %v626
        %v659 = vpop.permute.xlu0 %658
        %v661 = vlaneseq
        %v662 = vshrl.u32 %v661, 7
        %v663 = vsub.s32 1, %v662
        %v664 = vrot.slane %v627, %v663
        %v665 = vmul.f32 %v655, %v664
        %v666 = vmul.f32 %v659, %v664
        %v667 = vadd.f32 %v651, %v665
        %v668 = vadd.f32 %v652, %v666
        %669 = vset.pattern.permute.xlu0 2
        %670 = vperm.xlu0 %669, %v625
        %v671 = vpop.permute.xlu0 %670
        %673 = vset.pattern.permute.xlu0 2
        %674 = vperm.xlu0 %673, %v626
        %v675 = vpop.permute.xlu0 %674
        %v677 = vlaneseq
        %v678 = vshrl.u32 %v677, 7
        %v679 = vsub.s32 2, %v678
        %v680 = vrot.slane %v627, %v679
        %v681 = vmul.f32 %v671, %v680
        %v682 = vmul.f32 %v675, %v680
        %v683 = vadd.f32 %v667, %v681
        %v684 = vadd.f32 %v668, %v682
        %v685 = vld [vmem:[#allocation6] sm:$0x1]
        %v686 = vld [vmem:[#allocation7] sm:$0x1]
        %vm687 = vcmask 523264
        %v688 = vsel %vm687, %v683, 0.0
        %689 = vadd.xlane.f32.xlu0 %v688
        %v690 = vpop.xlane.xlu0 %689
        %v691 = vsel %vm687, %v684, 0.0
        %692 = vadd.xlane.f32.xlu0 %v691
        %v693 = vpop.xlane.xlu0 %692
        %v694 = vrcp.pop 64.0
        %v695 = vmul.f32 %v690, %v694
        %v696 = vmul.f32 %v693, %v694
        %v697 = vmul.f32 %v683, %v683
        %v698 = vmul.f32 %v684, %v684
        %v699 = vsel %vm687, %v697, 0.0
        %700 = vadd.xlane.f32.xlu0 %v699
        %v701 = vpop.xlane.xlu0 %700
        %v702 = vsel %vm687, %v698, 0.0
        %703 = vadd.xlane.f32.xlu0 %v702
        %v704 = vpop.xlane.xlu0 %703
        %v705 = vmul.f32 %v701, %v694
        %v706 = vmul.f32 %v704, %v694
        %v707 = vmul.f32 %v695, %v695
        %v708 = vmul.f32 %v696, %v696
        %v709 = vsub.f32 %v705, %v707
        %v710 = vsub.f32 %v706, %v708
        %v711 = vmax.f32 %v709, 0.0
        %v712 = vmax.f32 %v710, 0.0
        %v713 = vsub.f32 %v683, %v695
        %v714 = vsub.f32 %v684, %v696
        %v715 = vadd.f32 %v711, 1e-05
        %v716 = vadd.f32 %v712, 1e-05
        %v717 = vrsqrt.pop %v715
        %v718 = vrsqrt.pop %v716
        %v719 = vmul.f32 %v713, %v717
        %v720 = vmul.f32 %v714, %v718
        %v722 = vlaneseq
        %v723 = vshrl.u32 %v722, 7
        %v724 = vsub.s32 0, %v723
        %v725 = vrot.slane %v685, %v724
        %v727 = vmul.f32 %v719, %v725
        %v728 = vmul.f32 %v720, %v725
        %v730 = vlaneseq
        %v731 = vshrl.u32 %v730, 7
        %v732 = vsub.s32 0, %v731
        %v733 = vrot.slane %v686, %v732
        %v735 = vadd.f32 %v727, %v733
        %v736 = vadd.f32 %v728, %v733
        %v737 = vmax.f32 %v735, 0.0
        %v738 = vmax.f32 %v736, 0.0
        %v739 = vld [vmem:[%s5] sm:$0xf]
        %v740 = vld [vmem:[%s5 + $0x4] sm:$0xf]
        %v741 = vld [vmem:[%s5 + $0x8] sm:$0xf]
        %v742 = vld [vmem:[%s5 + $0xc] sm:$0xf]
        %v743 = vld [vmem:[%s5 + $0x10] sm:$0xf]
        %v744 = vld [vmem:[%s5 + $0x14] sm:$0xf]
        %v745 = vld [vmem:[%s5 + $0x18] sm:$0xf]
        %v746 = vld [vmem:[%s5 + $0x1c] sm:$0xf]
        %v747 = vld [vmem:[#allocation9] sm:$0x1]
        %v748 = vpack.c.bf16 %v738, %v737
        %v750 = vlaneseq
        %v751 = vshrl.u32 %v750, 7
        %v752 = vsub.s32 0, %v751
        %v753 = vrot.slane %v747, %v752
        %v763 = vunpack.c.l.b16 %v739
        %v764 = vunpack.c.l.b16 %v740
        %v765 = vunpack.c.l.b16 %v741
        %v766 = vunpack.c.l.b16 %v742
        %v767 = vunpack.c.l.b16 %v743
        %v768 = vunpack.c.l.b16 %v744
        %v769 = vunpack.c.l.b16 %v745
        %v770 = vunpack.c.l.b16 %v746
        %v771 = vpack.c.b16 %v764, %v763
        %v772 = vpack.c.b16 %v766, %v765
        %v773 = vpack.c.b16 %v768, %v767
        %v774 = vpack.c.b16 %v770, %v769
        %v780 = vsel %vm687, %v748, 0
        %782 = vmatprep.subr.bf16.mxu0 0
        %783 = vmatpush1.bf16.msra.mxu0 0
        %784 = vmatprep.subr.bf16.mxu0 0
        %785 = vmatpush1.bf16.msra.mxu0 0
        %786 = vmatprep.subr.bf16.mxu0 0
        %787 = vmatpush1.bf16.msra.mxu0 0
        %788 = vmatprep.subr.bf16.mxu0 0
        %789 = vmatpush1.bf16.msra.mxu0 0
        %790 = vmatprep.subr.bf16.mxu0 0
        %791 = vmatpush1.bf16.msra.mxu0 %v774
        %792 = vmatprep.subr.bf16.mxu0 0
        %793 = vmatpush1.bf16.msra.mxu0 %v773
        %794 = vmatprep.subr.bf16.mxu0 0
        %795 = vmatpush1.bf16.msra.mxu0 %v772
        %796 = vmatprep.subr.bf16.mxu0 0
        %797 = vmatpush1.bf16.msra.mxu0 %v771
        %798 = vmatprep.subr.bf16.mxu0 0
        %799 = vmatpush2.bf16.msra.mxu0 0
        %800 = vmatprep.subr.bf16.mxu0 0
        %801 = vmatpush2.bf16.msra.mxu0 0
        %802 = vmatprep.subr.bf16.mxu0 0
        %803 = vmatpush2.bf16.msra.mxu0 0
        %804 = vmatprep.subr.bf16.mxu0 0
        %805 = vmatpush2.bf16.msra.mxu0 0
        %806 = vmatprep.subr.bf16.mxu0 0
        %807 = vmatpush2.bf16.msra.mxu0 0
        %808 = vmatprep.subr.bf16.mxu0 0
        %809 = vmatpush2.bf16.msra.mxu0 0
        %810 = vmatprep.subr.bf16.mxu0 0
        %811 = vmatpush2.bf16.msra.mxu0 0
        %812 = vmatprep.subr.bf16.mxu0 0
        %813 = vmatpush2.bf16.msra.mxu0 0
        %814 = vmatprep.mubr.bf16.mxu0 0
        %815 = vmatmul.mubr.bf16.gmra.mxu0 %v780
        %v816 = vpop.f32.mrf.mxu0
        %v817 = vadd.f32 %v753, %v816
        %v818 = vpop.f32.mrf.mxu0
        %v819 = vpop.f32.mrf.mxu0
        %v820 = vadd.f32 %v753, %v819
        %v821 = vpop.f32.mrf.mxu0
        %822 = vdwg.mxu0
        %v823 = vld [vmem:[#allocation10] sm:$0x1]
        %v824 = vld [vmem:[#allocation12] sm:$0x1]
        %825 = vadd.xlane.f32.xlu0 %v817
        %v826 = vpop.xlane.xlu0 %825
        %827 = vadd.xlane.f32.xlu0 %v820
        %v828 = vpop.xlane.xlu0 %827
        %v829 = vrcp.pop 128.0
        %v830 = vmul.f32 %v826, %v829
        %v831 = vmul.f32 %v828, %v829
        %v832 = vmul.f32 %v817, %v817
        %v833 = vmul.f32 %v820, %v820
        %834 = vadd.xlane.f32.xlu0 %v832
        %v835 = vpop.xlane.xlu0 %834
        %836 = vadd.xlane.f32.xlu0 %v833
        %v837 = vpop.xlane.xlu0 %836
        %v838 = vmul.f32 %v835, %v829
        %v839 = vmul.f32 %v837, %v829
        %v840 = vmul.f32 %v830, %v830
        %v841 = vmul.f32 %v831, %v831
        %v842 = vsub.f32 %v838, %v840
        %v843 = vsub.f32 %v839, %v841
        %v844 = vmax.f32 %v842, 0.0
        %v845 = vmax.f32 %v843, 0.0
        %v846 = vsub.f32 %v817, %v830
        %v847 = vsub.f32 %v820, %v831
        %v848 = vadd.f32 %v844, 1e-05
        %v849 = vadd.f32 %v845, 1e-05
        %v850 = vrsqrt.pop %v848
        %v851 = vrsqrt.pop %v849
        %v852 = vmul.f32 %v846, %v850
        %v853 = vmul.f32 %v847, %v851
        %v855 = vlaneseq
        %v856 = vshrl.u32 %v855, 7
        %v857 = vsub.s32 0, %v856
        %v858 = vrot.slane %v823, %v857
        %v860 = vmul.f32 %v852, %v858
        %v861 = vmul.f32 %v853, %v858
        %v863 = vlaneseq
        %v864 = vshrl.u32 %v863, 7
        %v865 = vsub.s32 0, %v864
        %v866 = vrot.slane %v824, %v865
        %v868 = vadd.f32 %v860, %v866
        %v869 = vadd.f32 %v861, %v866
        %v870 = vmax.f32 %v868, 0.0
        %v871 = vmax.f32 %v869, 0.0
        %v872 = vld [vmem:[%s9] sm:$0xff]
        %v873 = vld [vmem:[%s9 + $0x8] sm:$0xff]
        %v874 = vld [vmem:[%s9 + $0x10] sm:$0xff]
        %v875 = vld [vmem:[%s9 + $0x18] sm:$0xff]
        %v876 = vld [vmem:[%s9 + $0x20] sm:$0xff]
        %v877 = vld [vmem:[%s9 + $0x28] sm:$0xff]
        %v878 = vld [vmem:[%s9 + $0x30] sm:$0xff]
        %v879 = vld [vmem:[%s9 + $0x38] sm:$0xff]
        %v880 = vld [vmem:[%s9 + $0x40] sm:$0xff]
        %v881 = vld [vmem:[%s9 + $0x48] sm:$0xff]
        %v882 = vld [vmem:[%s9 + $0x50] sm:$0xff]
        %v883 = vld [vmem:[%s9 + $0x58] sm:$0xff]
        %v884 = vld [vmem:[%s9 + $0x60] sm:$0xff]
        %v885 = vld [vmem:[%s9 + $0x68] sm:$0xff]
        %v886 = vld [vmem:[%s9 + $0x70] sm:$0xff]
        %v887 = vld [vmem:[%s9 + $0x78] sm:$0xff]
        %v888 = vld [vmem:[%s9 + $0x80] sm:$0xff]
        %v889 = vld [vmem:[%s9 + $0x88] sm:$0xff]
        %v890 = vld [vmem:[%s9 + $0x90] sm:$0xff]
        %v891 = vld [vmem:[%s9 + $0x98] sm:$0xff]
        %v892 = vld [vmem:[%s9 + $0xa0] sm:$0xff]
        %v893 = vld [vmem:[%s9 + $0xa8] sm:$0xff]
        %v894 = vld [vmem:[%s9 + $0xb0] sm:$0xff]
        %v895 = vld [vmem:[%s9 + $0xb8] sm:$0xff]
        %v896 = vld [vmem:[%s9 + $0xc0] sm:$0xff]
        %v897 = vld [vmem:[%s9 + $0xc8] sm:$0xff]
        %v898 = vld [vmem:[%s9 + $0xd0] sm:$0xff]
        %v899 = vld [vmem:[%s9 + $0xd8] sm:$0xff]
        %v900 = vld [vmem:[%s9 + $0xe0] sm:$0xff]
        %v901 = vld [vmem:[%s9 + $0xe8] sm:$0xff]
        %v902 = vld [vmem:[%s9 + $0xf0] sm:$0xff]
        %v903 = vld [vmem:[%s9 + $0xf8] sm:$0xff]
        %v904 = vld [vmem:[%s9 + $0x100] sm:$0xff]
        %v905 = vld [vmem:[%s9 + $0x108] sm:$0xff]
        %v906 = vld [vmem:[%s9 + $0x110] sm:$0xff]
        %v907 = vld [vmem:[%s9 + $0x118] sm:$0xff]
        %v908 = vld [vmem:[%s9 + $0x120] sm:$0xff]
        %v909 = vld [vmem:[%s9 + $0x128] sm:$0xff]
        %v910 = vld [vmem:[%s9 + $0x130] sm:$0xff]
        %v911 = vld [vmem:[%s9 + $0x138] sm:$0xff]
        %v912 = vld [vmem:[%s9 + $0x140] sm:$0xff]
        %v913 = vld [vmem:[%s9 + $0x148] sm:$0xff]
        %v914 = vld [vmem:[%s9 + $0x150] sm:$0xff]
        %v915 = vld [vmem:[%s9 + $0x158] sm:$0xff]
        %v916 = vld [vmem:[%s9 + $0x160] sm:$0xff]
        %v917 = vld [vmem:[%s9 + $0x168] sm:$0xff]
        %v918 = vld [vmem:[%s9 + $0x170] sm:$0xff]
        %v919 = vld [vmem:[%s9 + $0x178] sm:$0xff]
        %v920 = vld [vmem:[%s9 + $0x180] sm:$0xff]
        %v921 = vld [vmem:[%s9 + $0x188] sm:$0xff]
        %v922 = vld [vmem:[%s9 + $0x190] sm:$0xff]
        %v923 = vld [vmem:[%s9 + $0x198] sm:$0xff]
        %v924 = vld [vmem:[%s9 + $0x1a0] sm:$0xff]
        %v925 = vld [vmem:[%s9 + $0x1a8] sm:$0xff]
        %v926 = vld [vmem:[%s9 + $0x1b0] sm:$0xff]
        %v927 = vld [vmem:[%s9 + $0x1b8] sm:$0xff]
        %v928 = vld [vmem:[%s9 + $0x1c0] sm:$0xff]
        %v929 = vld [vmem:[%s9 + $0x1c8] sm:$0xff]
        %v930 = vld [vmem:[%s9 + $0x1d0] sm:$0xff]
        %v931 = vld [vmem:[%s9 + $0x1d8] sm:$0xff]
        %v932 = vld [vmem:[%s9 + $0x1e0] sm:$0xff]
        %v933 = vld [vmem:[%s9 + $0x1e8] sm:$0xff]
        %v934 = vld [vmem:[%s9 + $0x1f0] sm:$0xff]
        %v935 = vld [vmem:[%s9 + $0x1f8] sm:$0xff]
        %v936 = vld [vmem:[#allocation13] sm:$0xff]
        %v937 = vpack.c.bf16 %v871, %v870
        %v939 = vlaneseq
        %v940 = vshrl.u32 %v939, 7
        %v941 = vsub.s32 0, %v940
        %v942 = vrot.slane %v936, %v941
        %v943 = vlaneseq
        %v944 = vshrl.u32 %v943, 7
        %v945 = vsub.s32 1, %v944
        %v946 = vrot.slane %v936, %v945
        %v947 = vlaneseq
        %v948 = vshrl.u32 %v947, 7
        %v949 = vsub.s32 2, %v948
        %v950 = vrot.slane %v936, %v949
        %v951 = vlaneseq
        %v952 = vshrl.u32 %v951, 7
        %v953 = vsub.s32 3, %v952
        %v954 = vrot.slane %v936, %v953
        %v955 = vlaneseq
        %v956 = vshrl.u32 %v955, 7
        %v957 = vsub.s32 4, %v956
        %v958 = vrot.slane %v936, %v957
        %v959 = vlaneseq
        %v960 = vshrl.u32 %v959, 7
        %v961 = vsub.s32 5, %v960
        %v962 = vrot.slane %v936, %v961
        %v963 = vlaneseq
        %v964 = vshrl.u32 %v963, 7
        %v965 = vsub.s32 6, %v964
        %v966 = vrot.slane %v936, %v965
        %v967 = vlaneseq
        %v968 = vshrl.u32 %v967, 7
        %v969 = vsub.s32 7, %v968
        %v970 = vrot.slane %v936, %v969
        %v1043 = vunpack.c.l.b16 %v872
        %v1044 = vunpack.c.h.b16 %v872
        %v1045 = vunpack.c.l.b16 %v873
        %v1046 = vunpack.c.h.b16 %v873
        %v1047 = vunpack.c.l.b16 %v874
        %v1048 = vunpack.c.h.b16 %v874
        %v1049 = vunpack.c.l.b16 %v875
        %v1050 = vunpack.c.h.b16 %v875
        %v1051 = vunpack.c.l.b16 %v876
        %v1052 = vunpack.c.h.b16 %v876
        %v1053 = vunpack.c.l.b16 %v877
        %v1054 = vunpack.c.h.b16 %v877
        %v1055 = vunpack.c.l.b16 %v878
        %v1056 = vunpack.c.h.b16 %v878
        %v1057 = vunpack.c.l.b16 %v879
        %v1058 = vunpack.c.h.b16 %v879
        %v1059 = vunpack.c.l.b16 %v880
        %v1060 = vunpack.c.h.b16 %v880
        %v1061 = vunpack.c.l.b16 %v881
        %v1062 = vunpack.c.h.b16 %v881
        %v1063 = vunpack.c.l.b16 %v882
        %v1064 = vunpack.c.h.b16 %v882
        %v1065 = vunpack.c.l.b16 %v883
        %v1066 = vunpack.c.h.b16 %v883
        %v1067 = vunpack.c.l.b16 %v884
        %v1068 = vunpack.c.h.b16 %v884
        %v1069 = vunpack.c.l.b16 %v885
        %v1070 = vunpack.c.h.b16 %v885
        %v1071 = vunpack.c.l.b16 %v886
        %v1072 = vunpack.c.h.b16 %v886
        %v1073 = vunpack.c.l.b16 %v887
        %v1074 = vunpack.c.h.b16 %v887
        %v1075 = vunpack.c.l.b16 %v888
        %v1076 = vunpack.c.h.b16 %v888
        %v1077 = vunpack.c.l.b16 %v889
        %v1078 = vunpack.c.h.b16 %v889
        %v1079 = vunpack.c.l.b16 %v890
        %v1080 = vunpack.c.h.b16 %v890
        %v1081 = vunpack.c.l.b16 %v891
        %v1082 = vunpack.c.h.b16 %v891
        %v1083 = vunpack.c.l.b16 %v892
        %v1084 = vunpack.c.h.b16 %v892
        %v1085 = vunpack.c.l.b16 %v893
        %v1086 = vunpack.c.h.b16 %v893
        %v1087 = vunpack.c.l.b16 %v894
        %v1088 = vunpack.c.h.b16 %v894
        %v1089 = vunpack.c.l.b16 %v895
        %v1090 = vunpack.c.h.b16 %v895
        %v1091 = vunpack.c.l.b16 %v896
        %v1092 = vunpack.c.h.b16 %v896
        %v1093 = vunpack.c.l.b16 %v897
        %v1094 = vunpack.c.h.b16 %v897
        %v1095 = vunpack.c.l.b16 %v898
        %v1096 = vunpack.c.h.b16 %v898
        %v1097 = vunpack.c.l.b16 %v899
        %v1098 = vunpack.c.h.b16 %v899
        %v1099 = vunpack.c.l.b16 %v900
        %v1100 = vunpack.c.h.b16 %v900
        %v1101 = vunpack.c.l.b16 %v901
        %v1102 = vunpack.c.h.b16 %v901
        %v1103 = vunpack.c.l.b16 %v902
        %v1104 = vunpack.c.h.b16 %v902
        %v1105 = vunpack.c.l.b16 %v903
        %v1106 = vunpack.c.h.b16 %v903
        %v1107 = vunpack.c.l.b16 %v904
        %v1108 = vunpack.c.h.b16 %v904
        %v1109 = vunpack.c.l.b16 %v905
        %v1110 = vunpack.c.h.b16 %v905
        %v1111 = vunpack.c.l.b16 %v906
        %v1112 = vunpack.c.h.b16 %v906
        %v1113 = vunpack.c.l.b16 %v907
        %v1114 = vunpack.c.h.b16 %v907
        %v1115 = vunpack.c.l.b16 %v908
        %v1116 = vunpack.c.h.b16 %v908
        %v1117 = vunpack.c.l.b16 %v909
        %v1118 = vunpack.c.h.b16 %v909
        %v1119 = vunpack.c.l.b16 %v910
        %v1120 = vunpack.c.h.b16 %v910
        %v1121 = vunpack.c.l.b16 %v911
        %v1122 = vunpack.c.h.b16 %v911
        %v1123 = vunpack.c.l.b16 %v912
        %v1124 = vunpack.c.h.b16 %v912
        %v1125 = vunpack.c.l.b16 %v913
        %v1126 = vunpack.c.h.b16 %v913
        %v1127 = vunpack.c.l.b16 %v914
        %v1128 = vunpack.c.h.b16 %v914
        %v1129 = vunpack.c.l.b16 %v915
        %v1130 = vunpack.c.h.b16 %v915
        %v1131 = vunpack.c.l.b16 %v916
        %v1132 = vunpack.c.h.b16 %v916
        %v1133 = vunpack.c.l.b16 %v917
        %v1134 = vunpack.c.h.b16 %v917
        %v1135 = vunpack.c.l.b16 %v918
        %v1136 = vunpack.c.h.b16 %v918
        %v1137 = vunpack.c.l.b16 %v919
        %v1138 = vunpack.c.h.b16 %v919
        %v1139 = vunpack.c.l.b16 %v920
        %v1140 = vunpack.c.h.b16 %v920
        %v1141 = vunpack.c.l.b16 %v921
        %v1142 = vunpack.c.h.b16 %v921
        %v1143 = vunpack.c.l.b16 %v922
        %v1144 = vunpack.c.h.b16 %v922
        %v1145 = vunpack.c.l.b16 %v923
        %v1146 = vunpack.c.h.b16 %v923
        %v1147 = vunpack.c.l.b16 %v924
        %v1148 = vunpack.c.h.b16 %v924
        %v1149 = vunpack.c.l.b16 %v925
        %v1150 = vunpack.c.h.b16 %v925
        %v1151 = vunpack.c.l.b16 %v926
        %v1152 = vunpack.c.h.b16 %v926
        %v1153 = vunpack.c.l.b16 %v927
        %v1154 = vunpack.c.h.b16 %v927
        %v1155 = vunpack.c.l.b16 %v928
        %v1156 = vunpack.c.h.b16 %v928
        %v1157 = vunpack.c.l.b16 %v929
        %v1158 = vunpack.c.h.b16 %v929
        %v1159 = vunpack.c.l.b16 %v930
        %v1160 = vunpack.c.h.b16 %v930
        %v1161 = vunpack.c.l.b16 %v931
        %v1162 = vunpack.c.h.b16 %v931
        %v1163 = vunpack.c.l.b16 %v932
        %v1164 = vunpack.c.h.b16 %v932
        %v1165 = vunpack.c.l.b16 %v933
        %v1166 = vunpack.c.h.b16 %v933
        %v1167 = vunpack.c.l.b16 %v934
        %v1168 = vunpack.c.h.b16 %v934
        %v1169 = vunpack.c.l.b16 %v935
        %v1170 = vunpack.c.h.b16 %v935
        %v1171 = vpack.c.b16 %v1051, %v1043
        %v1172 = vpack.c.b16 %v1052, %v1044
        %v1173 = vpack.c.b16 %v1053, %v1045
        %v1174 = vpack.c.b16 %v1054, %v1046
        %v1175 = vpack.c.b16 %v1055, %v1047
        %v1176 = vpack.c.b16 %v1056, %v1048
        %v1177 = vpack.c.b16 %v1057, %v1049
        %v1178 = vpack.c.b16 %v1058, %v1050
        %v1179 = vpack.c.b16 %v1067, %v1059
        %v1180 = vpack.c.b16 %v1068, %v1060
        %v1181 = vpack.c.b16 %v1069, %v1061
        %v1182 = vpack.c.b16 %v1070, %v1062
        %v1183 = vpack.c.b16 %v1071, %v1063
        %v1184 = vpack.c.b16 %v1072, %v1064
        %v1185 = vpack.c.b16 %v1073, %v1065
        %v1186 = vpack.c.b16 %v1074, %v1066
        %v1187 = vpack.c.b16 %v1083, %v1075
        %v1188 = vpack.c.b16 %v1084, %v1076
        %v1189 = vpack.c.b16 %v1085, %v1077
        %v1190 = vpack.c.b16 %v1086, %v1078
        %v1191 = vpack.c.b16 %v1087, %v1079
        %v1192 = vpack.c.b16 %v1088, %v1080
        %v1193 = vpack.c.b16 %v1089, %v1081
        %v1194 = vpack.c.b16 %v1090, %v1082
        %v1195 = vpack.c.b16 %v1099, %v1091
        %v1196 = vpack.c.b16 %v1100, %v1092
        %v1197 = vpack.c.b16 %v1101, %v1093
        %v1198 = vpack.c.b16 %v1102, %v1094
        %v1199 = vpack.c.b16 %v1103, %v1095
        %v1200 = vpack.c.b16 %v1104, %v1096
        %v1201 = vpack.c.b16 %v1105, %v1097
        %v1202 = vpack.c.b16 %v1106, %v1098
        %v1203 = vpack.c.b16 %v1115, %v1107
        %v1204 = vpack.c.b16 %v1116, %v1108
        %v1205 = vpack.c.b16 %v1117, %v1109
        %v1206 = vpack.c.b16 %v1118, %v1110
        %v1207 = vpack.c.b16 %v1119, %v1111
        %v1208 = vpack.c.b16 %v1120, %v1112
        %v1209 = vpack.c.b16 %v1121, %v1113
        %v1210 = vpack.c.b16 %v1122, %v1114
        %v1211 = vpack.c.b16 %v1131, %v1123
        %v1212 = vpack.c.b16 %v1132, %v1124
        %v1213 = vpack.c.b16 %v1133, %v1125
        %v1214 = vpack.c.b16 %v1134, %v1126
        %v1215 = vpack.c.b16 %v1135, %v1127
        %v1216 = vpack.c.b16 %v1136, %v1128
        %v1217 = vpack.c.b16 %v1137, %v1129
        %v1218 = vpack.c.b16 %v1138, %v1130
        %v1219 = vpack.c.b16 %v1147, %v1139
        %v1220 = vpack.c.b16 %v1148, %v1140
        %v1221 = vpack.c.b16 %v1149, %v1141
        %v1222 = vpack.c.b16 %v1150, %v1142
        %v1223 = vpack.c.b16 %v1151, %v1143
        %v1224 = vpack.c.b16 %v1152, %v1144
        %v1225 = vpack.c.b16 %v1153, %v1145
        %v1226 = vpack.c.b16 %v1154, %v1146
        %v1227 = vpack.c.b16 %v1163, %v1155
        %v1228 = vpack.c.b16 %v1164, %v1156
        %v1229 = vpack.c.b16 %v1165, %v1157
        %v1230 = vpack.c.b16 %v1166, %v1158
        %v1231 = vpack.c.b16 %v1167, %v1159
        %v1232 = vpack.c.b16 %v1168, %v1160
        %v1233 = vpack.c.b16 %v1169, %v1161
        %v1234 = vpack.c.b16 %v1170, %v1162
        %1299 = vmatprep.subr.bf16.mxu0 %v1228
        %1300 = vmatpush1.bf16.msra.mxu0 %v1227
        %1301 = vmatprep.subr.bf16.mxu0 %v1220
        %1302 = vmatpush1.bf16.msra.mxu0 %v1219
        %1303 = vmatprep.subr.bf16.mxu0 %v1212
        %1304 = vmatpush1.bf16.msra.mxu0 %v1211
        %1305 = vmatprep.subr.bf16.mxu0 %v1204
        %1306 = vmatpush1.bf16.msra.mxu0 %v1203
        %1307 = vmatprep.subr.bf16.mxu0 %v1196
        %1308 = vmatpush1.bf16.msra.mxu0 %v1195
        %1309 = vmatprep.subr.bf16.mxu0 %v1188
        %1310 = vmatpush1.bf16.msra.mxu0 %v1187
        %1311 = vmatprep.subr.bf16.mxu0 %v1180
        %1312 = vmatpush1.bf16.msra.mxu0 %v1179
        %1313 = vmatprep.subr.bf16.mxu0 %v1172
        %1314 = vmatpush1.bf16.msra.mxu0 %v1171
        %1315 = vmatprep.subr.bf16.mxu0 0
        %1316 = vmatpush2.bf16.msra.mxu0 0
        %1317 = vmatprep.subr.bf16.mxu0 0
        %1318 = vmatpush2.bf16.msra.mxu0 0
        %1319 = vmatprep.subr.bf16.mxu0 0
        %1320 = vmatpush2.bf16.msra.mxu0 0
        %1321 = vmatprep.subr.bf16.mxu0 0
        %1322 = vmatpush2.bf16.msra.mxu0 0
        %1323 = vmatprep.subr.bf16.mxu0 0
        %1324 = vmatpush2.bf16.msra.mxu0 0
        %1325 = vmatprep.subr.bf16.mxu0 0
        %1326 = vmatpush2.bf16.msra.mxu0 0
        %1327 = vmatprep.subr.bf16.mxu0 0
        %1328 = vmatpush2.bf16.msra.mxu0 0
        %1329 = vmatprep.subr.bf16.mxu0 0
        %1330 = vmatpush2.bf16.msra.mxu0 0
        %1331 = vmatprep.mubr.bf16.mxu0 0
        %1332 = vmatmul.mubr.bf16.gmra.mxu0 %v937
        %v1333 = vpop.f32.mrf.mxu0
        %v1334 = vadd.f32 %v942, %v1333
        %v1335 = vpop.f32.mrf.mxu0
        %v1336 = vadd.f32 %v946, %v1335
        %v1337 = vpop.f32.mrf.mxu0
        %v1338 = vadd.f32 %v942, %v1337
        %v1339 = vpop.f32.mrf.mxu0
        %v1340 = vadd.f32 %v946, %v1339
        %1341 = vdwg.mxu0
        %1342 = vmatprep.subr.bf16.mxu0 %v1230
        %1343 = vmatpush1.bf16.msra.mxu0 %v1229
        %1344 = vmatprep.subr.bf16.mxu0 %v1222
        %1345 = vmatpush1.bf16.msra.mxu0 %v1221
        %1346 = vmatprep.subr.bf16.mxu0 %v1214
        %1347 = vmatpush1.bf16.msra.mxu0 %v1213
        %1348 = vmatprep.subr.bf16.mxu0 %v1206
        %1349 = vmatpush1.bf16.msra.mxu0 %v1205
        %1350 = vmatprep.subr.bf16.mxu0 %v1198
        %1351 = vmatpush1.bf16.msra.mxu0 %v1197
        %1352 = vmatprep.subr.bf16.mxu0 %v1190
        %1353 = vmatpush1.bf16.msra.mxu0 %v1189
        %1354 = vmatprep.subr.bf16.mxu0 %v1182
        %1355 = vmatpush1.bf16.msra.mxu0 %v1181
        %1356 = vmatprep.subr.bf16.mxu0 %v1174
        %1357 = vmatpush1.bf16.msra.mxu0 %v1173
        %1358 = vmatprep.subr.bf16.mxu0 0
        %1359 = vmatpush2.bf16.msra.mxu0 0
        %1360 = vmatprep.subr.bf16.mxu0 0
        %1361 = vmatpush2.bf16.msra.mxu0 0
        %1362 = vmatprep.subr.bf16.mxu0 0
        %1363 = vmatpush2.bf16.msra.mxu0 0
        %1364 = vmatprep.subr.bf16.mxu0 0
        %1365 = vmatpush2.bf16.msra.mxu0 0
        %1366 = vmatprep.subr.bf16.mxu0 0
        %1367 = vmatpush2.bf16.msra.mxu0 0
        %1368 = vmatprep.subr.bf16.mxu0 0
        %1369 = vmatpush2.bf16.msra.mxu0 0
        %1370 = vmatprep.subr.bf16.mxu0 0
        %1371 = vmatpush2.bf16.msra.mxu0 0
        %1372 = vmatprep.subr.bf16.mxu0 0
        %1373 = vmatpush2.bf16.msra.mxu0 0
        %1374 = vmatprep.mubr.bf16.mxu0 0
        %1375 = vmatmul.mubr.bf16.gmra.mxu0 %v937
        %v1376 = vpop.f32.mrf.mxu0
        %v1377 = vadd.f32 %v950, %v1376
        %v1378 = vpop.f32.mrf.mxu0
        %v1379 = vadd.f32 %v954, %v1378
        %v1380 = vpop.f32.mrf.mxu0
        %v1381 = vadd.f32 %v950, %v1380
        %v1382 = vpop.f32.mrf.mxu0
        %v1383 = vadd.f32 %v954, %v1382
        %1384 = vdwg.mxu0
        %1385 = vmatprep.subr.bf16.mxu0 %v1232
        %1386 = vmatpush1.bf16.msra.mxu0 %v1231
        %1387 = vmatprep.subr.bf16.mxu0 %v1224
        %1388 = vmatpush1.bf16.msra.mxu0 %v1223
        %1389 = vmatprep.subr.bf16.mxu0 %v1216
        %1390 = vmatpush1.bf16.msra.mxu0 %v1215
        %1391 = vmatprep.subr.bf16.mxu0 %v1208
        %1392 = vmatpush1.bf16.msra.mxu0 %v1207
        %1393 = vmatprep.subr.bf16.mxu0 %v1200
        %1394 = vmatpush1.bf16.msra.mxu0 %v1199
        %1395 = vmatprep.subr.bf16.mxu0 %v1192
        %1396 = vmatpush1.bf16.msra.mxu0 %v1191
        %1397 = vmatprep.subr.bf16.mxu0 %v1184
        %1398 = vmatpush1.bf16.msra.mxu0 %v1183
        %1399 = vmatprep.subr.bf16.mxu0 %v1176
        %1400 = vmatpush1.bf16.msra.mxu0 %v1175
        %1401 = vmatprep.subr.bf16.mxu0 0
        %1402 = vmatpush2.bf16.msra.mxu0 0
        %1403 = vmatprep.subr.bf16.mxu0 0
        %1404 = vmatpush2.bf16.msra.mxu0 0
        %1405 = vmatprep.subr.bf16.mxu0 0
        %1406 = vmatpush2.bf16.msra.mxu0 0
        %1407 = vmatprep.subr.bf16.mxu0 0
        %1408 = vmatpush2.bf16.msra.mxu0 0
        %1409 = vmatprep.subr.bf16.mxu0 0
        %1410 = vmatpush2.bf16.msra.mxu0 0
        %1411 = vmatprep.subr.bf16.mxu0 0
        %1412 = vmatpush2.bf16.msra.mxu0 0
        %1413 = vmatprep.subr.bf16.mxu0 0
        %1414 = vmatpush2.bf16.msra.mxu0 0
        %1415 = vmatprep.subr.bf16.mxu0 0
        %1416 = vmatpush2.bf16.msra.mxu0 0
        %1417 = vmatprep.mubr.bf16.mxu0 0
        %1418 = vmatmul.mubr.bf16.gmra.mxu0 %v937
        %v1419 = vpop.f32.mrf.mxu0
        %v1420 = vadd.f32 %v958, %v1419
        %v1421 = vpop.f32.mrf.mxu0
        %v1422 = vadd.f32 %v962, %v1421
        %v1423 = vpop.f32.mrf.mxu0
        %v1424 = vadd.f32 %v958, %v1423
        %v1425 = vpop.f32.mrf.mxu0
        %v1426 = vadd.f32 %v962, %v1425
        %1427 = vdwg.mxu0
        %1428 = vmatprep.subr.bf16.mxu0 %v1234
        %1429 = vmatpush1.bf16.msra.mxu0 %v1233
        %1430 = vmatprep.subr.bf16.mxu0 %v1226
        %1431 = vmatpush1.bf16.msra.mxu0 %v1225
        %1432 = vmatprep.subr.bf16.mxu0 %v1218
        %1433 = vmatpush1.bf16.msra.mxu0 %v1217
        %1434 = vmatprep.subr.bf16.mxu0 %v1210
        %1435 = vmatpush1.bf16.msra.mxu0 %v1209
        %1436 = vmatprep.subr.bf16.mxu0 %v1202
        %1437 = vmatpush1.bf16.msra.mxu0 %v1201
        %1438 = vmatprep.subr.bf16.mxu0 %v1194
        %1439 = vmatpush1.bf16.msra.mxu0 %v1193
        %1440 = vmatprep.subr.bf16.mxu0 %v1186
        %1441 = vmatpush1.bf16.msra.mxu0 %v1185
        %1442 = vmatprep.subr.bf16.mxu0 %v1178
        %1443 = vmatpush1.bf16.msra.mxu0 %v1177
        %1444 = vmatprep.subr.bf16.mxu0 0
        %1445 = vmatpush2.bf16.msra.mxu0 0
        %1446 = vmatprep.subr.bf16.mxu0 0
        %1447 = vmatpush2.bf16.msra.mxu0 0
        %1448 = vmatprep.subr.bf16.mxu0 0
        %1449 = vmatpush2.bf16.msra.mxu0 0
        %1450 = vmatprep.subr.bf16.mxu0 0
        %1451 = vmatpush2.bf16.msra.mxu0 0
        %1452 = vmatprep.subr.bf16.mxu0 0
        %1453 = vmatpush2.bf16.msra.mxu0 0
        %1454 = vmatprep.subr.bf16.mxu0 0
        %1455 = vmatpush2.bf16.msra.mxu0 0
        %1456 = vmatprep.subr.bf16.mxu0 0
        %1457 = vmatpush2.bf16.msra.mxu0 0
        %1458 = vmatprep.subr.bf16.mxu0 0
        %1459 = vmatpush2.bf16.msra.mxu0 0
        %1460 = vmatprep.mubr.bf16.mxu0 0
        %1461 = vmatmul.mubr.bf16.gmra.mxu0 %v937
        %v1462 = vpop.f32.mrf.mxu0
        %v1463 = vadd.f32 %v966, %v1462
        %v1464 = vpop.f32.mrf.mxu0
        %v1465 = vadd.f32 %v970, %v1464
        %v1466 = vpop.f32.mrf.mxu0
        %v1467 = vadd.f32 %v966, %v1466
        %v1468 = vpop.f32.mrf.mxu0
        %v1469 = vadd.f32 %v970, %v1468
        %1470 = vdwg.mxu0
        %v1471 = vld [vmem:[#allocation15] sm:$0xff]
        %v1472 = vld [vmem:[#allocation16] sm:$0xff]
        %v1473 = vadd.f32 %v1334, %v1336
        %v1474 = vadd.f32 %v1473, %v1377
        %v1475 = vadd.f32 %v1474, %v1379
        %v1476 = vadd.f32 %v1475, %v1420
        %v1477 = vadd.f32 %v1476, %v1422
        %v1478 = vadd.f32 %v1477, %v1463
        %v1479 = vadd.f32 %v1478, %v1465
        %1480 = vadd.xlane.f32.xlu0 %v1479
        %v1481 = vpop.xlane.xlu0 %1480
        %v1482 = vadd.f32 %v1338, %v1340
        %v1483 = vadd.f32 %v1482, %v1381
        %v1484 = vadd.f32 %v1483, %v1383
        %v1485 = vadd.f32 %v1484, %v1424
        %v1486 = vadd.f32 %v1485, %v1426
        %v1487 = vadd.f32 %v1486, %v1467
        %v1488 = vadd.f32 %v1487, %v1469
        %1489 = vadd.xlane.f32.xlu0 %v1488
        %v1490 = vpop.xlane.xlu0 %1489
        %v1491 = vrcp.pop 1024.0
        %v1492 = vmul.f32 %v1481, %v1491
        %v1493 = vmul.f32 %v1490, %v1491
        %v1494 = vmul.f32 %v1334, %v1334
        %v1495 = vmul.f32 %v1336, %v1336
        %v1496 = vmul.f32 %v1377, %v1377
        %v1497 = vmul.f32 %v1379, %v1379
        %v1498 = vmul.f32 %v1420, %v1420
        %v1499 = vmul.f32 %v1422, %v1422
        %v1500 = vmul.f32 %v1463, %v1463
        %v1501 = vmul.f32 %v1465, %v1465
        %v1502 = vmul.f32 %v1338, %v1338
        %v1503 = vmul.f32 %v1340, %v1340
        %v1504 = vmul.f32 %v1381, %v1381
        %v1505 = vmul.f32 %v1383, %v1383
        %v1506 = vmul.f32 %v1424, %v1424
        %v1507 = vmul.f32 %v1426, %v1426
        %v1508 = vmul.f32 %v1467, %v1467
        %v1509 = vmul.f32 %v1469, %v1469
        %v1510 = vadd.f32 %v1494, %v1495
        %v1511 = vadd.f32 %v1510, %v1496
        %v1512 = vadd.f32 %v1511, %v1497
        %v1513 = vadd.f32 %v1512, %v1498
        %v1514 = vadd.f32 %v1513, %v1499
        %v1515 = vadd.f32 %v1514, %v1500
        %v1516 = vadd.f32 %v1515, %v1501
        %1517 = vadd.xlane.f32.xlu0 %v1516
        %v1518 = vpop.xlane.xlu0 %1517
        %v1519 = vadd.f32 %v1502, %v1503
        %v1520 = vadd.f32 %v1519, %v1504
        %v1521 = vadd.f32 %v1520, %v1505
        %v1522 = vadd.f32 %v1521, %v1506
        %v1523 = vadd.f32 %v1522, %v1507
        %v1524 = vadd.f32 %v1523, %v1508
        %v1525 = vadd.f32 %v1524, %v1509
        %1526 = vadd.xlane.f32.xlu0 %v1525
        %v1527 = vpop.xlane.xlu0 %1526
        %v1528 = vmul.f32 %v1518, %v1491
        %v1529 = vmul.f32 %v1527, %v1491
        %v1530 = vmul.f32 %v1492, %v1492
        %v1531 = vmul.f32 %v1493, %v1493
        %v1532 = vsub.f32 %v1528, %v1530
        %v1533 = vsub.f32 %v1529, %v1531
        %v1534 = vmax.f32 %v1532, 0.0
        %v1535 = vmax.f32 %v1533, 0.0
        %v1536 = vsub.f32 %v1334, %v1492
        %v1537 = vsub.f32 %v1336, %v1492
        %v1538 = vsub.f32 %v1377, %v1492
        %v1539 = vsub.f32 %v1379, %v1492
        %v1540 = vsub.f32 %v1420, %v1492
        %v1541 = vsub.f32 %v1422, %v1492
        %v1542 = vsub.f32 %v1463, %v1492
        %v1543 = vsub.f32 %v1465, %v1492
        %v1544 = vsub.f32 %v1338, %v1493
        %v1545 = vsub.f32 %v1340, %v1493
        %v1546 = vsub.f32 %v1381, %v1493
        %v1547 = vsub.f32 %v1383, %v1493
        %v1548 = vsub.f32 %v1424, %v1493
        %v1549 = vsub.f32 %v1426, %v1493
        %v1550 = vsub.f32 %v1467, %v1493
        %v1551 = vsub.f32 %v1469, %v1493
        %v1552 = vadd.f32 %v1534, 1e-05
        %v1553 = vadd.f32 %v1535, 1e-05
        %v1554 = vrsqrt.pop %v1552
        %v1555 = vrsqrt.pop %v1553
        %v1556 = vmul.f32 %v1536, %v1554
        %v1557 = vmul.f32 %v1537, %v1554
        %v1558 = vmul.f32 %v1538, %v1554
        %v1559 = vmul.f32 %v1539, %v1554
        %v1560 = vmul.f32 %v1540, %v1554
        %v1561 = vmul.f32 %v1541, %v1554
        %v1562 = vmul.f32 %v1542, %v1554
        %v1563 = vmul.f32 %v1543, %v1554
        %v1564 = vmul.f32 %v1544, %v1555
        %v1565 = vmul.f32 %v1545, %v1555
        %v1566 = vmul.f32 %v1546, %v1555
        %v1567 = vmul.f32 %v1547, %v1555
        %v1568 = vmul.f32 %v1548, %v1555
        %v1569 = vmul.f32 %v1549, %v1555
        %v1570 = vmul.f32 %v1550, %v1555
        %v1571 = vmul.f32 %v1551, %v1555
        %v1573 = vlaneseq
        %v1574 = vshrl.u32 %v1573, 7
        %v1575 = vsub.s32 0, %v1574
        %v1576 = vrot.slane %v1471, %v1575
        %v1577 = vlaneseq
        %v1578 = vshrl.u32 %v1577, 7
        %v1579 = vsub.s32 1, %v1578
        %v1580 = vrot.slane %v1471, %v1579
        %v1581 = vlaneseq
        %v1582 = vshrl.u32 %v1581, 7
        %v1583 = vsub.s32 2, %v1582
        %v1584 = vrot.slane %v1471, %v1583
        %v1585 = vlaneseq
        %v1586 = vshrl.u32 %v1585, 7
        %v1587 = vsub.s32 3, %v1586
        %v1588 = vrot.slane %v1471, %v1587
        %v1589 = vlaneseq
        %v1590 = vshrl.u32 %v1589, 7
        %v1591 = vsub.s32 4, %v1590
        %v1592 = vrot.slane %v1471, %v1591
        %v1593 = vlaneseq
        %v1594 = vshrl.u32 %v1593, 7
        %v1595 = vsub.s32 5, %v1594
        %v1596 = vrot.slane %v1471, %v1595
        %v1597 = vlaneseq
        %v1598 = vshrl.u32 %v1597, 7
        %v1599 = vsub.s32 6, %v1598
        %v1600 = vrot.slane %v1471, %v1599
        %v1601 = vlaneseq
        %v1602 = vshrl.u32 %v1601, 7
        %v1603 = vsub.s32 7, %v1602
        %v1604 = vrot.slane %v1471, %v1603
        %v1613 = vmul.f32 %v1556, %v1576
        %v1614 = vmul.f32 %v1557, %v1580
        %v1615 = vmul.f32 %v1558, %v1584
        %v1616 = vmul.f32 %v1559, %v1588
        %v1617 = vmul.f32 %v1560, %v1592
        %v1618 = vmul.f32 %v1561, %v1596
        %v1619 = vmul.f32 %v1562, %v1600
        %v1620 = vmul.f32 %v1563, %v1604
        %v1621 = vmul.f32 %v1564, %v1576
        %v1622 = vmul.f32 %v1565, %v1580
        %v1623 = vmul.f32 %v1566, %v1584
        %v1624 = vmul.f32 %v1567, %v1588
        %v1625 = vmul.f32 %v1568, %v1592
        %v1626 = vmul.f32 %v1569, %v1596
        %v1627 = vmul.f32 %v1570, %v1600
        %v1628 = vmul.f32 %v1571, %v1604
        %v1630 = vlaneseq
        %v1631 = vshrl.u32 %v1630, 7
        %v1632 = vsub.s32 0, %v1631
        %v1633 = vrot.slane %v1472, %v1632
        %v1634 = vlaneseq
        %v1635 = vshrl.u32 %v1634, 7
        %v1636 = vsub.s32 1, %v1635
        %v1637 = vrot.slane %v1472, %v1636
        %v1638 = vlaneseq
        %v1639 = vshrl.u32 %v1638, 7
        %v1640 = vsub.s32 2, %v1639
        %v1641 = vrot.slane %v1472, %v1640
        %v1642 = vlaneseq
        %v1643 = vshrl.u32 %v1642, 7
        %v1644 = vsub.s32 3, %v1643
        %v1645 = vrot.slane %v1472, %v1644
        %v1646 = vlaneseq
        %v1647 = vshrl.u32 %v1646, 7
        %v1648 = vsub.s32 4, %v1647
        %v1649 = vrot.slane %v1472, %v1648
        %v1650 = vlaneseq
        %v1651 = vshrl.u32 %v1650, 7
        %v1652 = vsub.s32 5, %v1651
        %v1653 = vrot.slane %v1472, %v1652
        %v1654 = vlaneseq
        %v1655 = vshrl.u32 %v1654, 7
        %v1656 = vsub.s32 6, %v1655
        %v1657 = vrot.slane %v1472, %v1656
        %v1658 = vlaneseq
        %v1659 = vshrl.u32 %v1658, 7
        %v1660 = vsub.s32 7, %v1659
        %v1661 = vrot.slane %v1472, %v1660
        %v1670 = vadd.f32 %v1613, %v1633
        %v1671 = vadd.f32 %v1614, %v1637
        %v1672 = vadd.f32 %v1615, %v1641
        %v1673 = vadd.f32 %v1616, %v1645
        %v1674 = vadd.f32 %v1617, %v1649
        %v1675 = vadd.f32 %v1618, %v1653
        %v1676 = vadd.f32 %v1619, %v1657
        %v1677 = vadd.f32 %v1620, %v1661
        %v1678 = vadd.f32 %v1621, %v1633
        %v1679 = vadd.f32 %v1622, %v1637
        %v1680 = vadd.f32 %v1623, %v1641
        %v1681 = vadd.f32 %v1624, %v1645
        %v1682 = vadd.f32 %v1625, %v1649
        %v1683 = vadd.f32 %v1626, %v1653
        %v1684 = vadd.f32 %v1627, %v1657
        %v1685 = vadd.f32 %v1628, %v1661
        %v1686 = vmax.f32 %v1670, %v1678
        %v1687 = vrot.slane %v1686, 4
        %v1688 = vmax.f32 %v1686, %v1687
        %v1689 = vrot.slane %v1688, 2
        %v1690 = vmax.f32 %v1688, %v1689
        %v1691 = vrot.slane %v1690, 1
        %v1692 = vmax.f32 %v1690, %v1691
        %v1693 = vmax.f32 %v1671, %v1679
        %v1694 = vrot.slane %v1693, 4
        %v1695 = vmax.f32 %v1693, %v1694
        %v1696 = vrot.slane %v1695, 2
        %v1697 = vmax.f32 %v1695, %v1696
        %v1698 = vrot.slane %v1697, 1
        %v1699 = vmax.f32 %v1697, %v1698
        %v1700 = vmax.f32 %v1672, %v1680
        %v1701 = vrot.slane %v1700, 4
        %v1702 = vmax.f32 %v1700, %v1701
        %v1703 = vrot.slane %v1702, 2
        %v1704 = vmax.f32 %v1702, %v1703
        %v1705 = vrot.slane %v1704, 1
        %v1706 = vmax.f32 %v1704, %v1705
        %v1707 = vmax.f32 %v1673, %v1681
        %v1708 = vrot.slane %v1707, 4
        %v1709 = vmax.f32 %v1707, %v1708
        %v1710 = vrot.slane %v1709, 2
        %v1711 = vmax.f32 %v1709, %v1710
        %v1712 = vrot.slane %v1711, 1
        %v1713 = vmax.f32 %v1711, %v1712
        %v1714 = vmax.f32 %v1674, %v1682
        %v1715 = vrot.slane %v1714, 4
        %v1716 = vmax.f32 %v1714, %v1715
        %v1717 = vrot.slane %v1716, 2
        %v1718 = vmax.f32 %v1716, %v1717
        %v1719 = vrot.slane %v1718, 1
        %v1720 = vmax.f32 %v1718, %v1719
        %v1721 = vmax.f32 %v1675, %v1683
        %v1722 = vrot.slane %v1721, 4
        %v1723 = vmax.f32 %v1721, %v1722
        %v1724 = vrot.slane %v1723, 2
        %v1725 = vmax.f32 %v1723, %v1724
        %v1726 = vrot.slane %v1725, 1
        %v1727 = vmax.f32 %v1725, %v1726
        %v1728 = vmax.f32 %v1676, %v1684
        %v1729 = vrot.slane %v1728, 4
        %v1730 = vmax.f32 %v1728, %v1729
        %v1731 = vrot.slane %v1730, 2
        %v1732 = vmax.f32 %v1730, %v1731
        %v1733 = vrot.slane %v1732, 1
        %v1734 = vmax.f32 %v1732, %v1733
        %v1735 = vmax.f32 %v1677, %v1685
        %v1736 = vrot.slane %v1735, 4
        %v1737 = vmax.f32 %v1735, %v1736
        %v1738 = vrot.slane %v1737, 2
        %v1739 = vmax.f32 %v1737, %v1738
        %v1740 = vrot.slane %v1739, 1
        %v1741 = vmax.f32 %v1739, %v1740
        %p1742 = scmp.eq.s32.totalorder %s37, 0
        // Predicated region
        $region113: #{pointnet_feat.2} parent=71 // pred_check
          %p1743 = pneg %p1742
        $region114: #{pointnet_feat.2} parent=71 // pred_check_branch
          %1745 = sbr.rel (%p1743) target = $region116
        $region115: #{pointnet_feat.2} parent=71 // pred_region
          %v1754 = vcombine.low %v1692, %v1699
          %v1755 = vcombine.low %v1706, %v1713
          %v1756 = vcombine.low %v1720, %v1727
          %v1757 = vcombine.low %v1734, %v1741
          %v1759 = vunpack.c.l.s4 1966171168
          %v1760 = vunpack.c.0.s8 %v1759
          %v1761 = vlaneseq
          %v1762 = vshrl.u32 %v1761, 7
          %v1763 = vsub.s32 %v1760, %v1762
          %v1764 = vrot.slane %v1754, %v1763
          %v1766 = vunpack.c.l.s4 1966171168
          %v1767 = vunpack.c.0.s8 %v1766
          %v1768 = vlaneseq
          %v1769 = vshrl.u32 %v1768, 7
          %v1770 = vsub.s32 %v1767, %v1769
          %v1771 = vrot.slane %v1755, %v1770
          %v1773 = vunpack.c.l.s4 1966171168
          %v1774 = vunpack.c.0.s8 %v1773
          %v1775 = vlaneseq
          %v1776 = vshrl.u32 %v1775, 7
          %v1777 = vsub.s32 %v1774, %v1776
          %v1778 = vrot.slane %v1756, %v1777
          %v1780 = vunpack.c.l.s4 1966171168
          %v1781 = vunpack.c.0.s8 %v1780
          %v1782 = vlaneseq
          %v1783 = vshrl.u32 %v1782, 7
          %v1784 = vsub.s32 %v1781, %v1783
          %v1785 = vrot.slane %v1757, %v1784
          %v1786 = vcombine.low %v1764, %v1771
          %v1787 = vcombine.low %v1778, %v1785
          %v1789 = vunpack.c.l.s4 1966171168
          %v1790 = vunpack.c.0.s8 %v1789
          %v1791 = vlaneseq
          %v1792 = vshrl.u32 %v1791, 7
          %v1793 = vsub.s32 %v1790, %v1792
          %v1794 = vrot.slane %v1786, %v1793
          %v1796 = vunpack.c.l.s4 1966171168
          %v1797 = vunpack.c.0.s8 %v1796
          %v1798 = vlaneseq
          %v1799 = vshrl.u32 %v1798, 7
          %v1800 = vsub.s32 %v1797, %v1799
          %v1801 = vrot.slane %v1787, %v1800
          %v1802 = vcombine.low %v1794, %v1801
          %1804 = vst [vmem:[%s623] sm:$0xff] %v1802
        $region116: #{pointnet_feat.2} parent=71 // pred_fallthru
          _
        %p1805 = scmp.gt.s32.totalorder %s37, 0
        // Predicated region
        $region117: #{pointnet_feat.2} parent=71 // pred_check
          %p1806 = pneg %p1805
        $region118: #{pointnet_feat.2} parent=71 // pred_check_branch
          %1808 = sbr.rel (%p1806) target = $region120
        $region119: #{pointnet_feat.2} parent=71 // pred_region
          %v1809 = vld [vmem:[%s623] sm:$0xff]
          %v1818 = vcombine.low %v1692, %v1699
          %v1819 = vcombine.low %v1706, %v1713
          %v1820 = vcombine.low %v1720, %v1727
          %v1821 = vcombine.low %v1734, %v1741
          %v1823 = vunpack.c.l.s4 1966171168
          %v1824 = vunpack.c.0.s8 %v1823
          %v1825 = vlaneseq
          %v1826 = vshrl.u32 %v1825, 7
          %v1827 = vsub.s32 %v1824, %v1826
          %v1828 = vrot.slane %v1818, %v1827
          %v1830 = vunpack.c.l.s4 1966171168
          %v1831 = vunpack.c.0.s8 %v1830
          %v1832 = vlaneseq
          %v1833 = vshrl.u32 %v1832, 7
          %v1834 = vsub.s32 %v1831, %v1833
          %v1835 = vrot.slane %v1819, %v1834
          %v1837 = vunpack.c.l.s4 1966171168
          %v1838 = vunpack.c.0.s8 %v1837
          %v1839 = vlaneseq
          %v1840 = vshrl.u32 %v1839, 7
          %v1841 = vsub.s32 %v1838, %v1840
          %v1842 = vrot.slane %v1820, %v1841
          %v1844 = vunpack.c.l.s4 1966171168
          %v1845 = vunpack.c.0.s8 %v1844
          %v1846 = vlaneseq
          %v1847 = vshrl.u32 %v1846, 7
          %v1848 = vsub.s32 %v1845, %v1847
          %v1849 = vrot.slane %v1821, %v1848
          %v1850 = vcombine.low %v1828, %v1835
          %v1851 = vcombine.low %v1842, %v1849
          %v1853 = vunpack.c.l.s4 1966171168
          %v1854 = vunpack.c.0.s8 %v1853
          %v1855 = vlaneseq
          %v1856 = vshrl.u32 %v1855, 7
          %v1857 = vsub.s32 %v1854, %v1856
          %v1858 = vrot.slane %v1850, %v1857
          %v1860 = vunpack.c.l.s4 1966171168
          %v1861 = vunpack.c.0.s8 %v1860
          %v1862 = vlaneseq
          %v1863 = vshrl.u32 %v1862, 7
          %v1864 = vsub.s32 %v1861, %v1863
          %v1865 = vrot.slane %v1851, %v1864
          %v1866 = vcombine.low %v1858, %v1865
          %v1868 = vmax.f32 %v1809, %v1866
          %1869 = vst [vmem:[%s623] sm:$0xff] %v1868
        $region120: #{pointnet_feat.2} parent=71 // pred_fallthru
          _
        %p1870 = scmp.lt.s32.totalorder %s35, 1
        %s1871 = scalar_select %p1870, %s35, 1
        %p1872 = scmp.lt.s32.totalorder %s36, 1
        %s1873 = scalar_select %p1872, %s36, 1
        %s1874 = smul.addr %s1873, 8
        %s1875 = smul.addr %s1871, 16
        %s1876 = sadd.s32 %s1874, %s1875
        %s1877 = scalar_lea.vmem %s13, %s1876
        // Predicated region
        $region121: #{pointnet_feat.2} parent=71 // pred_check
          %p1878 = pneg %p353
        $region122: #{pointnet_feat.2} parent=71 // pred_check_branch
          %1880 = sbr.rel (%p1878) target = $region124
        $region123: #{pointnet_feat.2} parent=71 // pred_region
          _
        $region124: #{pointnet_feat.2} parent=71 // pred_fallthru
          _
      $region72: #{pointnet_feat.2} parent=5 // pred_fallthru
        _
      %p1881 = scmp.le.s32.totalorder 2, %s25
      // Predicated region
      $region125: #{pointnet_feat.2} parent=5 // pred_check
        %p1882 = pneg %p1881
      $region126: #{pointnet_feat.2} parent=5 // pred_check_branch
        %1884 = sbr.rel (%p1882) target = $region128
      $region127: #{pointnet_feat.2} parent=5 // pred_region
        %s1885 = ssub.s32 %s25, 2
        // Predicated region
        $region129: #{pointnet_feat.2} parent=127 // pred_check
          %p1886 = pneg %p359
        $region130: #{pointnet_feat.2} parent=127 // pred_check_branch
          %1888 = sbr.rel (%p1886) target = $region132
        $region131: #{pointnet_feat.2} parent=127 // pred_region
          %p1889 = scmp.lt.s32.totalorder %s38, 1
          %s1890 = scalar_select %p1889, %s38, 1
          %p1891 = scmp.lt.s32.totalorder %s39, 1
          %s1892 = scalar_select %p1891, %s39, 1
          %s1893 = smul.addr %s1892, 8
          %s1894 = smul.addr %s1890, 16
          %s1895 = sadd.s32 %s1893, %s1894
          %s1896 = scalar_lea.vmem %s13, %s1895
        $region132: #{pointnet_feat.2} parent=127 // pred_fallthru
          _
      $region128: #{pointnet_feat.2} parent=5 // pred_fallthru
        _
    $region6: #{pointnet_feat.2} parent=1 // loop_footer
      %s29 = sadd.s32 1, %s25
    $region7: #{pointnet_feat.2} parent=1 // loop_footer_branch
      %24 = sbr.rel target = $region3
    $region8: #{pointnet_feat.2} parent=1 // loop_exit
      _
    %1897 = vsyncpa [#allocation3], 1
    %s1898 = scalar_lea.sflag [#allocation3], 1
    %1899 = vsyncpa %s1898, 1
    %1900 = vsyncpa [#allocation5], 1
    %1901 = vsyncpa [#allocation8], 1
    %1902 = vsyncpa [#allocation11], 1
    %1903 = vsyncpa [#allocation14], 1
    %1904 = vsyncpa [#allocation17], 1

// kernel: pointnet_feat.3
$region0: #{pointnet_feat.3}
  #allocation0 [shape = 'u32[]', space=smem, size = 0x4, offset = 0x4, fixed_abs, tag = 'smem constant byte address 0x4 - core index']
  #allocation1 [shape = 'u32[144,128]{1,0:T(1,128)}', space=vmem, size = 0x12000, scoped, tag = 'internal scratch']
  %s0 = inlined_call_operand.vmem [shape: f32[2,64,3], index: 0, kind: input, shape index: {}]
  %s1 = inlined_call_operand.vmem [shape: f32[2,3,64], index: 1, kind: input, shape index: {}]
  %s2 = inlined_call_operand.vmem [shape: f32[1,64], index: 2, kind: input, shape index: {}]
  %s3 = inlined_call_operand.vmem [shape: f32[1,64], index: 3, kind: input, shape index: {}]
  %s4 = inlined_call_operand.vmem [shape: f32[1,64], index: 4, kind: input, shape index: {}]
  %s5 = inlined_call_operand.vmem [shape: bf16[64,128], index: 5, kind: input, shape index: {}]
  %s6 = inlined_call_operand.vmem [shape: f32[1,128], index: 6, kind: input, shape index: {}]
  %s7 = inlined_call_operand.vmem [shape: f32[1,128], index: 7, kind: input, shape index: {}]
  %s8 = inlined_call_operand.vmem [shape: f32[1,128], index: 8, kind: input, shape index: {}]
  %s9 = inlined_call_operand.vmem [shape: bf16[128,1024], index: 9, kind: input, shape index: {}]
  %s10 = inlined_call_operand.vmem [shape: f32[1,1024], index: 10, kind: input, shape index: {}]
  %s11 = inlined_call_operand.vmem [shape: f32[1,1024], index: 11, kind: input, shape index: {}]
  %s12 = inlined_call_operand.vmem [shape: f32[1,1024], index: 12, kind: input, shape index: {}]
  %s13 = inlined_call_operand.vmem [shape: f32[2,64,1024], index: 13, kind: output, shape index: {}]
  %s14 = sld [smem:[#allocation0]]
  $region85: #{pointnet_feat.3} parent=0
    _
  %s16 = ssub.s32 1, %s14
  %s17 = scalar_select 0, %s16, %s14
  loop: start=0, step=1, limit=10
  $region2: #{pointnet_feat.3} parent=0 // loop_pre_header
    _
  $region3: #{pointnet_feat.3} parent=0 // loop_header
    %s19 = sphi 0, %s23
    %p20 = scmp.ge.s32.totalorder %s19, 10
    %s26 = sphi 0, %s38
    %s27 = sphi 0, %s34
    %s28 = sphi 0, %s26
    %s29 = sphi 0, %s27
    %s30 = sphi 0, %s28
    %s31 = sphi 0, %s29
    %s43 = sphi 0, %s45
    %s46 = sphi 0, %s43
    %s47 = sphi 0, %s46
    %s63 = sphi 0, %s47
    %s69 = sphi 0, %s71
    %s72 = sphi 0, %s69
    %s73 = sphi 0, %s72
    %s89 = sphi 0, %s73
    %s93 = sphi 0, %s93
    %s95 = sphi 0, %s93
    %s96 = sphi 0, %s95
    %s110 = sphi 0, %s96
    %s114 = sphi 0, %s114
    %s116 = sphi 0, %s114
    %s117 = sphi 0, %s116
    %s131 = sphi 0, %s117
    %s135 = sphi 0, %s135
    %s137 = sphi 0, %s135
    %s138 = sphi 0, %s137
    %s152 = sphi 0, %s138
    %s156 = sphi 0, %s156
    %s158 = sphi 0, %s156
    %s159 = sphi 0, %s158
    %s173 = sphi 0, %s159
    %s177 = sphi 0, %s177
    %s179 = sphi 0, %s177
    %s180 = sphi 0, %s179
    %s194 = sphi 0, %s180
    %s198 = sphi 0, %s198
    %s200 = sphi 0, %s198
    %s201 = sphi 0, %s200
    %s215 = sphi 0, %s201
    %s219 = sphi 0, %s219
    %s221 = sphi 0, %s219
    %s222 = sphi 0, %s221
    %s236 = sphi 0, %s222
    %s240 = sphi 0, %s240
    %s242 = sphi 0, %s240
    %s243 = sphi 0, %s242
    %s257 = sphi 0, %s243
    %s261 = sphi 0, %s261
    %s263 = sphi 0, %s261
    %s264 = sphi 0, %s263
    %s278 = sphi 0, %s264
    %s282 = sphi 0, %s282
    %s284 = sphi 0, %s282
    %s285 = sphi 0, %s284
    %s299 = sphi 0, %s285
    %s303 = sphi 0, %s303
    %s305 = sphi 0, %s303
    %s306 = sphi 0, %s305
    %s320 = sphi 0, %s306
    %s328 = sphi 0, %s330
    %s331 = sphi 0, %s328
    %s332 = sphi 0, %s331
    %s348 = sphi 0, %s332
  $region4: #{pointnet_feat.3} parent=0 // loop_header_branch
    %22 = sbr.rel (%p20) target = $region8
  $region5: #{pointnet_feat.3} parent=0 // loop_body
    %s24 = ssub.s32 %s19, 1
    %s25 = ssub.s32 %s19, 2
    %s32 = sadd.s32 1, %s27
    %p33 = scmp.ge.s32.totalorder %s32, 4
    %s34 = scalar_select %p33, 0, %s32
    %s35 = sadd.s32 1, %s26
    %s36 = scalar_select %p33, %s35, %s26
    %p37 = scmp.ge.s32.totalorder %s36, 2
    %s38 = scalar_select %p37, 0, %s36
    %s39 = ssub.s32 %s26, %s38
    %s40 = ssub.s32 %s27, %s34
    %s41 = sor.u32 %s39, %s40
    %p42 = scmp.eq.s32.totalorder %s41, 0
    %s44 = sadd.s32 %s43, 1
    %s45 = scalar_select %p42, %s43, %s44
    %p48 = pneg %p42
    %p49 = scmp.eq.s32.totalorder %s19, 7
    %p50 = por %p48, %p49
    %p51 = scmp.ne.s32.totalorder %s43, %s46
    %p52 = scmp.eq.s32.totalorder %s19, 0
    %p53 = por %p51, %p52
    %p54 = scmp.ne.s32.totalorder %s43, %s46
    %p55 = scmp.eq.s32.totalorder %s24, 7
    %p56 = por %p54, %p55
    %p57 = scmp.ne.s32.totalorder %s46, %s47
    %p58 = scmp.eq.s32.totalorder %s24, 0
    %p59 = por %p57, %p58
    %p60 = scmp.ne.s32.totalorder %s46, %s47
    %p61 = scmp.eq.s32.totalorder %s25, 7
    %p62 = por %p60, %p61
    %p64 = scmp.ne.s32.totalorder %s47, %s63
    %p65 = scmp.eq.s32.totalorder %s25, 0
    %p66 = por %p64, %p65
    %s67 = ssub.s32 %s26, %s38
    %p68 = scmp.eq.s32.totalorder %s67, 0
    %s70 = sadd.s32 %s69, 1
    %s71 = scalar_select %p68, %s69, %s70
    %p74 = pneg %p68
    %p75 = scmp.eq.s32.totalorder %s19, 7
    %p76 = por %p74, %p75
    %p77 = scmp.ne.s32.totalorder %s69, %s72
    %p78 = scmp.eq.s32.totalorder %s19, 0
    %p79 = por %p77, %p78
    %p80 = scmp.ne.s32.totalorder %s69, %s72
    %p81 = scmp.eq.s32.totalorder %s24, 7
    %p82 = por %p80, %p81
    %p83 = scmp.ne.s32.totalorder %s72, %s73
    %p84 = scmp.eq.s32.totalorder %s24, 0
    %p85 = por %p83, %p84
    %p86 = scmp.ne.s32.totalorder %s72, %s73
    %p87 = scmp.eq.s32.totalorder %s25, 7
    %p88 = por %p86, %p87
    %p90 = scmp.ne.s32.totalorder %s73, %s89
    %p91 = scmp.eq.s32.totalorder %s25, 0
    %p92 = por %p90, %p91
    %s94 = sadd.s32 %s93, 1
    %p97 = scmp.eq.s32.totalorder %s19, 7
    %p98 = scmp.ne.s32.totalorder %s93, %s95
    %p99 = scmp.eq.s32.totalorder %s19, 0
    %p100 = por %p98, %p99
    %p101 = scmp.ne.s32.totalorder %s93, %s95
    %p102 = scmp.eq.s32.totalorder %s24, 7
    %p103 = por %p101, %p102
    %p104 = scmp.ne.s32.totalorder %s95, %s96
    %p105 = scmp.eq.s32.totalorder %s24, 0
    %p106 = por %p104, %p105
    %p107 = scmp.ne.s32.totalorder %s95, %s96
    %p108 = scmp.eq.s32.totalorder %s25, 7
    %p109 = por %p107, %p108
    %p111 = scmp.ne.s32.totalorder %s96, %s110
    %p112 = scmp.eq.s32.totalorder %s25, 0
    %p113 = por %p111, %p112
    %s115 = sadd.s32 %s114, 1
    %p118 = scmp.eq.s32.totalorder %s19, 7
    %p119 = scmp.ne.s32.totalorder %s114, %s116
    %p120 = scmp.eq.s32.totalorder %s19, 0
    %p121 = por %p119, %p120
    %p122 = scmp.ne.s32.totalorder %s114, %s116
    %p123 = scmp.eq.s32.totalorder %s24, 7
    %p124 = por %p122, %p123
    %p125 = scmp.ne.s32.totalorder %s116, %s117
    %p126 = scmp.eq.s32.totalorder %s24, 0
    %p127 = por %p125, %p126
    %p128 = scmp.ne.s32.totalorder %s116, %s117
    %p129 = scmp.eq.s32.totalorder %s25, 7
    %p130 = por %p128, %p129
    %p132 = scmp.ne.s32.totalorder %s117, %s131
    %p133 = scmp.eq.s32.totalorder %s25, 0
    %p134 = por %p132, %p133
    %s136 = sadd.s32 %s135, 1
    %p139 = scmp.eq.s32.totalorder %s19, 7
    %p140 = scmp.ne.s32.totalorder %s135, %s137
    %p141 = scmp.eq.s32.totalorder %s19, 0
    %p142 = por %p140, %p141
    %p143 = scmp.ne.s32.totalorder %s135, %s137
    %p144 = scmp.eq.s32.totalorder %s24, 7
    %p145 = por %p143, %p144
    %p146 = scmp.ne.s32.totalorder %s137, %s138
    %p147 = scmp.eq.s32.totalorder %s24, 0
    %p148 = por %p146, %p147
    %p149 = scmp.ne.s32.totalorder %s137, %s138
    %p150 = scmp.eq.s32.totalorder %s25, 7
    %p151 = por %p149, %p150
    %p153 = scmp.ne.s32.totalorder %s138, %s152
    %p154 = scmp.eq.s32.totalorder %s25, 0
    %p155 = por %p153, %p154
    %s157 = sadd.s32 %s156, 1
    %p160 = scmp.eq.s32.totalorder %s19, 7
    %p161 = scmp.ne.s32.totalorder %s156, %s158
    %p162 = scmp.eq.s32.totalorder %s19, 0
    %p163 = por %p161, %p162
    %p164 = scmp.ne.s32.totalorder %s156, %s158
    %p165 = scmp.eq.s32.totalorder %s24, 7
    %p166 = por %p164, %p165
    %p167 = scmp.ne.s32.totalorder %s158, %s159
    %p168 = scmp.eq.s32.totalorder %s24, 0
    %p169 = por %p167, %p168
    %p170 = scmp.ne.s32.totalorder %s158, %s159
    %p171 = scmp.eq.s32.totalorder %s25, 7
    %p172 = por %p170, %p171
    %p174 = scmp.ne.s32.totalorder %s159, %s173
    %p175 = scmp.eq.s32.totalorder %s25, 0
    %p176 = por %p174, %p175
    %s178 = sadd.s32 %s177, 1
    %p181 = scmp.eq.s32.totalorder %s19, 7
    %p182 = scmp.ne.s32.totalorder %s177, %s179
    %p183 = scmp.eq.s32.totalorder %s19, 0
    %p184 = por %p182, %p183
    %p185 = scmp.ne.s32.totalorder %s177, %s179
    %p186 = scmp.eq.s32.totalorder %s24, 7
    %p187 = por %p185, %p186
    %p188 = scmp.ne.s32.totalorder %s179, %s180
    %p189 = scmp.eq.s32.totalorder %s24, 0
    %p190 = por %p188, %p189
    %p191 = scmp.ne.s32.totalorder %s179, %s180
    %p192 = scmp.eq.s32.totalorder %s25, 7
    %p193 = por %p191, %p192
    %p195 = scmp.ne.s32.totalorder %s180, %s194
    %p196 = scmp.eq.s32.totalorder %s25, 0
    %p197 = por %p195, %p196
    %s199 = sadd.s32 %s198, 1
    %p202 = scmp.eq.s32.totalorder %s19, 7
    %p203 = scmp.ne.s32.totalorder %s198, %s200
    %p204 = scmp.eq.s32.totalorder %s19, 0
    %p205 = por %p203, %p204
    %p206 = scmp.ne.s32.totalorder %s198, %s200
    %p207 = scmp.eq.s32.totalorder %s24, 7
    %p208 = por %p206, %p207
    %p209 = scmp.ne.s32.totalorder %s200, %s201
    %p210 = scmp.eq.s32.totalorder %s24, 0
    %p211 = por %p209, %p210
    %p212 = scmp.ne.s32.totalorder %s200, %s201
    %p213 = scmp.eq.s32.totalorder %s25, 7
    %p214 = por %p212, %p213
    %p216 = scmp.ne.s32.totalorder %s201, %s215
    %p217 = scmp.eq.s32.totalorder %s25, 0
    %p218 = por %p216, %p217
    %s220 = sadd.s32 %s219, 1
    %p223 = scmp.eq.s32.totalorder %s19, 7
    %p224 = scmp.ne.s32.totalorder %s219, %s221
    %p225 = scmp.eq.s32.totalorder %s19, 0
    %p226 = por %p224, %p225
    %p227 = scmp.ne.s32.totalorder %s219, %s221
    %p228 = scmp.eq.s32.totalorder %s24, 7
    %p229 = por %p227, %p228
    %p230 = scmp.ne.s32.totalorder %s221, %s222
    %p231 = scmp.eq.s32.totalorder %s24, 0
    %p232 = por %p230, %p231
    %p233 = scmp.ne.s32.totalorder %s221, %s222
    %p234 = scmp.eq.s32.totalorder %s25, 7
    %p235 = por %p233, %p234
    %p237 = scmp.ne.s32.totalorder %s222, %s236
    %p238 = scmp.eq.s32.totalorder %s25, 0
    %p239 = por %p237, %p238
    %s241 = sadd.s32 %s240, 1
    %p244 = scmp.eq.s32.totalorder %s19, 7
    %p245 = scmp.ne.s32.totalorder %s240, %s242
    %p246 = scmp.eq.s32.totalorder %s19, 0
    %p247 = por %p245, %p246
    %p248 = scmp.ne.s32.totalorder %s240, %s242
    %p249 = scmp.eq.s32.totalorder %s24, 7
    %p250 = por %p248, %p249
    %p251 = scmp.ne.s32.totalorder %s242, %s243
    %p252 = scmp.eq.s32.totalorder %s24, 0
    %p253 = por %p251, %p252
    %p254 = scmp.ne.s32.totalorder %s242, %s243
    %p255 = scmp.eq.s32.totalorder %s25, 7
    %p256 = por %p254, %p255
    %p258 = scmp.ne.s32.totalorder %s243, %s257
    %p259 = scmp.eq.s32.totalorder %s25, 0
    %p260 = por %p258, %p259
    %s262 = sadd.s32 %s261, 1
    %p265 = scmp.eq.s32.totalorder %s19, 7
    %p266 = scmp.ne.s32.totalorder %s261, %s263
    %p267 = scmp.eq.s32.totalorder %s19, 0
    %p268 = por %p266, %p267
    %p269 = scmp.ne.s32.totalorder %s261, %s263
    %p270 = scmp.eq.s32.totalorder %s24, 7
    %p271 = por %p269, %p270
    %p272 = scmp.ne.s32.totalorder %s263, %s264
    %p273 = scmp.eq.s32.totalorder %s24, 0
    %p274 = por %p272, %p273
    %p275 = scmp.ne.s32.totalorder %s263, %s264
    %p276 = scmp.eq.s32.totalorder %s25, 7
    %p277 = por %p275, %p276
    %p279 = scmp.ne.s32.totalorder %s264, %s278
    %p280 = scmp.eq.s32.totalorder %s25, 0
    %p281 = por %p279, %p280
    %s283 = sadd.s32 %s282, 1
    %p286 = scmp.eq.s32.totalorder %s19, 7
    %p287 = scmp.ne.s32.totalorder %s282, %s284
    %p288 = scmp.eq.s32.totalorder %s19, 0
    %p289 = por %p287, %p288
    %p290 = scmp.ne.s32.totalorder %s282, %s284
    %p291 = scmp.eq.s32.totalorder %s24, 7
    %p292 = por %p290, %p291
    %p293 = scmp.ne.s32.totalorder %s284, %s285
    %p294 = scmp.eq.s32.totalorder %s24, 0
    %p295 = por %p293, %p294
    %p296 = scmp.ne.s32.totalorder %s284, %s285
    %p297 = scmp.eq.s32.totalorder %s25, 7
    %p298 = por %p296, %p297
    %p300 = scmp.ne.s32.totalorder %s285, %s299
    %p301 = scmp.eq.s32.totalorder %s25, 0
    %p302 = por %p300, %p301
    %s304 = sadd.s32 %s303, 1
    %p307 = scmp.eq.s32.totalorder %s19, 7
    %p308 = scmp.ne.s32.totalorder %s303, %s305
    %p309 = scmp.eq.s32.totalorder %s19, 0
    %p310 = por %p308, %p309
    %p311 = scmp.ne.s32.totalorder %s303, %s305
    %p312 = scmp.eq.s32.totalorder %s24, 7
    %p313 = por %p311, %p312
    %p314 = scmp.ne.s32.totalorder %s305, %s306
    %p315 = scmp.eq.s32.totalorder %s24, 0
    %p316 = por %p314, %p315
    %p317 = scmp.ne.s32.totalorder %s305, %s306
    %p318 = scmp.eq.s32.totalorder %s25, 7
    %p319 = por %p317, %p318
    %p321 = scmp.ne.s32.totalorder %s306, %s320
    %p322 = scmp.eq.s32.totalorder %s25, 0
    %p323 = por %p321, %p322
    %s324 = ssub.s32 %s26, %s38
    %s325 = ssub.s32 %s27, %s34
    %s326 = sor.u32 %s324, %s325
    %p327 = scmp.eq.s32.totalorder %s326, 0
    %s329 = sadd.s32 %s328, 1
    %s330 = scalar_select %p327, %s328, %s329
    %p333 = pneg %p327
    %p334 = scmp.eq.s32.totalorder %s19, 7
    %p335 = por %p333, %p334
    %p336 = scmp.ne.s32.totalorder %s328, %s331
    %p337 = scmp.eq.s32.totalorder %s19, 0
    %p338 = por %p336, %p337
    %p339 = scmp.ne.s32.totalorder %s328, %s331
    %p340 = scmp.eq.s32.totalorder %s24, 7
    %p341 = por %p339, %p340
    %p342 = scmp.ne.s32.totalorder %s331, %s332
    %p343 = scmp.eq.s32.totalorder %s24, 0
    %p344 = por %p342, %p343
    %p345 = scmp.ne.s32.totalorder %s331, %s332
    %p346 = scmp.eq.s32.totalorder %s25, 7
    %p347 = por %p345, %p346
    %p349 = scmp.ne.s32.totalorder %s332, %s348
    %p350 = scmp.eq.s32.totalorder %s25, 0
    %p351 = por %p349, %p350
    %p352 = scmp.le.s32.totalorder 1, %s19
    %p353 = scmp.lt.s32.totalorder %s19, 9
    %p354 = pnand %p352, %p353
    %p355 = pneg %p354
    // Predicated region
    $region9: #{pointnet_feat.3} parent=5 // pred_check
      _
    $region10: #{pointnet_feat.3} parent=5 // pred_check_branch
      %357 = sbr.rel (%p354) target = $region12
    $region11: #{pointnet_feat.3} parent=5 // pred_region
      %s358 = ssub.s32 %s19, 1
      // Predicated region
      $region13: #{pointnet_feat.3} parent=11 // pred_check
        %p359 = pneg %p106
      $region14: #{pointnet_feat.3} parent=11 // pred_check_branch
        %361 = sbr.rel (%p359) target = $region16
      $region15: #{pointnet_feat.3} parent=11 // pred_region
        _
      $region16: #{pointnet_feat.3} parent=11 // pred_fallthru
        _
      // Predicated region
      $region17: #{pointnet_feat.3} parent=11 // pred_check
        %p362 = pneg %p127
      $region18: #{pointnet_feat.3} parent=11 // pred_check_branch
        %364 = sbr.rel (%p362) target = $region20
      $region19: #{pointnet_feat.3} parent=11 // pred_region
        _
      $region20: #{pointnet_feat.3} parent=11 // pred_fallthru
        _
      // Predicated region
      $region21: #{pointnet_feat.3} parent=11 // pred_check
        %p365 = pneg %p148
      $region22: #{pointnet_feat.3} parent=11 // pred_check_branch
        %367 = sbr.rel (%p365) target = $region24
      $region23: #{pointnet_feat.3} parent=11 // pred_region
        _
      $region24: #{pointnet_feat.3} parent=11 // pred_fallthru
        _
      // Predicated region
      $region25: #{pointnet_feat.3} parent=11 // pred_check
        %p368 = pneg %p169
      $region26: #{pointnet_feat.3} parent=11 // pred_check_branch
        %370 = sbr.rel (%p368) target = $region28
      $region27: #{pointnet_feat.3} parent=11 // pred_region
        _
      $region28: #{pointnet_feat.3} parent=11 // pred_fallthru
        _
      // Predicated region
      $region29: #{pointnet_feat.3} parent=11 // pred_check
        %p371 = pneg %p190
      $region30: #{pointnet_feat.3} parent=11 // pred_check_branch
        %373 = sbr.rel (%p371) target = $region32
      $region31: #{pointnet_feat.3} parent=11 // pred_region
        _
      $region32: #{pointnet_feat.3} parent=11 // pred_fallthru
        _
      // Predicated region
      $region33: #{pointnet_feat.3} parent=11 // pred_check
        %p374 = pneg %p211
      $region34: #{pointnet_feat.3} parent=11 // pred_check_branch
        %376 = sbr.rel (%p374) target = $region36
      $region35: #{pointnet_feat.3} parent=11 // pred_region
        _
      $region36: #{pointnet_feat.3} parent=11 // pred_fallthru
        _
      // Predicated region
      $region37: #{pointnet_feat.3} parent=11 // pred_check
        %p377 = pneg %p232
      $region38: #{pointnet_feat.3} parent=11 // pred_check_branch
        %379 = sbr.rel (%p377) target = $region40
      $region39: #{pointnet_feat.3} parent=11 // pred_region
        _
      $region40: #{pointnet_feat.3} parent=11 // pred_fallthru
        _
      // Predicated region
      $region41: #{pointnet_feat.3} parent=11 // pred_check
        %p380 = pneg %p253
      $region42: #{pointnet_feat.3} parent=11 // pred_check_branch
        %382 = sbr.rel (%p380) target = $region44
      $region43: #{pointnet_feat.3} parent=11 // pred_region
        _
      $region44: #{pointnet_feat.3} parent=11 // pred_fallthru
        _
      // Predicated region
      $region45: #{pointnet_feat.3} parent=11 // pred_check
        %p383 = pneg %p274
      $region46: #{pointnet_feat.3} parent=11 // pred_check_branch
        %385 = sbr.rel (%p383) target = $region48
      $region47: #{pointnet_feat.3} parent=11 // pred_region
        _
      $region48: #{pointnet_feat.3} parent=11 // pred_fallthru
        _
      // Predicated region
      $region49: #{pointnet_feat.3} parent=11 // pred_check
        %p386 = pneg %p295
      $region50: #{pointnet_feat.3} parent=11 // pred_check_branch
        %388 = sbr.rel (%p386) target = $region52
      $region51: #{pointnet_feat.3} parent=11 // pred_region
        _
      $region52: #{pointnet_feat.3} parent=11 // pred_fallthru
        _
      // Predicated region
      $region53: #{pointnet_feat.3} parent=11 // pred_check
        %p389 = pneg %p316
      $region54: #{pointnet_feat.3} parent=11 // pred_check_branch
        %391 = sbr.rel (%p389) target = $region56
      $region55: #{pointnet_feat.3} parent=11 // pred_region
        _
      $region56: #{pointnet_feat.3} parent=11 // pred_fallthru
        _
    $region12: #{pointnet_feat.3} parent=5 // pred_fallthru
      _
    %p392 = scmp.lt.s32.totalorder %s19, 8
    // Predicated region
    $region57: #{pointnet_feat.3} parent=5 // pred_check
      %p393 = pneg %p392
    $region58: #{pointnet_feat.3} parent=5 // pred_check_branch
      %395 = sbr.rel (%p393) target = $region60
    $region59: #{pointnet_feat.3} parent=5 // pred_region
      // Predicated region
      $region61: #{pointnet_feat.3} parent=59 // pred_check
        %p396 = pneg %p53
      $region62: #{pointnet_feat.3} parent=59 // pred_check_branch
        %398 = sbr.rel (%p396) target = $region64
      $region63: #{pointnet_feat.3} parent=59 // pred_region
        %s399 = smul.u32 2, %s27
        %p400 = scmp.lt.s32.totalorder %s26, 1
        %s401 = scalar_select %p400, %s26, 1
        %p402 = scmp.lt.s32.totalorder %s399, 7
        %s403 = scalar_select %p402, %s399, 7
        %s404 = smul.addr %s401, 8
        %s405 = sadd.s32 %s403, %s404
        %s406 = smul.addr %s405, 8
        %s407 = scalar_lea.vmem %s0, %s406
        %s408 = smul.u32 2, %s27
      $region64: #{pointnet_feat.3} parent=59 // pred_fallthru
        _
      // Predicated region
      $region65: #{pointnet_feat.3} parent=59 // pred_check
        %p409 = pneg %p79
      $region66: #{pointnet_feat.3} parent=59 // pred_check_branch
        %411 = sbr.rel (%p409) target = $region68
      $region67: #{pointnet_feat.3} parent=59 // pred_region
        %p412 = scmp.lt.s32.totalorder %s26, 1
        %s413 = scalar_select %p412, %s26, 1
        %s414 = smul.addr %s413, 4
        %s415 = scalar_lea.vmem %s1, %s414
      $region68: #{pointnet_feat.3} parent=59 // pred_fallthru
        _
    $region60: #{pointnet_feat.3} parent=5 // pred_fallthru
      _
    %p416 = scmp.le.s32.totalorder 1, %s19
    %p417 = scmp.lt.s32.totalorder %s19, 9
    %p418 = pnand %p416, %p417
    %p419 = pneg %p418
    // Predicated region
    $region69: #{pointnet_feat.3} parent=5 // pred_check
      _
    $region70: #{pointnet_feat.3} parent=5 // pred_check_branch
      %421 = sbr.rel (%p418) target = $region72
    $region71: #{pointnet_feat.3} parent=5 // pred_region
      %s422 = ssub.s32 %s19, 1
      %s423 = smul.u32 2, %s29
      %p424 = scmp.lt.s32.totalorder %s28, 1
      %s425 = scalar_select %p424, %s28, 1
      %p426 = scmp.lt.s32.totalorder %s423, 7
      %s427 = scalar_select %p426, %s423, 7
      %s428 = smul.addr %s425, 8
      %s429 = sadd.s32 %s427, %s428
      %s430 = smul.addr %s429, 8
      %s431 = scalar_lea.vmem %s0, %s430
      %p432 = pneg %p59
      %p433 = pneg %p56
      %p434 = scmp.lt.s32.totalorder %s28, 1
      %s435 = scalar_select %p434, %s28, 1
      %s436 = smul.addr %s435, 4
      %s437 = scalar_lea.vmem %s1, %s436
      %p438 = pneg %p85
      %p439 = pneg %p82
      %p440 = pneg %p106
      %p441 = pneg %p103
      %p442 = pneg %p127
      %p443 = pneg %p124
      %p444 = pneg %p148
      %p445 = pneg %p145
      %p446 = pneg %p169
      %p447 = pneg %p166
      %p448 = pneg %p190
      %p449 = pneg %p187
      %p450 = pneg %p211
      %p451 = pneg %p208
      %p452 = pneg %p232
      %p453 = pneg %p229
      %p454 = pneg %p253
      %p455 = pneg %p250
      %p456 = pneg %p274
      %p457 = pneg %p271
      %p458 = pneg %p295
      %p459 = pneg %p292
      %p460 = pneg %p316
      %p461 = pneg %p313
      %p462 = pneg %p344
      %p463 = pneg %p341
      %s464 = smul.u32 2, %s29
      %p465 = scmp.lt.s32.totalorder %s28, 1
      %s466 = scalar_select %p465, %s28, 1
      %p467 = scmp.lt.s32.totalorder %s464, 7
      %s468 = scalar_select %p467, %s464, 7
      %s469 = smul.addr %s468, 8
      %s470 = smul.addr %s466, 64
      %s471 = sadd.s32 %s469, %s470
      %s472 = smul.addr %s471, 8
      %s473 = scalar_lea.vmem %s13, %s472
      %s474 = smul.u32 2, %s29
      %p475 = scmp.lt.s32.totalorder %s28, 1
      %s476 = scalar_select %p475, %s28, 1
      %p477 = scmp.lt.s32.totalorder %s474, 7
      %s478 = scalar_select %p477, %s474, 7
      %s479 = smul.addr %s476, 8
      %s480 = sadd.s32 %s478, %s479
      %s481 = smul.addr %s480, 8
      %s482 = scalar_lea.vmem %s0, %s481
      %s483 = smul.u32 2, %s29
      %p484 = scmp.lt.s32.totalorder %s28, 1
      %s485 = scalar_select %p484, %s28, 1
      %s486 = smul.addr %s485, 4
      %s487 = scalar_lea.vmem %s1, %s486
      %s488 = smul.u32 2, %s29
      %p489 = scmp.lt.s32.totalorder %s28, 1
      %s490 = scalar_select %p489, %s28, 1
      %p491 = scmp.lt.s32.totalorder %s488, 7
      %s492 = scalar_select %p491, %s488, 7
      %s493 = smul.addr %s492, 8
      %s494 = smul.addr %s490, 64
      %s495 = sadd.s32 %s493, %s494
      %s496 = smul.addr %s495, 8
      %s497 = scalar_lea.vmem %s13, %s496
      %s498 = smul.u32 2, %s29
      %v500 = vld [vmem:[%s482] sm:$0xff]
      %v501 = vld [vmem:[%s482 + $0x8] sm:$0xff]
      %v502 = vld [vmem:[%s487] sm:$0x7]
      %v503 = vld [vmem:[%s2] sm:$0x1]
      %505 = vset.pattern.permute.xlu0 0
      %506 = vperm.xlu0 %505, %v500
      %v507 = vpop.permute.xlu0 %506
      %510 = vset.pattern.permute.xlu0 0
      %511 = vperm.xlu0 %510, %v501
      %v512 = vpop.permute.xlu0 %511
      %v514 = vlaneseq
      %v515 = vshrl.u32 %v514, 7
      %v516 = vsub.s32 0, %v515
      %v517 = vrot.slane %v502, %v516
      %v518 = vmul.f32 %v507, %v517
      %v519 = vmul.f32 %v512, %v517
      %v521 = vlaneseq
      %v522 = vshrl.u32 %v521, 7
      %v523 = vsub.s32 0, %v522
      %v524 = vrot.slane %v503, %v523
      %v526 = vadd.f32 %v524, %v518
      %v527 = vadd.f32 %v524, %v519
      %528 = vset.pattern.permute.xlu0 1
      %529 = vperm.xlu0 %528, %v500
      %v530 = vpop.permute.xlu0 %529
      %532 = vset.pattern.permute.xlu0 1
      %533 = vperm.xlu0 %532, %v501
      %v534 = vpop.permute.xlu0 %533
      %v536 = vlaneseq
      %v537 = vshrl.u32 %v536, 7
      %v538 = vsub.s32 1, %v537
      %v539 = vrot.slane %v502, %v538
      %v540 = vmul.f32 %v530, %v539
      %v541 = vmul.f32 %v534, %v539
      %v542 = vadd.f32 %v526, %v540
      %v543 = vadd.f32 %v527, %v541
      %544 = vset.pattern.permute.xlu0 2
      %545 = vperm.xlu0 %544, %v500
      %v546 = vpop.permute.xlu0 %545
      %548 = vset.pattern.permute.xlu0 2
      %549 = vperm.xlu0 %548, %v501
      %v550 = vpop.permute.xlu0 %549
      %v552 = vlaneseq
      %v553 = vshrl.u32 %v552, 7
      %v554 = vsub.s32 2, %v553
      %v555 = vrot.slane %v502, %v554
      %v556 = vmul.f32 %v546, %v555
      %v557 = vmul.f32 %v550, %v555
      %v558 = vadd.f32 %v542, %v556
      %v559 = vadd.f32 %v543, %v557
      %v560 = vld [vmem:[%s3] sm:$0x1]
      %v561 = vld [vmem:[%s4] sm:$0x1]
      %vm562 = vcmask 523264
      %v563 = vsel %vm562, %v558, 0.0
      %564 = vadd.xlane.f32.xlu0 %v563
      %v565 = vpop.xlane.xlu0 %564
      %v566 = vsel %vm562, %v559, 0.0
      %567 = vadd.xlane.f32.xlu0 %v566
      %v568 = vpop.xlane.xlu0 %567
      %v569 = vrcp.pop 64.0
      %v570 = vmul.f32 %v565, %v569
      %v571 = vmul.f32 %v568, %v569
      %v572 = vmul.f32 %v558, %v558
      %v573 = vmul.f32 %v559, %v559
      %v574 = vsel %vm562, %v572, 0.0
      %575 = vadd.xlane.f32.xlu0 %v574
      %v576 = vpop.xlane.xlu0 %575
      %v577 = vsel %vm562, %v573, 0.0
      %578 = vadd.xlane.f32.xlu0 %v577
      %v579 = vpop.xlane.xlu0 %578
      %v580 = vmul.f32 %v576, %v569
      %v581 = vmul.f32 %v579, %v569
      %v582 = vmul.f32 %v570, %v570
      %v583 = vmul.f32 %v571, %v571
      %v584 = vsub.f32 %v580, %v582
      %v585 = vsub.f32 %v581, %v583
      %v586 = vmax.f32 %v584, 0.0
      %v587 = vmax.f32 %v585, 0.0
      %v588 = vsub.f32 %v558, %v570
      %v589 = vsub.f32 %v559, %v571
      %v590 = vadd.f32 %v586, 1e-05
      %v591 = vadd.f32 %v587, 1e-05
      %v592 = vrsqrt.pop %v590
      %v593 = vrsqrt.pop %v591
      %v594 = vmul.f32 %v588, %v592
      %v595 = vmul.f32 %v589, %v593
      %v597 = vlaneseq
      %v598 = vshrl.u32 %v597, 7
      %v599 = vsub.s32 0, %v598
      %v600 = vrot.slane %v560, %v599
      %v602 = vmul.f32 %v594, %v600
      %v603 = vmul.f32 %v595, %v600
      %v605 = vlaneseq
      %v606 = vshrl.u32 %v605, 7
      %v607 = vsub.s32 0, %v606
      %v608 = vrot.slane %v561, %v607
      %v610 = vadd.f32 %v602, %v608
      %v611 = vadd.f32 %v603, %v608
      %v612 = vmax.f32 %v610, 0.0
      %v613 = vmax.f32 %v611, 0.0
      %v614 = vld [vmem:[%s5] sm:$0xf]
      %v615 = vld [vmem:[%s5 + $0x4] sm:$0xf]
      %v616 = vld [vmem:[%s5 + $0x8] sm:$0xf]
      %v617 = vld [vmem:[%s5 + $0xc] sm:$0xf]
      %v618 = vld [vmem:[%s5 + $0x10] sm:$0xf]
      %v619 = vld [vmem:[%s5 + $0x14] sm:$0xf]
      %v620 = vld [vmem:[%s5 + $0x18] sm:$0xf]
      %v621 = vld [vmem:[%s5 + $0x1c] sm:$0xf]
      %v622 = vld [vmem:[%s6] sm:$0x1]
      %v623 = vpack.c.bf16 %v613, %v612
      %v625 = vlaneseq
      %v626 = vshrl.u32 %v625, 7
      %v627 = vsub.s32 0, %v626
      %v628 = vrot.slane %v622, %v627
      %v638 = vunpack.c.l.b16 %v614
      %v639 = vunpack.c.l.b16 %v615
      %v640 = vunpack.c.l.b16 %v616
      %v641 = vunpack.c.l.b16 %v617
      %v642 = vunpack.c.l.b16 %v618
      %v643 = vunpack.c.l.b16 %v619
      %v644 = vunpack.c.l.b16 %v620
      %v645 = vunpack.c.l.b16 %v621
      %v646 = vpack.c.b16 %v639, %v638
      %v647 = vpack.c.b16 %v641, %v640
      %v648 = vpack.c.b16 %v643, %v642
      %v649 = vpack.c.b16 %v645, %v644
      %v655 = vsel %vm562, %v623, 0
      %657 = vmatprep.subr.bf16.mxu0 0
      %658 = vmatpush1.bf16.msra.mxu0 0
      %659 = vmatprep.subr.bf16.mxu0 0
      %660 = vmatpush1.bf16.msra.mxu0 0
      %661 = vmatprep.subr.bf16.mxu0 0
      %662 = vmatpush1.bf16.msra.mxu0 0
      %663 = vmatprep.subr.bf16.mxu0 0
      %664 = vmatpush1.bf16.msra.mxu0 0
      %665 = vmatprep.subr.bf16.mxu0 0
      %666 = vmatpush1.bf16.msra.mxu0 %v649
      %667 = vmatprep.subr.bf16.mxu0 0
      %668 = vmatpush1.bf16.msra.mxu0 %v648
      %669 = vmatprep.subr.bf16.mxu0 0
      %670 = vmatpush1.bf16.msra.mxu0 %v647
      %671 = vmatprep.subr.bf16.mxu0 0
      %672 = vmatpush1.bf16.msra.mxu0 %v646
      %673 = vmatprep.subr.bf16.mxu0 0
      %674 = vmatpush2.bf16.msra.mxu0 0
      %675 = vmatprep.subr.bf16.mxu0 0
      %676 = vmatpush2.bf16.msra.mxu0 0
      %677 = vmatprep.subr.bf16.mxu0 0
      %678 = vmatpush2.bf16.msra.mxu0 0
      %679 = vmatprep.subr.bf16.mxu0 0
      %680 = vmatpush2.bf16.msra.mxu0 0
      %681 = vmatprep.subr.bf16.mxu0 0
      %682 = vmatpush2.bf16.msra.mxu0 0
      %683 = vmatprep.subr.bf16.mxu0 0
      %684 = vmatpush2.bf16.msra.mxu0 0
      %685 = vmatprep.subr.bf16.mxu0 0
      %686 = vmatpush2.bf16.msra.mxu0 0
      %687 = vmatprep.subr.bf16.mxu0 0
      %688 = vmatpush2.bf16.msra.mxu0 0
      %689 = vmatprep.mubr.bf16.mxu0 0
      %690 = vmatmul.mubr.bf16.gmra.mxu0 %v655
      %v691 = vpop.f32.mrf.mxu0
      %v692 = vadd.f32 %v628, %v691
      %v693 = vpop.f32.mrf.mxu0
      %v694 = vpop.f32.mrf.mxu0
      %v695 = vadd.f32 %v628, %v694
      %v696 = vpop.f32.mrf.mxu0
      %697 = vdwg.mxu0
      %v698 = vld [vmem:[%s7] sm:$0x1]
      %v699 = vld [vmem:[%s8] sm:$0x1]
      %700 = vadd.xlane.f32.xlu0 %v692
      %v701 = vpop.xlane.xlu0 %700
      %702 = vadd.xlane.f32.xlu0 %v695
      %v703 = vpop.xlane.xlu0 %702
      %v704 = vrcp.pop 128.0
      %v705 = vmul.f32 %v701, %v704
      %v706 = vmul.f32 %v703, %v704
      %v707 = vmul.f32 %v692, %v692
      %v708 = vmul.f32 %v695, %v695
      %709 = vadd.xlane.f32.xlu0 %v707
      %v710 = vpop.xlane.xlu0 %709
      %711 = vadd.xlane.f32.xlu0 %v708
      %v712 = vpop.xlane.xlu0 %711
      %v713 = vmul.f32 %v710, %v704
      %v714 = vmul.f32 %v712, %v704
      %v715 = vmul.f32 %v705, %v705
      %v716 = vmul.f32 %v706, %v706
      %v717 = vsub.f32 %v713, %v715
      %v718 = vsub.f32 %v714, %v716
      %v719 = vmax.f32 %v717, 0.0
      %v720 = vmax.f32 %v718, 0.0
      %v721 = vsub.f32 %v692, %v705
      %v722 = vsub.f32 %v695, %v706
      %v723 = vadd.f32 %v719, 1e-05
      %v724 = vadd.f32 %v720, 1e-05
      %v725 = vrsqrt.pop %v723
      %v726 = vrsqrt.pop %v724
      %v727 = vmul.f32 %v721, %v725
      %v728 = vmul.f32 %v722, %v726
      %v730 = vlaneseq
      %v731 = vshrl.u32 %v730, 7
      %v732 = vsub.s32 0, %v731
      %v733 = vrot.slane %v698, %v732
      %v735 = vmul.f32 %v727, %v733
      %v736 = vmul.f32 %v728, %v733
      %v738 = vlaneseq
      %v739 = vshrl.u32 %v738, 7
      %v740 = vsub.s32 0, %v739
      %v741 = vrot.slane %v699, %v740
      %v743 = vadd.f32 %v735, %v741
      %v744 = vadd.f32 %v736, %v741
      %v745 = vmax.f32 %v743, 0.0
      %v746 = vmax.f32 %v744, 0.0
      %v747 = vld [vmem:[%s9] sm:$0xff]
      %v748 = vld [vmem:[%s9 + $0x8] sm:$0xff]
      %v749 = vld [vmem:[%s9 + $0x10] sm:$0xff]
      %v750 = vld [vmem:[%s9 + $0x18] sm:$0xff]
      %v751 = vld [vmem:[%s9 + $0x20] sm:$0xff]
      %v752 = vld [vmem:[%s9 + $0x28] sm:$0xff]
      %v753 = vld [vmem:[%s9 + $0x30] sm:$0xff]
      %v754 = vld [vmem:[%s9 + $0x38] sm:$0xff]
      %v755 = vld [vmem:[%s9 + $0x40] sm:$0xff]
      %v756 = vld [vmem:[%s9 + $0x48] sm:$0xff]
      %v757 = vld [vmem:[%s9 + $0x50] sm:$0xff]
      %v758 = vld [vmem:[%s9 + $0x58] sm:$0xff]
      %v759 = vld [vmem:[%s9 + $0x60] sm:$0xff]
      %v760 = vld [vmem:[%s9 + $0x68] sm:$0xff]
      %v761 = vld [vmem:[%s9 + $0x70] sm:$0xff]
      %v762 = vld [vmem:[%s9 + $0x78] sm:$0xff]
      %v763 = vld [vmem:[%s9 + $0x80] sm:$0xff]
      %v764 = vld [vmem:[%s9 + $0x88] sm:$0xff]
      %v765 = vld [vmem:[%s9 + $0x90] sm:$0xff]
      %v766 = vld [vmem:[%s9 + $0x98] sm:$0xff]
      %v767 = vld [vmem:[%s9 + $0xa0] sm:$0xff]
      %v768 = vld [vmem:[%s9 + $0xa8] sm:$0xff]
      %v769 = vld [vmem:[%s9 + $0xb0] sm:$0xff]
      %v770 = vld [vmem:[%s9 + $0xb8] sm:$0xff]
      %v771 = vld [vmem:[%s9 + $0xc0] sm:$0xff]
      %v772 = vld [vmem:[%s9 + $0xc8] sm:$0xff]
      %v773 = vld [vmem:[%s9 + $0xd0] sm:$0xff]
      %v774 = vld [vmem:[%s9 + $0xd8] sm:$0xff]
      %v775 = vld [vmem:[%s9 + $0xe0] sm:$0xff]
      %v776 = vld [vmem:[%s9 + $0xe8] sm:$0xff]
      %v777 = vld [vmem:[%s9 + $0xf0] sm:$0xff]
      %v778 = vld [vmem:[%s9 + $0xf8] sm:$0xff]
      %v779 = vld [vmem:[%s9 + $0x100] sm:$0xff]
      %v780 = vld [vmem:[%s9 + $0x108] sm:$0xff]
      %v781 = vld [vmem:[%s9 + $0x110] sm:$0xff]
      %v782 = vld [vmem:[%s9 + $0x118] sm:$0xff]
      %v783 = vld [vmem:[%s9 + $0x120] sm:$0xff]
      %v784 = vld [vmem:[%s9 + $0x128] sm:$0xff]
      %v785 = vld [vmem:[%s9 + $0x130] sm:$0xff]
      %v786 = vld [vmem:[%s9 + $0x138] sm:$0xff]
      %v787 = vld [vmem:[%s9 + $0x140] sm:$0xff]
      %v788 = vld [vmem:[%s9 + $0x148] sm:$0xff]
      %v789 = vld [vmem:[%s9 + $0x150] sm:$0xff]
      %v790 = vld [vmem:[%s9 + $0x158] sm:$0xff]
      %v791 = vld [vmem:[%s9 + $0x160] sm:$0xff]
      %v792 = vld [vmem:[%s9 + $0x168] sm:$0xff]
      %v793 = vld [vmem:[%s9 + $0x170] sm:$0xff]
      %v794 = vld [vmem:[%s9 + $0x178] sm:$0xff]
      %v795 = vld [vmem:[%s9 + $0x180] sm:$0xff]
      %v796 = vld [vmem:[%s9 + $0x188] sm:$0xff]
      %v797 = vld [vmem:[%s9 + $0x190] sm:$0xff]
      %v798 = vld [vmem:[%s9 + $0x198] sm:$0xff]
      %v799 = vld [vmem:[%s9 + $0x1a0] sm:$0xff]
      %v800 = vld [vmem:[%s9 + $0x1a8] sm:$0xff]
      %v801 = vld [vmem:[%s9 + $0x1b0] sm:$0xff]
      %v802 = vld [vmem:[%s9 + $0x1b8] sm:$0xff]
      %v803 = vld [vmem:[%s9 + $0x1c0] sm:$0xff]
      %v804 = vld [vmem:[%s9 + $0x1c8] sm:$0xff]
      %v805 = vld [vmem:[%s9 + $0x1d0] sm:$0xff]
      %v806 = vld [vmem:[%s9 + $0x1d8] sm:$0xff]
      %v807 = vld [vmem:[%s9 + $0x1e0] sm:$0xff]
      %v808 = vld [vmem:[%s9 + $0x1e8] sm:$0xff]
      %v809 = vld [vmem:[%s9 + $0x1f0] sm:$0xff]
      %v810 = vld [vmem:[%s9 + $0x1f8] sm:$0xff]
      %v811 = vld [vmem:[%s10] sm:$0xff]
      %v812 = vpack.c.bf16 %v746, %v745
      %v814 = vlaneseq
      %v815 = vshrl.u32 %v814, 7
      %v816 = vsub.s32 0, %v815
      %v817 = vrot.slane %v811, %v816
      %v818 = vlaneseq
      %v819 = vshrl.u32 %v818, 7
      %v820 = vsub.s32 1, %v819
      %v821 = vrot.slane %v811, %v820
      %v822 = vlaneseq
      %v823 = vshrl.u32 %v822, 7
      %v824 = vsub.s32 2, %v823
      %v825 = vrot.slane %v811, %v824
      %v826 = vlaneseq
      %v827 = vshrl.u32 %v826, 7
      %v828 = vsub.s32 3, %v827
      %v829 = vrot.slane %v811, %v828
      %v830 = vlaneseq
      %v831 = vshrl.u32 %v830, 7
      %v832 = vsub.s32 4, %v831
      %v833 = vrot.slane %v811, %v832
      %v834 = vlaneseq
      %v835 = vshrl.u32 %v834, 7
      %v836 = vsub.s32 5, %v835
      %v837 = vrot.slane %v811, %v836
      %v838 = vlaneseq
      %v839 = vshrl.u32 %v838, 7
      %v840 = vsub.s32 6, %v839
      %v841 = vrot.slane %v811, %v840
      %v842 = vlaneseq
      %v843 = vshrl.u32 %v842, 7
      %v844 = vsub.s32 7, %v843
      %v845 = vrot.slane %v811, %v844
      %v918 = vunpack.c.l.b16 %v747
      %v919 = vunpack.c.h.b16 %v747
      %v920 = vunpack.c.l.b16 %v748
      %v921 = vunpack.c.h.b16 %v748
      %v922 = vunpack.c.l.b16 %v749
      %v923 = vunpack.c.h.b16 %v749
      %v924 = vunpack.c.l.b16 %v750
      %v925 = vunpack.c.h.b16 %v750
      %v926 = vunpack.c.l.b16 %v751
      %v927 = vunpack.c.h.b16 %v751
      %v928 = vunpack.c.l.b16 %v752
      %v929 = vunpack.c.h.b16 %v752
      %v930 = vunpack.c.l.b16 %v753
      %v931 = vunpack.c.h.b16 %v753
      %v932 = vunpack.c.l.b16 %v754
      %v933 = vunpack.c.h.b16 %v754
      %v934 = vunpack.c.l.b16 %v755
      %v935 = vunpack.c.h.b16 %v755
      %v936 = vunpack.c.l.b16 %v756
      %v937 = vunpack.c.h.b16 %v756
      %v938 = vunpack.c.l.b16 %v757
      %v939 = vunpack.c.h.b16 %v757
      %v940 = vunpack.c.l.b16 %v758
      %v941 = vunpack.c.h.b16 %v758
      %v942 = vunpack.c.l.b16 %v759
      %v943 = vunpack.c.h.b16 %v759
      %v944 = vunpack.c.l.b16 %v760
      %v945 = vunpack.c.h.b16 %v760
      %v946 = vunpack.c.l.b16 %v761
      %v947 = vunpack.c.h.b16 %v761
      %v948 = vunpack.c.l.b16 %v762
      %v949 = vunpack.c.h.b16 %v762
      %v950 = vunpack.c.l.b16 %v763
      %v951 = vunpack.c.h.b16 %v763
      %v952 = vunpack.c.l.b16 %v764
      %v953 = vunpack.c.h.b16 %v764
      %v954 = vunpack.c.l.b16 %v765
      %v955 = vunpack.c.h.b16 %v765
      %v956 = vunpack.c.l.b16 %v766
      %v957 = vunpack.c.h.b16 %v766
      %v958 = vunpack.c.l.b16 %v767
      %v959 = vunpack.c.h.b16 %v767
      %v960 = vunpack.c.l.b16 %v768
      %v961 = vunpack.c.h.b16 %v768
      %v962 = vunpack.c.l.b16 %v769
      %v963 = vunpack.c.h.b16 %v769
      %v964 = vunpack.c.l.b16 %v770
      %v965 = vunpack.c.h.b16 %v770
      %v966 = vunpack.c.l.b16 %v771
      %v967 = vunpack.c.h.b16 %v771
      %v968 = vunpack.c.l.b16 %v772
      %v969 = vunpack.c.h.b16 %v772
      %v970 = vunpack.c.l.b16 %v773
      %v971 = vunpack.c.h.b16 %v773
      %v972 = vunpack.c.l.b16 %v774
      %v973 = vunpack.c.h.b16 %v774
      %v974 = vunpack.c.l.b16 %v775
      %v975 = vunpack.c.h.b16 %v775
      %v976 = vunpack.c.l.b16 %v776
      %v977 = vunpack.c.h.b16 %v776
      %v978 = vunpack.c.l.b16 %v777
      %v979 = vunpack.c.h.b16 %v777
      %v980 = vunpack.c.l.b16 %v778
      %v981 = vunpack.c.h.b16 %v778
      %v982 = vunpack.c.l.b16 %v779
      %v983 = vunpack.c.h.b16 %v779
      %v984 = vunpack.c.l.b16 %v780
      %v985 = vunpack.c.h.b16 %v780
      %v986 = vunpack.c.l.b16 %v781
      %v987 = vunpack.c.h.b16 %v781
      %v988 = vunpack.c.l.b16 %v782
      %v989 = vunpack.c.h.b16 %v782
      %v990 = vunpack.c.l.b16 %v783
      %v991 = vunpack.c.h.b16 %v783
      %v992 = vunpack.c.l.b16 %v784
      %v993 = vunpack.c.h.b16 %v784
      %v994 = vunpack.c.l.b16 %v785
      %v995 = vunpack.c.h.b16 %v785
      %v996 = vunpack.c.l.b16 %v786
      %v997 = vunpack.c.h.b16 %v786
      %v998 = vunpack.c.l.b16 %v787
      %v999 = vunpack.c.h.b16 %v787
      %v1000 = vunpack.c.l.b16 %v788
      %v1001 = vunpack.c.h.b16 %v788
      %v1002 = vunpack.c.l.b16 %v789
      %v1003 = vunpack.c.h.b16 %v789
      %v1004 = vunpack.c.l.b16 %v790
      %v1005 = vunpack.c.h.b16 %v790
      %v1006 = vunpack.c.l.b16 %v791
      %v1007 = vunpack.c.h.b16 %v791
      %v1008 = vunpack.c.l.b16 %v792
      %v1009 = vunpack.c.h.b16 %v792
      %v1010 = vunpack.c.l.b16 %v793
      %v1011 = vunpack.c.h.b16 %v793
      %v1012 = vunpack.c.l.b16 %v794
      %v1013 = vunpack.c.h.b16 %v794
      %v1014 = vunpack.c.l.b16 %v795
      %v1015 = vunpack.c.h.b16 %v795
      %v1016 = vunpack.c.l.b16 %v796
      %v1017 = vunpack.c.h.b16 %v796
      %v1018 = vunpack.c.l.b16 %v797
      %v1019 = vunpack.c.h.b16 %v797
      %v1020 = vunpack.c.l.b16 %v798
      %v1021 = vunpack.c.h.b16 %v798
      %v1022 = vunpack.c.l.b16 %v799
      %v1023 = vunpack.c.h.b16 %v799
      %v1024 = vunpack.c.l.b16 %v800
      %v1025 = vunpack.c.h.b16 %v800
      %v1026 = vunpack.c.l.b16 %v801
      %v1027 = vunpack.c.h.b16 %v801
      %v1028 = vunpack.c.l.b16 %v802
      %v1029 = vunpack.c.h.b16 %v802
      %v1030 = vunpack.c.l.b16 %v803
      %v1031 = vunpack.c.h.b16 %v803
      %v1032 = vunpack.c.l.b16 %v804
      %v1033 = vunpack.c.h.b16 %v804
      %v1034 = vunpack.c.l.b16 %v805
      %v1035 = vunpack.c.h.b16 %v805
      %v1036 = vunpack.c.l.b16 %v806
      %v1037 = vunpack.c.h.b16 %v806
      %v1038 = vunpack.c.l.b16 %v807
      %v1039 = vunpack.c.h.b16 %v807
      %v1040 = vunpack.c.l.b16 %v808
      %v1041 = vunpack.c.h.b16 %v808
      %v1042 = vunpack.c.l.b16 %v809
      %v1043 = vunpack.c.h.b16 %v809
      %v1044 = vunpack.c.l.b16 %v810
      %v1045 = vunpack.c.h.b16 %v810
      %v1046 = vpack.c.b16 %v926, %v918
      %v1047 = vpack.c.b16 %v927, %v919
      %v1048 = vpack.c.b16 %v928, %v920
      %v1049 = vpack.c.b16 %v929, %v921
      %v1050 = vpack.c.b16 %v930, %v922
      %v1051 = vpack.c.b16 %v931, %v923
      %v1052 = vpack.c.b16 %v932, %v924
      %v1053 = vpack.c.b16 %v933, %v925
      %v1054 = vpack.c.b16 %v942, %v934
      %v1055 = vpack.c.b16 %v943, %v935
      %v1056 = vpack.c.b16 %v944, %v936
      %v1057 = vpack.c.b16 %v945, %v937
      %v1058 = vpack.c.b16 %v946, %v938
      %v1059 = vpack.c.b16 %v947, %v939
      %v1060 = vpack.c.b16 %v948, %v940
      %v1061 = vpack.c.b16 %v949, %v941
      %v1062 = vpack.c.b16 %v958, %v950
      %v1063 = vpack.c.b16 %v959, %v951
      %v1064 = vpack.c.b16 %v960, %v952
      %v1065 = vpack.c.b16 %v961, %v953
      %v1066 = vpack.c.b16 %v962, %v954
      %v1067 = vpack.c.b16 %v963, %v955
      %v1068 = vpack.c.b16 %v964, %v956
      %v1069 = vpack.c.b16 %v965, %v957
      %v1070 = vpack.c.b16 %v974, %v966
      %v1071 = vpack.c.b16 %v975, %v967
      %v1072 = vpack.c.b16 %v976, %v968
      %v1073 = vpack.c.b16 %v977, %v969
      %v1074 = vpack.c.b16 %v978, %v970
      %v1075 = vpack.c.b16 %v979, %v971
      %v1076 = vpack.c.b16 %v980, %v972
      %v1077 = vpack.c.b16 %v981, %v973
      %v1078 = vpack.c.b16 %v990, %v982
      %v1079 = vpack.c.b16 %v991, %v983
      %v1080 = vpack.c.b16 %v992, %v984
      %v1081 = vpack.c.b16 %v993, %v985
      %v1082 = vpack.c.b16 %v994, %v986
      %v1083 = vpack.c.b16 %v995, %v987
      %v1084 = vpack.c.b16 %v996, %v988
      %v1085 = vpack.c.b16 %v997, %v989
      %v1086 = vpack.c.b16 %v1006, %v998
      %v1087 = vpack.c.b16 %v1007, %v999
      %v1088 = vpack.c.b16 %v1008, %v1000
      %v1089 = vpack.c.b16 %v1009, %v1001
      %v1090 = vpack.c.b16 %v1010, %v1002
      %v1091 = vpack.c.b16 %v1011, %v1003
      %v1092 = vpack.c.b16 %v1012, %v1004
      %v1093 = vpack.c.b16 %v1013, %v1005
      %v1094 = vpack.c.b16 %v1022, %v1014
      %v1095 = vpack.c.b16 %v1023, %v1015
      %v1096 = vpack.c.b16 %v1024, %v1016
      %v1097 = vpack.c.b16 %v1025, %v1017
      %v1098 = vpack.c.b16 %v1026, %v1018
      %v1099 = vpack.c.b16 %v1027, %v1019
      %v1100 = vpack.c.b16 %v1028, %v1020
      %v1101 = vpack.c.b16 %v1029, %v1021
      %v1102 = vpack.c.b16 %v1038, %v1030
      %v1103 = vpack.c.b16 %v1039, %v1031
      %v1104 = vpack.c.b16 %v1040, %v1032
      %v1105 = vpack.c.b16 %v1041, %v1033
      %v1106 = vpack.c.b16 %v1042, %v1034
      %v1107 = vpack.c.b16 %v1043, %v1035
      %v1108 = vpack.c.b16 %v1044, %v1036
      %v1109 = vpack.c.b16 %v1045, %v1037
      %1174 = vmatprep.subr.bf16.mxu0 %v1103
      %1175 = vmatpush1.bf16.msra.mxu0 %v1102
      %1176 = vmatprep.subr.bf16.mxu0 %v1095
      %1177 = vmatpush1.bf16.msra.mxu0 %v1094
      %1178 = vmatprep.subr.bf16.mxu0 %v1087
      %1179 = vmatpush1.bf16.msra.mxu0 %v1086
      %1180 = vmatprep.subr.bf16.mxu0 %v1079
      %1181 = vmatpush1.bf16.msra.mxu0 %v1078
      %1182 = vmatprep.subr.bf16.mxu0 %v1071
      %1183 = vmatpush1.bf16.msra.mxu0 %v1070
      %1184 = vmatprep.subr.bf16.mxu0 %v1063
      %1185 = vmatpush1.bf16.msra.mxu0 %v1062
      %1186 = vmatprep.subr.bf16.mxu0 %v1055
      %1187 = vmatpush1.bf16.msra.mxu0 %v1054
      %1188 = vmatprep.subr.bf16.mxu0 %v1047
      %1189 = vmatpush1.bf16.msra.mxu0 %v1046
      %1190 = vmatprep.subr.bf16.mxu0 0
      %1191 = vmatpush2.bf16.msra.mxu0 0
      %1192 = vmatprep.subr.bf16.mxu0 0
      %1193 = vmatpush2.bf16.msra.mxu0 0
      %1194 = vmatprep.subr.bf16.mxu0 0
      %1195 = vmatpush2.bf16.msra.mxu0 0
      %1196 = vmatprep.subr.bf16.mxu0 0
      %1197 = vmatpush2.bf16.msra.mxu0 0
      %1198 = vmatprep.subr.bf16.mxu0 0
      %1199 = vmatpush2.bf16.msra.mxu0 0
      %1200 = vmatprep.subr.bf16.mxu0 0
      %1201 = vmatpush2.bf16.msra.mxu0 0
      %1202 = vmatprep.subr.bf16.mxu0 0
      %1203 = vmatpush2.bf16.msra.mxu0 0
      %1204 = vmatprep.subr.bf16.mxu0 0
      %1205 = vmatpush2.bf16.msra.mxu0 0
      %1206 = vmatprep.mubr.bf16.mxu0 0
      %1207 = vmatmul.mubr.bf16.gmra.mxu0 %v812
      %v1208 = vpop.f32.mrf.mxu0
      %v1209 = vadd.f32 %v817, %v1208
      %v1210 = vpop.f32.mrf.mxu0
      %v1211 = vadd.f32 %v821, %v1210
      %v1212 = vpop.f32.mrf.mxu0
      %v1213 = vadd.f32 %v817, %v1212
      %v1214 = vpop.f32.mrf.mxu0
      %v1215 = vadd.f32 %v821, %v1214
      %1216 = vdwg.mxu0
      %1217 = vmatprep.subr.bf16.mxu0 %v1105
      %1218 = vmatpush1.bf16.msra.mxu0 %v1104
      %1219 = vmatprep.subr.bf16.mxu0 %v1097
      %1220 = vmatpush1.bf16.msra.mxu0 %v1096
      %1221 = vmatprep.subr.bf16.mxu0 %v1089
      %1222 = vmatpush1.bf16.msra.mxu0 %v1088
      %1223 = vmatprep.subr.bf16.mxu0 %v1081
      %1224 = vmatpush1.bf16.msra.mxu0 %v1080
      %1225 = vmatprep.subr.bf16.mxu0 %v1073
      %1226 = vmatpush1.bf16.msra.mxu0 %v1072
      %1227 = vmatprep.subr.bf16.mxu0 %v1065
      %1228 = vmatpush1.bf16.msra.mxu0 %v1064
      %1229 = vmatprep.subr.bf16.mxu0 %v1057
      %1230 = vmatpush1.bf16.msra.mxu0 %v1056
      %1231 = vmatprep.subr.bf16.mxu0 %v1049
      %1232 = vmatpush1.bf16.msra.mxu0 %v1048
      %1233 = vmatprep.subr.bf16.mxu0 0
      %1234 = vmatpush2.bf16.msra.mxu0 0
      %1235 = vmatprep.subr.bf16.mxu0 0
      %1236 = vmatpush2.bf16.msra.mxu0 0
      %1237 = vmatprep.subr.bf16.mxu0 0
      %1238 = vmatpush2.bf16.msra.mxu0 0
      %1239 = vmatprep.subr.bf16.mxu0 0
      %1240 = vmatpush2.bf16.msra.mxu0 0
      %1241 = vmatprep.subr.bf16.mxu0 0
      %1242 = vmatpush2.bf16.msra.mxu0 0
      %1243 = vmatprep.subr.bf16.mxu0 0
      %1244 = vmatpush2.bf16.msra.mxu0 0
      %1245 = vmatprep.subr.bf16.mxu0 0
      %1246 = vmatpush2.bf16.msra.mxu0 0
      %1247 = vmatprep.subr.bf16.mxu0 0
      %1248 = vmatpush2.bf16.msra.mxu0 0
      %1249 = vmatprep.mubr.bf16.mxu0 0
      %1250 = vmatmul.mubr.bf16.gmra.mxu0 %v812
      %v1251 = vpop.f32.mrf.mxu0
      %v1252 = vadd.f32 %v825, %v1251
      %v1253 = vpop.f32.mrf.mxu0
      %v1254 = vadd.f32 %v829, %v1253
      %v1255 = vpop.f32.mrf.mxu0
      %v1256 = vadd.f32 %v825, %v1255
      %v1257 = vpop.f32.mrf.mxu0
      %v1258 = vadd.f32 %v829, %v1257
      %1259 = vdwg.mxu0
      %1260 = vmatprep.subr.bf16.mxu0 %v1107
      %1261 = vmatpush1.bf16.msra.mxu0 %v1106
      %1262 = vmatprep.subr.bf16.mxu0 %v1099
      %1263 = vmatpush1.bf16.msra.mxu0 %v1098
      %1264 = vmatprep.subr.bf16.mxu0 %v1091
      %1265 = vmatpush1.bf16.msra.mxu0 %v1090
      %1266 = vmatprep.subr.bf16.mxu0 %v1083
      %1267 = vmatpush1.bf16.msra.mxu0 %v1082
      %1268 = vmatprep.subr.bf16.mxu0 %v1075
      %1269 = vmatpush1.bf16.msra.mxu0 %v1074
      %1270 = vmatprep.subr.bf16.mxu0 %v1067
      %1271 = vmatpush1.bf16.msra.mxu0 %v1066
      %1272 = vmatprep.subr.bf16.mxu0 %v1059
      %1273 = vmatpush1.bf16.msra.mxu0 %v1058
      %1274 = vmatprep.subr.bf16.mxu0 %v1051
      %1275 = vmatpush1.bf16.msra.mxu0 %v1050
      %1276 = vmatprep.subr.bf16.mxu0 0
      %1277 = vmatpush2.bf16.msra.mxu0 0
      %1278 = vmatprep.subr.bf16.mxu0 0
      %1279 = vmatpush2.bf16.msra.mxu0 0
      %1280 = vmatprep.subr.bf16.mxu0 0
      %1281 = vmatpush2.bf16.msra.mxu0 0
      %1282 = vmatprep.subr.bf16.mxu0 0
      %1283 = vmatpush2.bf16.msra.mxu0 0
      %1284 = vmatprep.subr.bf16.mxu0 0
      %1285 = vmatpush2.bf16.msra.mxu0 0
      %1286 = vmatprep.subr.bf16.mxu0 0
      %1287 = vmatpush2.bf16.msra.mxu0 0
      %1288 = vmatprep.subr.bf16.mxu0 0
      %1289 = vmatpush2.bf16.msra.mxu0 0
      %1290 = vmatprep.subr.bf16.mxu0 0
      %1291 = vmatpush2.bf16.msra.mxu0 0
      %1292 = vmatprep.mubr.bf16.mxu0 0
      %1293 = vmatmul.mubr.bf16.gmra.mxu0 %v812
      %v1294 = vpop.f32.mrf.mxu0
      %v1295 = vadd.f32 %v833, %v1294
      %v1296 = vpop.f32.mrf.mxu0
      %v1297 = vadd.f32 %v837, %v1296
      %v1298 = vpop.f32.mrf.mxu0
      %v1299 = vadd.f32 %v833, %v1298
      %v1300 = vpop.f32.mrf.mxu0
      %v1301 = vadd.f32 %v837, %v1300
      %1302 = vdwg.mxu0
      %1303 = vmatprep.subr.bf16.mxu0 %v1109
      %1304 = vmatpush1.bf16.msra.mxu0 %v1108
      %1305 = vmatprep.subr.bf16.mxu0 %v1101
      %1306 = vmatpush1.bf16.msra.mxu0 %v1100
      %1307 = vmatprep.subr.bf16.mxu0 %v1093
      %1308 = vmatpush1.bf16.msra.mxu0 %v1092
      %1309 = vmatprep.subr.bf16.mxu0 %v1085
      %1310 = vmatpush1.bf16.msra.mxu0 %v1084
      %1311 = vmatprep.subr.bf16.mxu0 %v1077
      %1312 = vmatpush1.bf16.msra.mxu0 %v1076
      %1313 = vmatprep.subr.bf16.mxu0 %v1069
      %1314 = vmatpush1.bf16.msra.mxu0 %v1068
      %1315 = vmatprep.subr.bf16.mxu0 %v1061
      %1316 = vmatpush1.bf16.msra.mxu0 %v1060
      %1317 = vmatprep.subr.bf16.mxu0 %v1053
      %1318 = vmatpush1.bf16.msra.mxu0 %v1052
      %1319 = vmatprep.subr.bf16.mxu0 0
      %1320 = vmatpush2.bf16.msra.mxu0 0
      %1321 = vmatprep.subr.bf16.mxu0 0
      %1322 = vmatpush2.bf16.msra.mxu0 0
      %1323 = vmatprep.subr.bf16.mxu0 0
      %1324 = vmatpush2.bf16.msra.mxu0 0
      %1325 = vmatprep.subr.bf16.mxu0 0
      %1326 = vmatpush2.bf16.msra.mxu0 0
      %1327 = vmatprep.subr.bf16.mxu0 0
      %1328 = vmatpush2.bf16.msra.mxu0 0
      %1329 = vmatprep.subr.bf16.mxu0 0
      %1330 = vmatpush2.bf16.msra.mxu0 0
      %1331 = vmatprep.subr.bf16.mxu0 0
      %1332 = vmatpush2.bf16.msra.mxu0 0
      %1333 = vmatprep.subr.bf16.mxu0 0
      %1334 = vmatpush2.bf16.msra.mxu0 0
      %1335 = vmatprep.mubr.bf16.mxu0 0
      %1336 = vmatmul.mubr.bf16.gmra.mxu0 %v812
      %v1337 = vpop.f32.mrf.mxu0
      %v1338 = vadd.f32 %v841, %v1337
      %v1339 = vpop.f32.mrf.mxu0
      %v1340 = vadd.f32 %v845, %v1339
      %v1341 = vpop.f32.mrf.mxu0
      %v1342 = vadd.f32 %v841, %v1341
      %v1343 = vpop.f32.mrf.mxu0
      %v1344 = vadd.f32 %v845, %v1343
      %1345 = vdwg.mxu0
      %v1346 = vld [vmem:[%s11] sm:$0xff]
      %v1347 = vld [vmem:[%s12] sm:$0xff]
      %v1348 = vadd.f32 %v1209, %v1211
      %v1349 = vadd.f32 %v1348, %v1252
      %v1350 = vadd.f32 %v1349, %v1254
      %v1351 = vadd.f32 %v1350, %v1295
      %v1352 = vadd.f32 %v1351, %v1297
      %v1353 = vadd.f32 %v1352, %v1338
      %v1354 = vadd.f32 %v1353, %v1340
      %1355 = vadd.xlane.f32.xlu0 %v1354
      %v1356 = vpop.xlane.xlu0 %1355
      %v1357 = vadd.f32 %v1213, %v1215
      %v1358 = vadd.f32 %v1357, %v1256
      %v1359 = vadd.f32 %v1358, %v1258
      %v1360 = vadd.f32 %v1359, %v1299
      %v1361 = vadd.f32 %v1360, %v1301
      %v1362 = vadd.f32 %v1361, %v1342
      %v1363 = vadd.f32 %v1362, %v1344
      %1364 = vadd.xlane.f32.xlu0 %v1363
      %v1365 = vpop.xlane.xlu0 %1364
      %v1366 = vrcp.pop 1024.0
      %v1367 = vmul.f32 %v1356, %v1366
      %v1368 = vmul.f32 %v1365, %v1366
      %v1369 = vmul.f32 %v1209, %v1209
      %v1370 = vmul.f32 %v1211, %v1211
      %v1371 = vmul.f32 %v1252, %v1252
      %v1372 = vmul.f32 %v1254, %v1254
      %v1373 = vmul.f32 %v1295, %v1295
      %v1374 = vmul.f32 %v1297, %v1297
      %v1375 = vmul.f32 %v1338, %v1338
      %v1376 = vmul.f32 %v1340, %v1340
      %v1377 = vmul.f32 %v1213, %v1213
      %v1378 = vmul.f32 %v1215, %v1215
      %v1379 = vmul.f32 %v1256, %v1256
      %v1380 = vmul.f32 %v1258, %v1258
      %v1381 = vmul.f32 %v1299, %v1299
      %v1382 = vmul.f32 %v1301, %v1301
      %v1383 = vmul.f32 %v1342, %v1342
      %v1384 = vmul.f32 %v1344, %v1344
      %v1385 = vadd.f32 %v1369, %v1370
      %v1386 = vadd.f32 %v1385, %v1371
      %v1387 = vadd.f32 %v1386, %v1372
      %v1388 = vadd.f32 %v1387, %v1373
      %v1389 = vadd.f32 %v1388, %v1374
      %v1390 = vadd.f32 %v1389, %v1375
      %v1391 = vadd.f32 %v1390, %v1376
      %1392 = vadd.xlane.f32.xlu0 %v1391
      %v1393 = vpop.xlane.xlu0 %1392
      %v1394 = vadd.f32 %v1377, %v1378
      %v1395 = vadd.f32 %v1394, %v1379
      %v1396 = vadd.f32 %v1395, %v1380
      %v1397 = vadd.f32 %v1396, %v1381
      %v1398 = vadd.f32 %v1397, %v1382
      %v1399 = vadd.f32 %v1398, %v1383
      %v1400 = vadd.f32 %v1399, %v1384
      %1401 = vadd.xlane.f32.xlu0 %v1400
      %v1402 = vpop.xlane.xlu0 %1401
      %v1403 = vmul.f32 %v1393, %v1366
      %v1404 = vmul.f32 %v1402, %v1366
      %v1405 = vmul.f32 %v1367, %v1367
      %v1406 = vmul.f32 %v1368, %v1368
      %v1407 = vsub.f32 %v1403, %v1405
      %v1408 = vsub.f32 %v1404, %v1406
      %v1409 = vmax.f32 %v1407, 0.0
      %v1410 = vmax.f32 %v1408, 0.0
      %v1411 = vsub.f32 %v1209, %v1367
      %v1412 = vsub.f32 %v1211, %v1367
      %v1413 = vsub.f32 %v1252, %v1367
      %v1414 = vsub.f32 %v1254, %v1367
      %v1415 = vsub.f32 %v1295, %v1367
      %v1416 = vsub.f32 %v1297, %v1367
      %v1417 = vsub.f32 %v1338, %v1367
      %v1418 = vsub.f32 %v1340, %v1367
      %v1419 = vsub.f32 %v1213, %v1368
      %v1420 = vsub.f32 %v1215, %v1368
      %v1421 = vsub.f32 %v1256, %v1368
      %v1422 = vsub.f32 %v1258, %v1368
      %v1423 = vsub.f32 %v1299, %v1368
      %v1424 = vsub.f32 %v1301, %v1368
      %v1425 = vsub.f32 %v1342, %v1368
      %v1426 = vsub.f32 %v1344, %v1368
      %v1427 = vadd.f32 %v1409, 1e-05
      %v1428 = vadd.f32 %v1410, 1e-05
      %v1429 = vrsqrt.pop %v1427
      %v1430 = vrsqrt.pop %v1428
      %v1431 = vmul.f32 %v1411, %v1429
      %v1432 = vmul.f32 %v1412, %v1429
      %v1433 = vmul.f32 %v1413, %v1429
      %v1434 = vmul.f32 %v1414, %v1429
      %v1435 = vmul.f32 %v1415, %v1429
      %v1436 = vmul.f32 %v1416, %v1429
      %v1437 = vmul.f32 %v1417, %v1429
      %v1438 = vmul.f32 %v1418, %v1429
      %v1439 = vmul.f32 %v1419, %v1430
      %v1440 = vmul.f32 %v1420, %v1430
      %v1441 = vmul.f32 %v1421, %v1430
      %v1442 = vmul.f32 %v1422, %v1430
      %v1443 = vmul.f32 %v1423, %v1430
      %v1444 = vmul.f32 %v1424, %v1430
      %v1445 = vmul.f32 %v1425, %v1430
      %v1446 = vmul.f32 %v1426, %v1430
      %v1448 = vlaneseq
      %v1449 = vshrl.u32 %v1448, 7
      %v1450 = vsub.s32 0, %v1449
      %v1451 = vrot.slane %v1346, %v1450
      %v1452 = vlaneseq
      %v1453 = vshrl.u32 %v1452, 7
      %v1454 = vsub.s32 1, %v1453
      %v1455 = vrot.slane %v1346, %v1454
      %v1456 = vlaneseq
      %v1457 = vshrl.u32 %v1456, 7
      %v1458 = vsub.s32 2, %v1457
      %v1459 = vrot.slane %v1346, %v1458
      %v1460 = vlaneseq
      %v1461 = vshrl.u32 %v1460, 7
      %v1462 = vsub.s32 3, %v1461
      %v1463 = vrot.slane %v1346, %v1462
      %v1464 = vlaneseq
      %v1465 = vshrl.u32 %v1464, 7
      %v1466 = vsub.s32 4, %v1465
      %v1467 = vrot.slane %v1346, %v1466
      %v1468 = vlaneseq
      %v1469 = vshrl.u32 %v1468, 7
      %v1470 = vsub.s32 5, %v1469
      %v1471 = vrot.slane %v1346, %v1470
      %v1472 = vlaneseq
      %v1473 = vshrl.u32 %v1472, 7
      %v1474 = vsub.s32 6, %v1473
      %v1475 = vrot.slane %v1346, %v1474
      %v1476 = vlaneseq
      %v1477 = vshrl.u32 %v1476, 7
      %v1478 = vsub.s32 7, %v1477
      %v1479 = vrot.slane %v1346, %v1478
      %v1488 = vmul.f32 %v1431, %v1451
      %v1489 = vmul.f32 %v1432, %v1455
      %v1490 = vmul.f32 %v1433, %v1459
      %v1491 = vmul.f32 %v1434, %v1463
      %v1492 = vmul.f32 %v1435, %v1467
      %v1493 = vmul.f32 %v1436, %v1471
      %v1494 = vmul.f32 %v1437, %v1475
      %v1495 = vmul.f32 %v1438, %v1479
      %v1496 = vmul.f32 %v1439, %v1451
      %v1497 = vmul.f32 %v1440, %v1455
      %v1498 = vmul.f32 %v1441, %v1459
      %v1499 = vmul.f32 %v1442, %v1463
      %v1500 = vmul.f32 %v1443, %v1467
      %v1501 = vmul.f32 %v1444, %v1471
      %v1502 = vmul.f32 %v1445, %v1475
      %v1503 = vmul.f32 %v1446, %v1479
      %v1505 = vlaneseq
      %v1506 = vshrl.u32 %v1505, 7
      %v1507 = vsub.s32 0, %v1506
      %v1508 = vrot.slane %v1347, %v1507
      %v1509 = vlaneseq
      %v1510 = vshrl.u32 %v1509, 7
      %v1511 = vsub.s32 1, %v1510
      %v1512 = vrot.slane %v1347, %v1511
      %v1513 = vlaneseq
      %v1514 = vshrl.u32 %v1513, 7
      %v1515 = vsub.s32 2, %v1514
      %v1516 = vrot.slane %v1347, %v1515
      %v1517 = vlaneseq
      %v1518 = vshrl.u32 %v1517, 7
      %v1519 = vsub.s32 3, %v1518
      %v1520 = vrot.slane %v1347, %v1519
      %v1521 = vlaneseq
      %v1522 = vshrl.u32 %v1521, 7
      %v1523 = vsub.s32 4, %v1522
      %v1524 = vrot.slane %v1347, %v1523
      %v1525 = vlaneseq
      %v1526 = vshrl.u32 %v1525, 7
      %v1527 = vsub.s32 5, %v1526
      %v1528 = vrot.slane %v1347, %v1527
      %v1529 = vlaneseq
      %v1530 = vshrl.u32 %v1529, 7
      %v1531 = vsub.s32 6, %v1530
      %v1532 = vrot.slane %v1347, %v1531
      %v1533 = vlaneseq
      %v1534 = vshrl.u32 %v1533, 7
      %v1535 = vsub.s32 7, %v1534
      %v1536 = vrot.slane %v1347, %v1535
      %v1545 = vadd.f32 %v1488, %v1508
      %v1546 = vadd.f32 %v1489, %v1512
      %v1547 = vadd.f32 %v1490, %v1516
      %v1548 = vadd.f32 %v1491, %v1520
      %v1549 = vadd.f32 %v1492, %v1524
      %v1550 = vadd.f32 %v1493, %v1528
      %v1551 = vadd.f32 %v1494, %v1532
      %v1552 = vadd.f32 %v1495, %v1536
      %v1553 = vadd.f32 %v1496, %v1508
      %v1554 = vadd.f32 %v1497, %v1512
      %v1555 = vadd.f32 %v1498, %v1516
      %v1556 = vadd.f32 %v1499, %v1520
      %v1557 = vadd.f32 %v1500, %v1524
      %v1558 = vadd.f32 %v1501, %v1528
      %v1559 = vadd.f32 %v1502, %v1532
      %v1560 = vadd.f32 %v1503, %v1536
      %1561 = vst [vmem:[%s497] sm:$0xff] %v1545
      %1562 = vst [vmem:[%s497 + $0x8] sm:$0xff] %v1546
      %1563 = vst [vmem:[%s497 + $0x10] sm:$0xff] %v1547
      %1564 = vst [vmem:[%s497 + $0x18] sm:$0xff] %v1548
      %1565 = vst [vmem:[%s497 + $0x20] sm:$0xff] %v1549
      %1566 = vst [vmem:[%s497 + $0x28] sm:$0xff] %v1550
      %1567 = vst [vmem:[%s497 + $0x30] sm:$0xff] %v1551
      %1568 = vst [vmem:[%s497 + $0x38] sm:$0xff] %v1552
      %1569 = vst [vmem:[%s497 + $0x40] sm:$0xff] %v1553
      %1570 = vst [vmem:[%s497 + $0x48] sm:$0xff] %v1554
      %1571 = vst [vmem:[%s497 + $0x50] sm:$0xff] %v1555
      %1572 = vst [vmem:[%s497 + $0x58] sm:$0xff] %v1556
      %1573 = vst [vmem:[%s497 + $0x60] sm:$0xff] %v1557
      %1574 = vst [vmem:[%s497 + $0x68] sm:$0xff] %v1558
      %1575 = vst [vmem:[%s497 + $0x70] sm:$0xff] %v1559
      %1576 = vst [vmem:[%s497 + $0x78] sm:$0xff] %v1560
      %s1577 = smul.u32 2, %s29
      %p1578 = scmp.lt.s32.totalorder %s28, 1
      %s1579 = scalar_select %p1578, %s28, 1
      %p1580 = scmp.lt.s32.totalorder %s1577, 7
      %s1581 = scalar_select %p1580, %s1577, 7
      %s1582 = smul.addr %s1581, 8
      %s1583 = smul.addr %s1579, 64
      %s1584 = sadd.s32 %s1582, %s1583
      %s1585 = smul.addr %s1584, 8
      %s1586 = scalar_lea.vmem %s13, %s1585
      // Predicated region
      $region73: #{pointnet_feat.3} parent=71 // pred_check
        %p1587 = pneg %p341
      $region74: #{pointnet_feat.3} parent=71 // pred_check_branch
        %1589 = sbr.rel (%p1587) target = $region76
      $region75: #{pointnet_feat.3} parent=71 // pred_region
        %s1590 = smul.u32 2, %s29
      $region76: #{pointnet_feat.3} parent=71 // pred_fallthru
        _
    $region72: #{pointnet_feat.3} parent=5 // pred_fallthru
      _
    %p1591 = scmp.le.s32.totalorder 2, %s19
    // Predicated region
    $region77: #{pointnet_feat.3} parent=5 // pred_check
      %p1592 = pneg %p1591
    $region78: #{pointnet_feat.3} parent=5 // pred_check_branch
      %1594 = sbr.rel (%p1592) target = $region80
    $region79: #{pointnet_feat.3} parent=5 // pred_region
      %s1595 = ssub.s32 %s19, 2
      // Predicated region
      $region81: #{pointnet_feat.3} parent=79 // pred_check
        %p1596 = pneg %p347
      $region82: #{pointnet_feat.3} parent=79 // pred_check_branch
        %1598 = sbr.rel (%p1596) target = $region84
      $region83: #{pointnet_feat.3} parent=79 // pred_region
        %s1599 = smul.u32 2, %s31
        %p1600 = scmp.lt.s32.totalorder %s30, 1
        %s1601 = scalar_select %p1600, %s30, 1
        %p1602 = scmp.lt.s32.totalorder %s1599, 7
        %s1603 = scalar_select %p1602, %s1599, 7
        %s1604 = smul.addr %s1603, 8
        %s1605 = smul.addr %s1601, 64
        %s1606 = sadd.s32 %s1604, %s1605
        %s1607 = smul.addr %s1606, 8
        %s1608 = scalar_lea.vmem %s13, %s1607
      $region84: #{pointnet_feat.3} parent=79 // pred_fallthru
        _
    $region80: #{pointnet_feat.3} parent=5 // pred_fallthru
      _
  $region6: #{pointnet_feat.3} parent=0 // loop_footer
    %s23 = sadd.s32 1, %s19
  $region7: #{pointnet_feat.3} parent=0 // loop_footer_branch
    %18 = sbr.rel target = $region3
  $region8: #{pointnet_feat.3} parent=0 // loop_exit
    _

</llo_original>
